<compile_context>
chip_gen: v7x
topology: tpu7x:2x2x1
jax: 0.10.0
libtpu: 0.0.40
codegen_flags: <defaults>
</compile_context>

<pallas_src>
import functools

import jax
import jax.numpy as jnp
from jax.experimental import pallas as pl
from jax.experimental.pallas import tpu as pltpu


def _compiler_params():
    cls = getattr(pltpu, "CompilerParams", None) or getattr(
        pltpu, "TPUCompilerParams", None)
    if cls is None:
        return None
    return cls(dimension_semantics=("parallel",))


# ------------------------------ fused kernel --------------------------------
def _dqn_kernel(x_ref, w1_ref, b1_ref, w2_ref, b2_ref, w3_ref, b3_ref,
                wf1_ref, bf1_ref, wf2_ref, bf2_ref, o_ref,
                act1_ref, act2_ref, act3_ref, *, dims):
    # nh1/nw1: conv1 output grid; nh2/nw2: stride-1 conv2 grid;
    # nh3/nw3: dilation-2 conv3 grid; oh3/ow3: true conv3 output (valid) grid.
    nh1, nw1, nh2, nw2, nh3, nw3, oh3, ow3 = dims

    # ---- conv1: 8x8 stride-4 == 2x2 stride-1 on the space-to-depth(4) input.
    def conv1_row(h, carry):
        acc = None
        for k, (ii, jj) in enumerate(((0, 0), (0, 1), (1, 0), (1, 1))):
            patch = x_ref[h + ii, jj:jj + nw1, :]                # (nw1, 16*Cin)
            term = jnp.dot(patch, w1_ref[k],
                           preferred_element_type=jnp.float32)
            acc = term if acc is None else acc + term
        act1_ref[h] = jnp.maximum(acc + b1_ref[...], 0.0)        # (nw1, 32)
        return carry
    jax.lax.fori_loop(0, nh1, conv1_row, 0)

    # ---- conv2: 4x4 stride-2, evaluated on the full stride-1 grid
    #      (true outputs live at even coordinates of act2).
    def conv2_row(a, carry):
        acc = None
        for i in range(4):
            for j in range(4):
                patch = act1_ref[a + i, j:j + nw2, :]            # (nw2, 32)
                term = jnp.dot(patch, w2_ref[i * 4 + j],
                               preferred_element_type=jnp.float32)
                acc = term if acc is None else acc + term
        act2_ref[a] = jnp.maximum(acc + b2_ref[...], 0.0)        # (nw2, 64)
        return carry
    jax.lax.fori_loop(0, nh2, conv2_row, 0)

    # ---- conv3: 3x3 stride-1 on the true conv2 output == dilation-2 3x3 here.
    def conv3_row(a, carry):
        acc = None
        for i in range(3):
            for j in range(3):
                patch = act2_ref[a + 2 * i, 2 * j:2 * j + nw3, :]  # (nw3, 64)
                term = jnp.dot(patch, w3_ref[i * 3 + j],
                               preferred_element_type=jnp.float32)
                acc = term if acc is None else acc + term
        act3_ref[a] = jnp.maximum(acc + b3_ref[...], 0.0)        # (nw3, 64)
        return carry
    jax.lax.fori_loop(0, nh3, conv3_row, 0)

    # ---- fc1: contract over the oh3*ow3 valid positions (even coordinates).
    hidden = wf1_ref.shape[2]

    def fc1_row(h, acc):
        row = act3_ref[2 * h]                                    # (nw3, 64)
        for w in range(ow3):
            vec = row[2 * w:2 * w + 1, :]                        # (1, 64)
            wblk = wf1_ref[h * ow3 + w].astype(jnp.float32)      # (64, hidden)
            acc = acc + jnp.dot(vec, wblk,
                                preferred_element_type=jnp.float32)
        return acc

    fc1 = jax.lax.fori_loop(0, oh3, fc1_row,
                            jnp.zeros((1, hidden), jnp.float32))
    fc1 = jnp.maximum(fc1 + bf1_ref[...], 0.0)

    # ---- fc2 (Q values).
    o_ref[...] = (jnp.dot(fc1, wf2_ref[...],
                          preferred_element_type=jnp.float32) + bf2_ref[...])


# ------------------------------- DQN model ----------------------------------
def _conv_out(n, k, s):
    return (n - k) // s + 1


def feature_size(input_shape):
    c, h, w = input_shape
    h1, w1 = _conv_out(h, 8, 4), _conv_out(w, 8, 4)
    h2, w2 = _conv_out(h1, 4, 2), _conv_out(w1, 4, 2)
    h3, w3 = _conv_out(h2, 3, 1), _conv_out(w2, 3, 1)
    return 64 * h3 * w3


def init_dqn_params(key, input_shape, num_actions):
    """Deterministic PyTorch-style uniform(-1/sqrt(fan_in), 1/sqrt(fan_in)) init."""
    c_in = input_shape[0]
    feat = feature_size(input_shape)
    keys = jax.random.split(key, 10)

    def u(k, shape, fan_in):
        bound = 1.0 / (fan_in ** 0.5)
        return jax.random.uniform(k, shape, jnp.float32, -bound, bound)

    return {
        # conv weights: (Cout, Cin, kh, kw) as in PyTorch
        "w1": u(keys[0], (32, c_in, 8, 8), c_in * 8 * 8),
        "b1": u(keys[1], (32,), c_in * 8 * 8),
        "w2": u(keys[2], (64, 32, 4, 4), 32 * 4 * 4),
        "b2": u(keys[3], (64,), 32 * 4 * 4),
        "w3": u(keys[4], (64, 64, 3, 3), 64 * 3 * 3),
        "b3": u(keys[5], (64,), 64 * 3 * 3),
        # fc weights stored (in, out) = transposed torch Linear layout
        "w_fc1": u(keys[6], (feat, 512), feat),
        "b_fc1": u(keys[7], (512,), feat),
        "w_fc2": u(keys[8], (512, num_actions), 512),
        "b_fc2": u(keys[9], (512,), 512)[:num_actions] * 0 + u(keys[9], (num_actions,), 512),
    }


def prepare_params(params, input_shape):
    """One-time re-layout of the PyTorch-style parameters for the fused kernel."""
    c_in, h, w = input_shape
    c1 = params["w1"].shape[0]            # 32
    c2 = params["w2"].shape[0]            # 64
    c3 = params["w3"].shape[0]            # 64
    hidden = params["w_fc1"].shape[1]     # 512
    h3 = _conv_out(_conv_out(_conv_out(h, 8, 4), 4, 2), 3, 1)
    w3 = _conv_out(_conv_out(_conv_out(w, 8, 4), 4, 2), 3, 1)

    # conv1 (Cout, Cin, 8, 8) -> 2x2 blocks (4, 16*Cin, Cout); block = ii*2+jj,
    # inner K order = (di, dj, cin) to match the space-to-depth input layout.
    w1 = params["w1"].reshape(c1, c_in, 2, 4, 2, 4)       # (cout,cin,ii,di,jj,dj)
    w1 = w1.transpose(2, 4, 3, 5, 1, 0).reshape(4, 16 * c_in, c1)
    # conv2/conv3 (Cout, Cin, kh, kw) -> (kh*kw, Cin, Cout)
    w2 = params["w2"].transpose(2, 3, 1, 0).reshape(16, c1, c2)
    w3w = params["w3"].transpose(2, 3, 1, 0).reshape(9, c2, c3)
    # fc1 (feat, hidden); feat flattened in torch NCHW order (c, h, w) ->
    # per-spatial-position blocks (h*w, c, hidden). Biggest weight: store bf16.
    wf1 = (params["w_fc1"].reshape(c3, h3, w3, hidden)
           .transpose(1, 2, 0, 3).reshape(h3 * w3, c3, hidden)
           .astype(jnp.bfloat16))
    return {
        "w1": w1.astype(jnp.float32), "b1": params["b1"].reshape(1, c1),
        "w2": w2.astype(jnp.float32), "b2": params["b2"].reshape(1, c2),
        "w3": w3w.astype(jnp.float32), "b3": params["b3"].reshape(1, c3),
        "w_fc1": wf1, "b_fc1": params["b_fc1"].reshape(1, hidden),
        "w_fc2": params["w_fc2"].astype(jnp.float32),
        "b_fc2": params["b_fc2"].reshape(1, -1),
    }


@jax.jit
def dqn_forward(prep, x):
    """x: (B, C, H, W) f32 -> (B, num_actions) f32 via one fused Pallas kernel."""
    B, C, H, W = x.shape
    assert H % 4 == 0 and W % 4 == 0 and (H // 4) % 2 == 1 and (W // 4) % 2 == 1, (
        "spatial dims must give an odd space-to-depth grid (e.g. 84x84)")
    hs, ws = H // 4, W // 4
    nh1, nw1 = hs - 1, ws - 1                              # conv1 grid   (20, 20)
    nh2, nw2 = nh1 - 3, nw1 - 3                            # s1 conv2 grid (17, 17)
    nh3, nw3 = nh2 - 4, nw2 - 4                            # dil. conv3    (13, 13)
    oh3, ow3 = (nh1 - 4) // 2 - 1, (nw1 - 4) // 2 - 1      # true conv3 out (7, 7)

    c1 = prep["w1"].shape[2]
    c2 = prep["w2"].shape[2]
    c3 = prep["w3"].shape[2]
    acts = prep["w_fc2"].shape[1]

    # space-to-depth(4): (B,C,H,W) -> (B, H/4, W/4, 16*C); channel = (di*4+dj)*C+c.
    xs = x.transpose(0, 2, 3, 1).reshape(B, hs, 4, ws, 4, C)
    xs = xs.transpose(0, 1, 3, 2, 4, 5).reshape(B, hs, ws, 16 * C)

    kernel = functools.partial(
        _dqn_kernel, dims=(nh1, nw1, nh2, nw2, nh3, nw3, oh3, ow3))

    def full(shape):
        return pl.BlockSpec(shape, lambda b: (0,) * len(shape))

    out = pl.pallas_call(
        kernel,
        grid=(B,),
        in_specs=[
            pl.BlockSpec((None, hs, ws, 16 * C), lambda b: (b, 0, 0, 0)),
            full(prep["w1"].shape), full(prep["b1"].shape),
            full(prep["w2"].shape), full(prep["b2"].shape),
            full(prep["w3"].shape), full(prep["b3"].shape),
            full(prep["w_fc1"].shape), full(prep["b_fc1"].shape),
            full(prep["w_fc2"].shape), full(prep["b_fc2"].shape),
        ],
        out_specs=pl.BlockSpec((None, 1, acts), lambda b: (b, 0, 0)),
        out_shape=jax.ShapeDtypeStruct((B, 1, acts), jnp.float32),
        scratch_shapes=[
            pltpu.VMEM((nh1, nw1, c1), jnp.float32),   # conv1 output
            pltpu.VMEM((nh2, nw2, c2), jnp.float32),   # stride-1 conv2 output
            pltpu.VMEM((nh3, nw3, c3), jnp.float32),   # dilated conv3 output
        ],
        compiler_params=_compiler_params(),
    )(xs, prep["w1"], prep["b1"], prep["w2"], prep["b2"],
      prep["w3"], prep["b3"], prep["w_fc1"], prep["b_fc1"],
      prep["w_fc2"], prep["b_fc2"])
    return out[:, 0, :]


# --------------------------- pure-JAX reference -----------------------------
def dqn_forward_ref(params, x):
    dn = ("NCHW", "OIHW", "NCHW")

    def conv(x, w, b, s):
        y = jax.lax.conv_general_dilated(x, w, (s, s), "VALID",
                                         dimension_numbers=dn)
        return jax.nn.relu(y + b[None, :, None, None])

    x = conv(x, params["w1"], params["b1"], 4)
    x = conv(x, params["w2"], params["b2"], 2)
    x = conv(x, params["w3"], params["b3"], 1)
    x = x.reshape(x.shape[0], -1)
    x = jax.nn.relu(x @ params["w_fc1"] + params["b_fc1"])
    return x @ params["w_fc2"] + params["b_fc2"]


# ---------------------------------- main -------------------------------------
if __name__ == "__main__":
    input_shape = (1, 84, 84)   # WarpFrame output: (C=1, H=84, W=84)
    num_actions = 7
    batch = 2

    key = jax.random.PRNGKey(0)
    pkey, xkey = jax.random.split(key)
    params = init_dqn_params(pkey, input_shape, num_actions)
    # The fused kernel stores the (large) fc1 weight in bf16. Quantize it once
    # here so the Pallas path and the f32 reference use identical weights.
    params["w_fc1"] = params["w_fc1"].astype(jnp.bfloat16).astype(jnp.float32)

    x = jax.random.uniform(xkey, (batch,) + input_shape, jnp.float32)

    prep = prepare_params(params, input_shape)   # one-time weight re-layout
    q = jax.block_until_ready(dqn_forward(prep, x))
    assert q.shape == (batch, num_actions), q.shape

    q_ref = jax.block_until_ready(dqn_forward_ref(params, x))
    assert jnp.allclose(q, q_ref, rtol=1e-3, atol=1e-3), (
        float(jnp.max(jnp.abs(q - q_ref))))

    print("KERNEL_OK")
</pallas_src>

<mosaic_0001>
module attributes {stable_mosaic.version = 11 : i64} {
  func.func @_dqn_kernel(%arg0: i32, %arg1: memref<1x21x21x16xf32, #tpu.memory_space<vmem>>, %arg2: memref<4x16x32xf32, #tpu.memory_space<vmem>>, %arg3: memref<1x32xf32, #tpu.memory_space<vmem>>, %arg4: memref<16x32x64xf32, #tpu.memory_space<vmem>>, %arg5: memref<1x64xf32, #tpu.memory_space<vmem>>, %arg6: memref<9x64x64xf32, #tpu.memory_space<vmem>>, %arg7: memref<1x64xf32, #tpu.memory_space<vmem>>, %arg8: memref<49x64x512xbf16, #tpu.memory_space<vmem>>, %arg9: memref<1x512xf32, #tpu.memory_space<vmem>>, %arg10: memref<512x7xf32, #tpu.memory_space<vmem>>, %arg11: memref<1x7xf32, #tpu.memory_space<vmem>>, %arg12: memref<1x1x7xf32, #tpu.memory_space<vmem>>, %arg13: memref<20x20x32xf32, #tpu.memory_space<vmem>>, %arg14: memref<17x17x64xf32, #tpu.memory_space<vmem>>, %arg15: memref<13x13x64xf32, #tpu.memory_space<vmem>>) attributes {dimension_semantics = [#tpu.dimension_semantics<parallel>], iteration_bounds = array<i64: 2>, scalar_prefetch = 0 : i64, scratch_operands = 3 : i64, tpu.core_type = #tpu.core_type<tc>, window_params = [{transform_indices = @transform_0, window_bounds = array<i64: 1, 21, 21, 16>}, {pipeline_mode = #tpu.pipeline_mode<synchronous>, transform_indices = @transform_1, window_bounds = array<i64: 4, 16, 32>}, {pipeline_mode = #tpu.pipeline_mode<synchronous>, transform_indices = @transform_2, window_bounds = array<i64: 1, 32>}, {pipeline_mode = #tpu.pipeline_mode<synchronous>, transform_indices = @transform_3, window_bounds = array<i64: 16, 32, 64>}, {pipeline_mode = #tpu.pipeline_mode<synchronous>, transform_indices = @transform_4, window_bounds = array<i64: 1, 64>}, {pipeline_mode = #tpu.pipeline_mode<synchronous>, transform_indices = @transform_5, window_bounds = array<i64: 9, 64, 64>}, {pipeline_mode = #tpu.pipeline_mode<synchronous>, transform_indices = @transform_6, window_bounds = array<i64: 1, 64>}, {pipeline_mode = #tpu.pipeline_mode<synchronous>, transform_indices = @transform_7, window_bounds = array<i64: 49, 64, 512>}, {pipeline_mode = #tpu.pipeline_mode<synchronous>, transform_indices = @transform_8, window_bounds = array<i64: 1, 512>}, {pipeline_mode = #tpu.pipeline_mode<synchronous>, transform_indices = @transform_9, window_bounds = array<i64: 512, 7>}, {pipeline_mode = #tpu.pipeline_mode<synchronous>, transform_indices = @transform_10, window_bounds = array<i64: 1, 7>}, {transform_indices = @transform_11, window_bounds = array<i64: 1, 1, 7>}]} {
    %c0_i32 = arith.constant 0 : i32
    %c20_i32 = arith.constant 20 : i32
    %0 = arith.addi %c0_i32, %c20_i32 : i32
    %c1_i32 = arith.constant 1 : i32
    scf.for %arg16 = %c0_i32 to %0 step %c1_i32  : i32 {
      %c0_i32_20 = arith.constant 0 : i32
      %17 = arith.addi %arg16, %c0_i32_20 : i32
      %c0_21 = arith.constant 0 : index
      %18 = arith.index_cast %17 : i32 to index
      %c0_22 = arith.constant 0 : index
      %c0_23 = arith.constant 0 : index
      %19 = vector.load %arg1[%c0_21, %18, %c0_22, %c0_23] : memref<1x21x21x16xf32, #tpu.memory_space<vmem>>, vector<1x1x20x16xf32>
      %20 = vector.shape_cast %19 : vector<1x1x20x16xf32> to vector<20x16xf32>
      %c0_24 = arith.constant 0 : index
      %c0_25 = arith.constant 0 : index
      %c0_26 = arith.constant 0 : index
      %21 = vector.load %arg2[%c0_24, %c0_25, %c0_26] : memref<4x16x32xf32, #tpu.memory_space<vmem>>, vector<1x16x32xf32>
      %22 = vector.shape_cast %21 : vector<1x16x32xf32> to vector<16x32xf32>
      %cst_27 = arith.constant dense<0.000000e+00> : vector<20x32xf32>
      %23 = tpu.matmul %20, %22, %cst_27 {dimension_numbers = #tpu.dot_dimension_numbers<[1], [0], [0], [1], [0, 0, 1, 1], [], []>} : vector<20x16xf32>, vector<16x32xf32>, vector<20x32xf32> -> vector<20x32xf32>
      %c0_i32_28 = arith.constant 0 : i32
      %24 = arith.addi %arg16, %c0_i32_28 : i32
      %c0_29 = arith.constant 0 : index
      %25 = arith.index_cast %24 : i32 to index
      %c1 = arith.constant 1 : index
      %c0_30 = arith.constant 0 : index
      %26 = vector.load %arg1[%c0_29, %25, %c1, %c0_30] : memref<1x21x21x16xf32, #tpu.memory_space<vmem>>, vector<1x1x20x16xf32>
      %27 = vector.shape_cast %26 : vector<1x1x20x16xf32> to vector<20x16xf32>
      %c1_31 = arith.constant 1 : index
      %c0_32 = arith.constant 0 : index
      %c0_33 = arith.constant 0 : index
      %28 = vector.load %arg2[%c1_31, %c0_32, %c0_33] : memref<4x16x32xf32, #tpu.memory_space<vmem>>, vector<1x16x32xf32>
      %29 = vector.shape_cast %28 : vector<1x16x32xf32> to vector<16x32xf32>
      %cst_34 = arith.constant dense<0.000000e+00> : vector<20x32xf32>
      %30 = tpu.matmul %27, %29, %cst_34 {dimension_numbers = #tpu.dot_dimension_numbers<[1], [0], [0], [1], [0, 0, 1, 1], [], []>} : vector<20x16xf32>, vector<16x32xf32>, vector<20x32xf32> -> vector<20x32xf32>
      %31 = arith.addf %23, %30 : vector<20x32xf32>
      %c1_i32_35 = arith.constant 1 : i32
      %32 = arith.addi %arg16, %c1_i32_35 : i32
      %c0_36 = arith.constant 0 : index
      %33 = arith.index_cast %32 : i32 to index
      %c0_37 = arith.constant 0 : index
      %c0_38 = arith.constant 0 : index
      %34 = vector.load %arg1[%c0_36, %33, %c0_37, %c0_38] : memref<1x21x21x16xf32, #tpu.memory_space<vmem>>, vector<1x1x20x16xf32>
      %35 = vector.shape_cast %34 : vector<1x1x20x16xf32> to vector<20x16xf32>
      %c2 = arith.constant 2 : index
      %c0_39 = arith.constant 0 : index
      %c0_40 = arith.constant 0 : index
      %36 = vector.load %arg2[%c2, %c0_39, %c0_40] : memref<4x16x32xf32, #tpu.memory_space<vmem>>, vector<1x16x32xf32>
      %37 = vector.shape_cast %36 : vector<1x16x32xf32> to vector<16x32xf32>
      %cst_41 = arith.constant dense<0.000000e+00> : vector<20x32xf32>
      %38 = tpu.matmul %35, %37, %cst_41 {dimension_numbers = #tpu.dot_dimension_numbers<[1], [0], [0], [1], [0, 0, 1, 1], [], []>} : vector<20x16xf32>, vector<16x32xf32>, vector<20x32xf32> -> vector<20x32xf32>
      %39 = arith.addf %31, %38 : vector<20x32xf32>
      %c1_i32_42 = arith.constant 1 : i32
      %40 = arith.addi %arg16, %c1_i32_42 : i32
      %c0_43 = arith.constant 0 : index
      %41 = arith.index_cast %40 : i32 to index
      %c1_44 = arith.constant 1 : index
      %c0_45 = arith.constant 0 : index
      %42 = vector.load %arg1[%c0_43, %41, %c1_44, %c0_45] : memref<1x21x21x16xf32, #tpu.memory_space<vmem>>, vector<1x1x20x16xf32>
      %43 = vector.shape_cast %42 : vector<1x1x20x16xf32> to vector<20x16xf32>
      %c3 = arith.constant 3 : index
      %c0_46 = arith.constant 0 : index
      %c0_47 = arith.constant 0 : index
      %44 = vector.load %arg2[%c3, %c0_46, %c0_47] : memref<4x16x32xf32, #tpu.memory_space<vmem>>, vector<1x16x32xf32>
      %45 = vector.shape_cast %44 : vector<1x16x32xf32> to vector<16x32xf32>
      %cst_48 = arith.constant dense<0.000000e+00> : vector<20x32xf32>
      %46 = tpu.matmul %43, %45, %cst_48 {dimension_numbers = #tpu.dot_dimension_numbers<[1], [0], [0], [1], [0, 0, 1, 1], [], []>} : vector<20x16xf32>, vector<16x32xf32>, vector<20x32xf32> -> vector<20x32xf32>
      %47 = arith.addf %39, %46 : vector<20x32xf32>
      %c0_49 = arith.constant 0 : index
      %c0_50 = arith.constant 0 : index
      %48 = vector.load %arg3[%c0_49, %c0_50] : memref<1x32xf32, #tpu.memory_space<vmem>>, vector<1x32xf32>
      %49 = vector.broadcast %48 : vector<1x32xf32> to vector<20x32xf32>
      %50 = arith.addf %47, %49 : vector<20x32xf32>
      %cst_51 = arith.constant 0.000000e+00 : f32
      %51 = vector.broadcast %cst_51 : f32 to vector<20x32xf32>
      %52 = arith.maximumf %50, %51 : vector<20x32xf32>
      %53 = arith.index_cast %arg16 : i32 to index
      %c0_52 = arith.constant 0 : index
      %c0_53 = arith.constant 0 : index
      %54 = vector.load %arg13[%53, %c0_52, %c0_53] : memref<20x20x32xf32, #tpu.memory_space<vmem>>, vector<1x20x32xf32>
      %55 = vector.shape_cast %54 : vector<1x20x32xf32> to vector<20x32xf32>
      %56 = vector.shape_cast %52 : vector<20x32xf32> to vector<1x20x32xf32>
      tpu.vector_store %arg13[%53, %c0_52, %c0_53], %56 {strides = array<i32>} : memref<20x20x32xf32, #tpu.memory_space<vmem>>, vector<1x20x32xf32>,
    }
    %c20_i32_0 = arith.constant 20 : i32
    %c0_i32_1 = arith.constant 0 : i32
    %c17_i32 = arith.constant 17 : i32
    %1 = arith.addi %c0_i32_1, %c17_i32 : i32
    %c1_i32_2 = arith.constant 1 : i32
    scf.for %arg16 = %c0_i32_1 to %1 step %c1_i32_2  : i32 {
      %c0_i32_20 = arith.constant 0 : i32
      %17 = arith.addi %arg16, %c0_i32_20 : i32
      %18 = arith.index_cast %17 : i32 to index
      %c0_21 = arith.constant 0 : index
      %c0_22 = arith.constant 0 : index
      %19 = vector.load %arg13[%18, %c0_21, %c0_22] : memref<20x20x32xf32, #tpu.memory_space<vmem>>, vector<1x17x32xf32>
      %20 = vector.shape_cast %19 : vector<1x17x32xf32> to vector<17x32xf32>
      %c0_23 = arith.constant 0 : index
      %c0_24 = arith.constant 0 : index
      %c0_25 = arith.constant 0 : index
      %21 = vector.load %arg4[%c0_23, %c0_24, %c0_25] : memref<16x32x64xf32, #tpu.memory_space<vmem>>, vector<1x32x64xf32>
      %22 = vector.shape_cast %21 : vector<1x32x64xf32> to vector<32x64xf32>
      %cst_26 = arith.constant dense<0.000000e+00> : vector<17x64xf32>
      %23 = tpu.matmul %20, %22, %cst_26 {dimension_numbers = #tpu.dot_dimension_numbers<[1], [0], [0], [1], [0, 0, 1, 1], [], []>} : vector<17x32xf32>, vector<32x64xf32>, vector<17x64xf32> -> vector<17x64xf32>
      %c0_i32_27 = arith.constant 0 : i32
      %24 = arith.addi %arg16, %c0_i32_27 : i32
      %25 = arith.index_cast %24 : i32 to index
      %c1 = arith.constant 1 : index
      %c0_28 = arith.constant 0 : index
      %26 = vector.load %arg13[%25, %c1, %c0_28] : memref<20x20x32xf32, #tpu.memory_space<vmem>>, vector<1x17x32xf32>
      %27 = vector.shape_cast %26 : vector<1x17x32xf32> to vector<17x32xf32>
      %c1_29 = arith.constant 1 : index
      %c0_30 = arith.constant 0 : index
      %c0_31 = arith.constant 0 : index
      %28 = vector.load %arg4[%c1_29, %c0_30, %c0_31] : memref<16x32x64xf32, #tpu.memory_space<vmem>>, vector<1x32x64xf32>
      %29 = vector.shape_cast %28 : vector<1x32x64xf32> to vector<32x64xf32>
      %cst_32 = arith.constant dense<0.000000e+00> : vector<17x64xf32>
      %30 = tpu.matmul %27, %29, %cst_32 {dimension_numbers = #tpu.dot_dimension_numbers<[1], [0], [0], [1], [0, 0, 1, 1], [], []>} : vector<17x32xf32>, vector<32x64xf32>, vector<17x64xf32> -> vector<17x64xf32>
      %31 = arith.addf %23, %30 : vector<17x64xf32>
      %c0_i32_33 = arith.constant 0 : i32
      %32 = arith.addi %arg16, %c0_i32_33 : i32
      %33 = arith.index_cast %32 : i32 to index
      %c2 = arith.constant 2 : index
      %c0_34 = arith.constant 0 : index
      %34 = vector.load %arg13[%33, %c2, %c0_34] : memref<20x20x32xf32, #tpu.memory_space<vmem>>, vector<1x17x32xf32>
      %35 = vector.shape_cast %34 : vector<1x17x32xf32> to vector<17x32xf32>
      %c2_35 = arith.constant 2 : index
      %c0_36 = arith.constant 0 : index
      %c0_37 = arith.constant 0 : index
      %36 = vector.load %arg4[%c2_35, %c0_36, %c0_37] : memref<16x32x64xf32, #tpu.memory_space<vmem>>, vector<1x32x64xf32>
      %37 = vector.shape_cast %36 : vector<1x32x64xf32> to vector<32x64xf32>
      %cst_38 = arith.constant dense<0.000000e+00> : vector<17x64xf32>
      %38 = tpu.matmul %35, %37, %cst_38 {dimension_numbers = #tpu.dot_dimension_numbers<[1], [0], [0], [1], [0, 0, 1, 1], [], []>} : vector<17x32xf32>, vector<32x64xf32>, vector<17x64xf32> -> vector<17x64xf32>
      %39 = arith.addf %31, %38 : vector<17x64xf32>
      %c0_i32_39 = arith.constant 0 : i32
      %40 = arith.addi %arg16, %c0_i32_39 : i32
      %41 = arith.index_cast %40 : i32 to index
      %c3 = arith.constant 3 : index
      %c0_40 = arith.constant 0 : index
      %42 = vector.load %arg13[%41, %c3, %c0_40] : memref<20x20x32xf32, #tpu.memory_space<vmem>>, vector<1x17x32xf32>
      %43 = vector.shape_cast %42 : vector<1x17x32xf32> to vector<17x32xf32>
      %c3_41 = arith.constant 3 : index
      %c0_42 = arith.constant 0 : index
      %c0_43 = arith.constant 0 : index
      %44 = vector.load %arg4[%c3_41, %c0_42, %c0_43] : memref<16x32x64xf32, #tpu.memory_space<vmem>>, vector<1x32x64xf32>
      %45 = vector.shape_cast %44 : vector<1x32x64xf32> to vector<32x64xf32>
      %cst_44 = arith.constant dense<0.000000e+00> : vector<17x64xf32>
      %46 = tpu.matmul %43, %45, %cst_44 {dimension_numbers = #tpu.dot_dimension_numbers<[1], [0], [0], [1], [0, 0, 1, 1], [], []>} : vector<17x32xf32>, vector<32x64xf32>, vector<17x64xf32> -> vector<17x64xf32>
      %47 = arith.addf %39, %46 : vector<17x64xf32>
      %c1_i32_45 = arith.constant 1 : i32
      %48 = arith.addi %arg16, %c1_i32_45 : i32
      %49 = arith.index_cast %48 : i32 to index
      %c0_46 = arith.constant 0 : index
      %c0_47 = arith.constant 0 : index
      %50 = vector.load %arg13[%49, %c0_46, %c0_47] : memref<20x20x32xf32, #tpu.memory_space<vmem>>, vector<1x17x32xf32>
      %51 = vector.shape_cast %50 : vector<1x17x32xf32> to vector<17x32xf32>
      %c4 = arith.constant 4 : index
      %c0_48 = arith.constant 0 : index
      %c0_49 = arith.constant 0 : index
      %52 = vector.load %arg4[%c4, %c0_48, %c0_49] : memref<16x32x64xf32, #tpu.memory_space<vmem>>, vector<1x32x64xf32>
      %53 = vector.shape_cast %52 : vector<1x32x64xf32> to vector<32x64xf32>
      %cst_50 = arith.constant dense<0.000000e+00> : vector<17x64xf32>
      %54 = tpu.matmul %51, %53, %cst_50 {dimension_numbers = #tpu.dot_dimension_numbers<[1], [0], [0], [1], [0, 0, 1, 1], [], []>} : vector<17x32xf32>, vector<32x64xf32>, vector<17x64xf32> -> vector<17x64xf32>
      %55 = arith.addf %47, %54 : vector<17x64xf32>
      %c1_i32_51 = arith.constant 1 : i32
      %56 = arith.addi %arg16, %c1_i32_51 : i32
      %57 = arith.index_cast %56 : i32 to index
      %c1_52 = arith.constant 1 : index
      %c0_53 = arith.constant 0 : index
      %58 = vector.load %arg13[%57, %c1_52, %c0_53] : memref<20x20x32xf32, #tpu.memory_space<vmem>>, vector<1x17x32xf32>
      %59 = vector.shape_cast %58 : vector<1x17x32xf32> to vector<17x32xf32>
      %c5 = arith.constant 5 : index
      %c0_54 = arith.constant 0 : index
      %c0_55 = arith.constant 0 : index
      %60 = vector.load %arg4[%c5, %c0_54, %c0_55] : memref<16x32x64xf32, #tpu.memory_space<vmem>>, vector<1x32x64xf32>
      %61 = vector.shape_cast %60 : vector<1x32x64xf32> to vector<32x64xf32>
      %cst_56 = arith.constant dense<0.000000e+00> : vector<17x64xf32>
      %62 = tpu.matmul %59, %61, %cst_56 {dimension_numbers = #tpu.dot_dimension_numbers<[1], [0], [0], [1], [0, 0, 1, 1], [], []>} : vector<17x32xf32>, vector<32x64xf32>, vector<17x64xf32> -> vector<17x64xf32>
      %63 = arith.addf %55, %62 : vector<17x64xf32>
      %c1_i32_57 = arith.constant 1 : i32
      %64 = arith.addi %arg16, %c1_i32_57 : i32
      %65 = arith.index_cast %64 : i32 to index
      %c2_58 = arith.constant 2 : index
      %c0_59 = arith.constant 0 : index
      %66 = vector.load %arg13[%65, %c2_58, %c0_59] : memref<20x20x32xf32, #tpu.memory_space<vmem>>, vector<1x17x32xf32>
      %67 = vector.shape_cast %66 : vector<1x17x32xf32> to vector<17x32xf32>
      %c6 = arith.constant 6 : index
      %c0_60 = arith.constant 0 : index
      %c0_61 = arith.constant 0 : index
      %68 = vector.load %arg4[%c6, %c0_60, %c0_61] : memref<16x32x64xf32, #tpu.memory_space<vmem>>, vector<1x32x64xf32>
      %69 = vector.shape_cast %68 : vector<1x32x64xf32> to vector<32x64xf32>
      %cst_62 = arith.constant dense<0.000000e+00> : vector<17x64xf32>
      %70 = tpu.matmul %67, %69, %cst_62 {dimension_numbers = #tpu.dot_dimension_numbers<[1], [0], [0], [1], [0, 0, 1, 1], [], []>} : vector<17x32xf32>, vector<32x64xf32>, vector<17x64xf32> -> vector<17x64xf32>
      %71 = arith.addf %63, %70 : vector<17x64xf32>
      %c1_i32_63 = arith.constant 1 : i32
      %72 = arith.addi %arg16, %c1_i32_63 : i32
      %73 = arith.index_cast %72 : i32 to index
      %c3_64 = arith.constant 3 : index
      %c0_65 = arith.constant 0 : index
      %74 = vector.load %arg13[%73, %c3_64, %c0_65] : memref<20x20x32xf32, #tpu.memory_space<vmem>>, vector<1x17x32xf32>
      %75 = vector.shape_cast %74 : vector<1x17x32xf32> to vector<17x32xf32>
      %c7 = arith.constant 7 : index
      %c0_66 = arith.constant 0 : index
      %c0_67 = arith.constant 0 : index
      %76 = vector.load %arg4[%c7, %c0_66, %c0_67] : memref<16x32x64xf32, #tpu.memory_space<vmem>>, vector<1x32x64xf32>
      %77 = vector.shape_cast %76 : vector<1x32x64xf32> to vector<32x64xf32>
      %cst_68 = arith.constant dense<0.000000e+00> : vector<17x64xf32>
      %78 = tpu.matmul %75, %77, %cst_68 {dimension_numbers = #tpu.dot_dimension_numbers<[1], [0], [0], [1], [0, 0, 1, 1], [], []>} : vector<17x32xf32>, vector<32x64xf32>, vector<17x64xf32> -> vector<17x64xf32>
      %79 = arith.addf %71, %78 : vector<17x64xf32>
      %c2_i32 = arith.constant 2 : i32
      %80 = arith.addi %arg16, %c2_i32 : i32
      %81 = arith.index_cast %80 : i32 to index
      %c0_69 = arith.constant 0 : index
      %c0_70 = arith.constant 0 : index
      %82 = vector.load %arg13[%81, %c0_69, %c0_70] : memref<20x20x32xf32, #tpu.memory_space<vmem>>, vector<1x17x32xf32>
      %83 = vector.shape_cast %82 : vector<1x17x32xf32> to vector<17x32xf32>
      %c8 = arith.constant 8 : index
      %c0_71 = arith.constant 0 : index
      %c0_72 = arith.constant 0 : index
      %84 = vector.load %arg4[%c8, %c0_71, %c0_72] : memref<16x32x64xf32, #tpu.memory_space<vmem>>, vector<1x32x64xf32>
      %85 = vector.shape_cast %84 : vector<1x32x64xf32> to vector<32x64xf32>
      %cst_73 = arith.constant dense<0.000000e+00> : vector<17x64xf32>
      %86 = tpu.matmul %83, %85, %cst_73 {dimension_numbers = #tpu.dot_dimension_numbers<[1], [0], [0], [1], [0, 0, 1, 1], [], []>} : vector<17x32xf32>, vector<32x64xf32>, vector<17x64xf32> -> vector<17x64xf32>
      %87 = arith.addf %79, %86 : vector<17x64xf32>
      %c2_i32_74 = arith.constant 2 : i32
      %88 = arith.addi %arg16, %c2_i32_74 : i32
      %89 = arith.index_cast %88 : i32 to index
      %c1_75 = arith.constant 1 : index
      %c0_76 = arith.constant 0 : index
      %90 = vector.load %arg13[%89, %c1_75, %c0_76] : memref<20x20x32xf32, #tpu.memory_space<vmem>>, vector<1x17x32xf32>
      %91 = vector.shape_cast %90 : vector<1x17x32xf32> to vector<17x32xf32>
      %c9 = arith.constant 9 : index
      %c0_77 = arith.constant 0 : index
      %c0_78 = arith.constant 0 : index
      %92 = vector.load %arg4[%c9, %c0_77, %c0_78] : memref<16x32x64xf32, #tpu.memory_space<vmem>>, vector<1x32x64xf32>
      %93 = vector.shape_cast %92 : vector<1x32x64xf32> to vector<32x64xf32>
      %cst_79 = arith.constant dense<0.000000e+00> : vector<17x64xf32>
      %94 = tpu.matmul %91, %93, %cst_79 {dimension_numbers = #tpu.dot_dimension_numbers<[1], [0], [0], [1], [0, 0, 1, 1], [], []>} : vector<17x32xf32>, vector<32x64xf32>, vector<17x64xf32> -> vector<17x64xf32>
      %95 = arith.addf %87, %94 : vector<17x64xf32>
      %c2_i32_80 = arith.constant 2 : i32
      %96 = arith.addi %arg16, %c2_i32_80 : i32
      %97 = arith.index_cast %96 : i32 to index
      %c2_81 = arith.constant 2 : index
      %c0_82 = arith.constant 0 : index
      %98 = vector.load %arg13[%97, %c2_81, %c0_82] : memref<20x20x32xf32, #tpu.memory_space<vmem>>, vector<1x17x32xf32>
      %99 = vector.shape_cast %98 : vector<1x17x32xf32> to vector<17x32xf32>
      %c10 = arith.constant 10 : index
      %c0_83 = arith.constant 0 : index
      %c0_84 = arith.constant 0 : index
      %100 = vector.load %arg4[%c10, %c0_83, %c0_84] : memref<16x32x64xf32, #tpu.memory_space<vmem>>, vector<1x32x64xf32>
      %101 = vector.shape_cast %100 : vector<1x32x64xf32> to vector<32x64xf32>
      %cst_85 = arith.constant dense<0.000000e+00> : vector<17x64xf32>
      %102 = tpu.matmul %99, %101, %cst_85 {dimension_numbers = #tpu.dot_dimension_numbers<[1], [0], [0], [1], [0, 0, 1, 1], [], []>} : vector<17x32xf32>, vector<32x64xf32>, vector<17x64xf32> -> vector<17x64xf32>
      %103 = arith.addf %95, %102 : vector<17x64xf32>
      %c2_i32_86 = arith.constant 2 : i32
      %104 = arith.addi %arg16, %c2_i32_86 : i32
      %105 = arith.index_cast %104 : i32 to index
      %c3_87 = arith.constant 3 : index
      %c0_88 = arith.constant 0 : index
      %106 = vector.load %arg13[%105, %c3_87, %c0_88] : memref<20x20x32xf32, #tpu.memory_space<vmem>>, vector<1x17x32xf32>
      %107 = vector.shape_cast %106 : vector<1x17x32xf32> to vector<17x32xf32>
      %c11 = arith.constant 11 : index
      %c0_89 = arith.constant 0 : index
      %c0_90 = arith.constant 0 : index
      %108 = vector.load %arg4[%c11, %c0_89, %c0_90] : memref<16x32x64xf32, #tpu.memory_space<vmem>>, vector<1x32x64xf32>
      %109 = vector.shape_cast %108 : vector<1x32x64xf32> to vector<32x64xf32>
      %cst_91 = arith.constant dense<0.000000e+00> : vector<17x64xf32>
      %110 = tpu.matmul %107, %109, %cst_91 {dimension_numbers = #tpu.dot_dimension_numbers<[1], [0], [0], [1], [0, 0, 1, 1], [], []>} : vector<17x32xf32>, vector<32x64xf32>, vector<17x64xf32> -> vector<17x64xf32>
      %111 = arith.addf %103, %110 : vector<17x64xf32>
      %c3_i32 = arith.constant 3 : i32
      %112 = arith.addi %arg16, %c3_i32 : i32
      %113 = arith.index_cast %112 : i32 to index
      %c0_92 = arith.constant 0 : index
      %c0_93 = arith.constant 0 : index
      %114 = vector.load %arg13[%113, %c0_92, %c0_93] : memref<20x20x32xf32, #tpu.memory_space<vmem>>, vector<1x17x32xf32>
      %115 = vector.shape_cast %114 : vector<1x17x32xf32> to vector<17x32xf32>
      %c12 = arith.constant 12 : index
      %c0_94 = arith.constant 0 : index
      %c0_95 = arith.constant 0 : index
      %116 = vector.load %arg4[%c12, %c0_94, %c0_95] : memref<16x32x64xf32, #tpu.memory_space<vmem>>, vector<1x32x64xf32>
      %117 = vector.shape_cast %116 : vector<1x32x64xf32> to vector<32x64xf32>
      %cst_96 = arith.constant dense<0.000000e+00> : vector<17x64xf32>
      %118 = tpu.matmul %115, %117, %cst_96 {dimension_numbers = #tpu.dot_dimension_numbers<[1], [0], [0], [1], [0, 0, 1, 1], [], []>} : vector<17x32xf32>, vector<32x64xf32>, vector<17x64xf32> -> vector<17x64xf32>
      %119 = arith.addf %111, %118 : vector<17x64xf32>
      %c3_i32_97 = arith.constant 3 : i32
      %120 = arith.addi %arg16, %c3_i32_97 : i32
      %121 = arith.index_cast %120 : i32 to index
      %c1_98 = arith.constant 1 : index
      %c0_99 = arith.constant 0 : index
      %122 = vector.load %arg13[%121, %c1_98, %c0_99] : memref<20x20x32xf32, #tpu.memory_space<vmem>>, vector<1x17x32xf32>
      %123 = vector.shape_cast %122 : vector<1x17x32xf32> to vector<17x32xf32>
      %c13 = arith.constant 13 : index
      %c0_100 = arith.constant 0 : index
      %c0_101 = arith.constant 0 : index
      %124 = vector.load %arg4[%c13, %c0_100, %c0_101] : memref<16x32x64xf32, #tpu.memory_space<vmem>>, vector<1x32x64xf32>
      %125 = vector.shape_cast %124 : vector<1x32x64xf32> to vector<32x64xf32>
      %cst_102 = arith.constant dense<0.000000e+00> : vector<17x64xf32>
      %126 = tpu.matmul %123, %125, %cst_102 {dimension_numbers = #tpu.dot_dimension_numbers<[1], [0], [0], [1], [0, 0, 1, 1], [], []>} : vector<17x32xf32>, vector<32x64xf32>, vector<17x64xf32> -> vector<17x64xf32>
      %127 = arith.addf %119, %126 : vector<17x64xf32>
      %c3_i32_103 = arith.constant 3 : i32
      %128 = arith.addi %arg16, %c3_i32_103 : i32
      %129 = arith.index_cast %128 : i32 to index
      %c2_104 = arith.constant 2 : index
      %c0_105 = arith.constant 0 : index
      %130 = vector.load %arg13[%129, %c2_104, %c0_105] : memref<20x20x32xf32, #tpu.memory_space<vmem>>, vector<1x17x32xf32>
      %131 = vector.shape_cast %130 : vector<1x17x32xf32> to vector<17x32xf32>
      %c14 = arith.constant 14 : index
      %c0_106 = arith.constant 0 : index
      %c0_107 = arith.constant 0 : index
      %132 = vector.load %arg4[%c14, %c0_106, %c0_107] : memref<16x32x64xf32, #tpu.memory_space<vmem>>, vector<1x32x64xf32>
      %133 = vector.shape_cast %132 : vector<1x32x64xf32> to vector<32x64xf32>
      %cst_108 = arith.constant dense<0.000000e+00> : vector<17x64xf32>
      %134 = tpu.matmul %131, %133, %cst_108 {dimension_numbers = #tpu.dot_dimension_numbers<[1], [0], [0], [1], [0, 0, 1, 1], [], []>} : vector<17x32xf32>, vector<32x64xf32>, vector<17x64xf32> -> vector<17x64xf32>
      %135 = arith.addf %127, %134 : vector<17x64xf32>
      %c3_i32_109 = arith.constant 3 : i32
      %136 = arith.addi %arg16, %c3_i32_109 : i32
      %137 = arith.index_cast %136 : i32 to index
      %c3_110 = arith.constant 3 : index
      %c0_111 = arith.constant 0 : index
      %138 = vector.load %arg13[%137, %c3_110, %c0_111] : memref<20x20x32xf32, #tpu.memory_space<vmem>>, vector<1x17x32xf32>
      %139 = vector.shape_cast %138 : vector<1x17x32xf32> to vector<17x32xf32>
      %c15 = arith.constant 15 : index
      %c0_112 = arith.constant 0 : index
      %c0_113 = arith.constant 0 : index
      %140 = vector.load %arg4[%c15, %c0_112, %c0_113] : memref<16x32x64xf32, #tpu.memory_space<vmem>>, vector<1x32x64xf32>
      %141 = vector.shape_cast %140 : vector<1x32x64xf32> to vector<32x64xf32>
      %cst_114 = arith.constant dense<0.000000e+00> : vector<17x64xf32>
      %142 = tpu.matmul %139, %141, %cst_114 {dimension_numbers = #tpu.dot_dimension_numbers<[1], [0], [0], [1], [0, 0, 1, 1], [], []>} : vector<17x32xf32>, vector<32x64xf32>, vector<17x64xf32> -> vector<17x64xf32>
      %143 = arith.addf %135, %142 : vector<17x64xf32>
      %c0_115 = arith.constant 0 : index
      %c0_116 = arith.constant 0 : index
      %144 = vector.load %arg5[%c0_115, %c0_116] : memref<1x64xf32, #tpu.memory_space<vmem>>, vector<1x64xf32>
      %145 = vector.broadcast %144 : vector<1x64xf32> to vector<17x64xf32>
      %146 = arith.addf %143, %145 : vector<17x64xf32>
      %cst_117 = arith.constant 0.000000e+00 : f32
      %147 = vector.broadcast %cst_117 : f32 to vector<17x64xf32>
      %148 = arith.maximumf %146, %147 : vector<17x64xf32>
      %149 = arith.index_cast %arg16 : i32 to index
      %c0_118 = arith.constant 0 : index
      %c0_119 = arith.constant 0 : index
      %150 = vector.load %arg14[%149, %c0_118, %c0_119] : memref<17x17x64xf32, #tpu.memory_space<vmem>>, vector<1x17x64xf32>
      %151 = vector.shape_cast %150 : vector<1x17x64xf32> to vector<17x64xf32>
      %152 = vector.shape_cast %148 : vector<17x64xf32> to vector<1x17x64xf32>
      tpu.vector_store %arg14[%149, %c0_118, %c0_119], %152 {strides = array<i32>} : memref<17x17x64xf32, #tpu.memory_space<vmem>>, vector<1x17x64xf32>,
    }
    %c17_i32_3 = arith.constant 17 : i32
    %c0_i32_4 = arith.constant 0 : i32
    %c13_i32 = arith.constant 13 : i32
    %2 = arith.addi %c0_i32_4, %c13_i32 : i32
    %c1_i32_5 = arith.constant 1 : i32
    scf.for %arg16 = %c0_i32_4 to %2 step %c1_i32_5  : i32 {
      %c0_i32_20 = arith.constant 0 : i32
      %17 = arith.addi %arg16, %c0_i32_20 : i32
      %18 = arith.index_cast %17 : i32 to index
      %c0_21 = arith.constant 0 : index
      %c0_22 = arith.constant 0 : index
      %19 = vector.load %arg14[%18, %c0_21, %c0_22] : memref<17x17x64xf32, #tpu.memory_space<vmem>>, vector<1x13x64xf32>
      %20 = vector.shape_cast %19 : vector<1x13x64xf32> to vector<13x64xf32>
      %c0_23 = arith.constant 0 : index
      %c0_24 = arith.constant 0 : index
      %c0_25 = arith.constant 0 : index
      %21 = vector.load %arg6[%c0_23, %c0_24, %c0_25] : memref<9x64x64xf32, #tpu.memory_space<vmem>>, vector<1x64x64xf32>
      %22 = vector.shape_cast %21 : vector<1x64x64xf32> to vector<64x64xf32>
      %cst_26 = arith.constant dense<0.000000e+00> : vector<13x64xf32>
      %23 = tpu.matmul %20, %22, %cst_26 {dimension_numbers = #tpu.dot_dimension_numbers<[1], [0], [0], [1], [0, 0, 1, 1], [], []>} : vector<13x64xf32>, vector<64x64xf32>, vector<13x64xf32> -> vector<13x64xf32>
      %c0_i32_27 = arith.constant 0 : i32
      %24 = arith.addi %arg16, %c0_i32_27 : i32
      %25 = arith.index_cast %24 : i32 to index
      %c2 = arith.constant 2 : index
      %c0_28 = arith.constant 0 : index
      %26 = vector.load %arg14[%25, %c2, %c0_28] : memref<17x17x64xf32, #tpu.memory_space<vmem>>, vector<1x13x64xf32>
      %27 = vector.shape_cast %26 : vector<1x13x64xf32> to vector<13x64xf32>
      %c1 = arith.constant 1 : index
      %c0_29 = arith.constant 0 : index
      %c0_30 = arith.constant 0 : index
      %28 = vector.load %arg6[%c1, %c0_29, %c0_30] : memref<9x64x64xf32, #tpu.memory_space<vmem>>, vector<1x64x64xf32>
      %29 = vector.shape_cast %28 : vector<1x64x64xf32> to vector<64x64xf32>
      %cst_31 = arith.constant dense<0.000000e+00> : vector<13x64xf32>
      %30 = tpu.matmul %27, %29, %cst_31 {dimension_numbers = #tpu.dot_dimension_numbers<[1], [0], [0], [1], [0, 0, 1, 1], [], []>} : vector<13x64xf32>, vector<64x64xf32>, vector<13x64xf32> -> vector<13x64xf32>
      %31 = arith.addf %23, %30 : vector<13x64xf32>
      %c0_i32_32 = arith.constant 0 : i32
      %32 = arith.addi %arg16, %c0_i32_32 : i32
      %33 = arith.index_cast %32 : i32 to index
      %c4 = arith.constant 4 : index
      %c0_33 = arith.constant 0 : index
      %34 = vector.load %arg14[%33, %c4, %c0_33] : memref<17x17x64xf32, #tpu.memory_space<vmem>>, vector<1x13x64xf32>
      %35 = vector.shape_cast %34 : vector<1x13x64xf32> to vector<13x64xf32>
      %c2_34 = arith.constant 2 : index
      %c0_35 = arith.constant 0 : index
      %c0_36 = arith.constant 0 : index
      %36 = vector.load %arg6[%c2_34, %c0_35, %c0_36] : memref<9x64x64xf32, #tpu.memory_space<vmem>>, vector<1x64x64xf32>
      %37 = vector.shape_cast %36 : vector<1x64x64xf32> to vector<64x64xf32>
      %cst_37 = arith.constant dense<0.000000e+00> : vector<13x64xf32>
      %38 = tpu.matmul %35, %37, %cst_37 {dimension_numbers = #tpu.dot_dimension_numbers<[1], [0], [0], [1], [0, 0, 1, 1], [], []>} : vector<13x64xf32>, vector<64x64xf32>, vector<13x64xf32> -> vector<13x64xf32>
      %39 = arith.addf %31, %38 : vector<13x64xf32>
      %c2_i32 = arith.constant 2 : i32
      %40 = arith.addi %arg16, %c2_i32 : i32
      %41 = arith.index_cast %40 : i32 to index
      %c0_38 = arith.constant 0 : index
      %c0_39 = arith.constant 0 : index
      %42 = vector.load %arg14[%41, %c0_38, %c0_39] : memref<17x17x64xf32, #tpu.memory_space<vmem>>, vector<1x13x64xf32>
      %43 = vector.shape_cast %42 : vector<1x13x64xf32> to vector<13x64xf32>
      %c3 = arith.constant 3 : index
      %c0_40 = arith.constant 0 : index
      %c0_41 = arith.constant 0 : index
      %44 = vector.load %arg6[%c3, %c0_40, %c0_41] : memref<9x64x64xf32, #tpu.memory_space<vmem>>, vector<1x64x64xf32>
      %45 = vector.shape_cast %44 : vector<1x64x64xf32> to vector<64x64xf32>
      %cst_42 = arith.constant dense<0.000000e+00> : vector<13x64xf32>
      %46 = tpu.matmul %43, %45, %cst_42 {dimension_numbers = #tpu.dot_dimension_numbers<[1], [0], [0], [1], [0, 0, 1, 1], [], []>} : vector<13x64xf32>, vector<64x64xf32>, vector<13x64xf32> -> vector<13x64xf32>
      %47 = arith.addf %39, %46 : vector<13x64xf32>
      %c2_i32_43 = arith.constant 2 : i32
      %48 = arith.addi %arg16, %c2_i32_43 : i32
      %49 = arith.index_cast %48 : i32 to index
      %c2_44 = arith.constant 2 : index
      %c0_45 = arith.constant 0 : index
      %50 = vector.load %arg14[%49, %c2_44, %c0_45] : memref<17x17x64xf32, #tpu.memory_space<vmem>>, vector<1x13x64xf32>
      %51 = vector.shape_cast %50 : vector<1x13x64xf32> to vector<13x64xf32>
      %c4_46 = arith.constant 4 : index
      %c0_47 = arith.constant 0 : index
      %c0_48 = arith.constant 0 : index
      %52 = vector.load %arg6[%c4_46, %c0_47, %c0_48] : memref<9x64x64xf32, #tpu.memory_space<vmem>>, vector<1x64x64xf32>
      %53 = vector.shape_cast %52 : vector<1x64x64xf32> to vector<64x64xf32>
      %cst_49 = arith.constant dense<0.000000e+00> : vector<13x64xf32>
      %54 = tpu.matmul %51, %53, %cst_49 {dimension_numbers = #tpu.dot_dimension_numbers<[1], [0], [0], [1], [0, 0, 1, 1], [], []>} : vector<13x64xf32>, vector<64x64xf32>, vector<13x64xf32> -> vector<13x64xf32>
      %55 = arith.addf %47, %54 : vector<13x64xf32>
      %c2_i32_50 = arith.constant 2 : i32
      %56 = arith.addi %arg16, %c2_i32_50 : i32
      %57 = arith.index_cast %56 : i32 to index
      %c4_51 = arith.constant 4 : index
      %c0_52 = arith.constant 0 : index
      %58 = vector.load %arg14[%57, %c4_51, %c0_52] : memref<17x17x64xf32, #tpu.memory_space<vmem>>, vector<1x13x64xf32>
      %59 = vector.shape_cast %58 : vector<1x13x64xf32> to vector<13x64xf32>
      %c5 = arith.constant 5 : index
      %c0_53 = arith.constant 0 : index
      %c0_54 = arith.constant 0 : index
      %60 = vector.load %arg6[%c5, %c0_53, %c0_54] : memref<9x64x64xf32, #tpu.memory_space<vmem>>, vector<1x64x64xf32>
      %61 = vector.shape_cast %60 : vector<1x64x64xf32> to vector<64x64xf32>
      %cst_55 = arith.constant dense<0.000000e+00> : vector<13x64xf32>
      %62 = tpu.matmul %59, %61, %cst_55 {dimension_numbers = #tpu.dot_dimension_numbers<[1], [0], [0], [1], [0, 0, 1, 1], [], []>} : vector<13x64xf32>, vector<64x64xf32>, vector<13x64xf32> -> vector<13x64xf32>
      %63 = arith.addf %55, %62 : vector<13x64xf32>
      %c4_i32 = arith.constant 4 : i32
      %64 = arith.addi %arg16, %c4_i32 : i32
      %65 = arith.index_cast %64 : i32 to index
      %c0_56 = arith.constant 0 : index
      %c0_57 = arith.constant 0 : index
      %66 = vector.load %arg14[%65, %c0_56, %c0_57] : memref<17x17x64xf32, #tpu.memory_space<vmem>>, vector<1x13x64xf32>
      %67 = vector.shape_cast %66 : vector<1x13x64xf32> to vector<13x64xf32>
      %c6 = arith.constant 6 : index
      %c0_58 = arith.constant 0 : index
      %c0_59 = arith.constant 0 : index
      %68 = vector.load %arg6[%c6, %c0_58, %c0_59] : memref<9x64x64xf32, #tpu.memory_space<vmem>>, vector<1x64x64xf32>
      %69 = vector.shape_cast %68 : vector<1x64x64xf32> to vector<64x64xf32>
      %cst_60 = arith.constant dense<0.000000e+00> : vector<13x64xf32>
      %70 = tpu.matmul %67, %69, %cst_60 {dimension_numbers = #tpu.dot_dimension_numbers<[1], [0], [0], [1], [0, 0, 1, 1], [], []>} : vector<13x64xf32>, vector<64x64xf32>, vector<13x64xf32> -> vector<13x64xf32>
      %71 = arith.addf %63, %70 : vector<13x64xf32>
      %c4_i32_61 = arith.constant 4 : i32
      %72 = arith.addi %arg16, %c4_i32_61 : i32
      %73 = arith.index_cast %72 : i32 to index
      %c2_62 = arith.constant 2 : index
      %c0_63 = arith.constant 0 : index
      %74 = vector.load %arg14[%73, %c2_62, %c0_63] : memref<17x17x64xf32, #tpu.memory_space<vmem>>, vector<1x13x64xf32>
      %75 = vector.shape_cast %74 : vector<1x13x64xf32> to vector<13x64xf32>
      %c7 = arith.constant 7 : index
      %c0_64 = arith.constant 0 : index
      %c0_65 = arith.constant 0 : index
      %76 = vector.load %arg6[%c7, %c0_64, %c0_65] : memref<9x64x64xf32, #tpu.memory_space<vmem>>, vector<1x64x64xf32>
      %77 = vector.shape_cast %76 : vector<1x64x64xf32> to vector<64x64xf32>
      %cst_66 = arith.constant dense<0.000000e+00> : vector<13x64xf32>
      %78 = tpu.matmul %75, %77, %cst_66 {dimension_numbers = #tpu.dot_dimension_numbers<[1], [0], [0], [1], [0, 0, 1, 1], [], []>} : vector<13x64xf32>, vector<64x64xf32>, vector<13x64xf32> -> vector<13x64xf32>
      %79 = arith.addf %71, %78 : vector<13x64xf32>
      %c4_i32_67 = arith.constant 4 : i32
      %80 = arith.addi %arg16, %c4_i32_67 : i32
      %81 = arith.index_cast %80 : i32 to index
      %c4_68 = arith.constant 4 : index
      %c0_69 = arith.constant 0 : index
      %82 = vector.load %arg14[%81, %c4_68, %c0_69] : memref<17x17x64xf32, #tpu.memory_space<vmem>>, vector<1x13x64xf32>
      %83 = vector.shape_cast %82 : vector<1x13x64xf32> to vector<13x64xf32>
      %c8 = arith.constant 8 : index
      %c0_70 = arith.constant 0 : index
      %c0_71 = arith.constant 0 : index
      %84 = vector.load %arg6[%c8, %c0_70, %c0_71] : memref<9x64x64xf32, #tpu.memory_space<vmem>>, vector<1x64x64xf32>
      %85 = vector.shape_cast %84 : vector<1x64x64xf32> to vector<64x64xf32>
      %cst_72 = arith.constant dense<0.000000e+00> : vector<13x64xf32>
      %86 = tpu.matmul %83, %85, %cst_72 {dimension_numbers = #tpu.dot_dimension_numbers<[1], [0], [0], [1], [0, 0, 1, 1], [], []>} : vector<13x64xf32>, vector<64x64xf32>, vector<13x64xf32> -> vector<13x64xf32>
      %87 = arith.addf %79, %86 : vector<13x64xf32>
      %c0_73 = arith.constant 0 : index
      %c0_74 = arith.constant 0 : index
      %88 = vector.load %arg7[%c0_73, %c0_74] : memref<1x64xf32, #tpu.memory_space<vmem>>, vector<1x64xf32>
      %89 = vector.broadcast %88 : vector<1x64xf32> to vector<13x64xf32>
      %90 = arith.addf %87, %89 : vector<13x64xf32>
      %cst_75 = arith.constant 0.000000e+00 : f32
      %91 = vector.broadcast %cst_75 : f32 to vector<13x64xf32>
      %92 = arith.maximumf %90, %91 : vector<13x64xf32>
      %93 = arith.index_cast %arg16 : i32 to index
      %c0_76 = arith.constant 0 : index
      %c0_77 = arith.constant 0 : index
      %94 = vector.load %arg15[%93, %c0_76, %c0_77] : memref<13x13x64xf32, #tpu.memory_space<vmem>>, vector<1x13x64xf32>
      %95 = vector.shape_cast %94 : vector<1x13x64xf32> to vector<13x64xf32>
      %96 = vector.shape_cast %92 : vector<13x64xf32> to vector<1x13x64xf32>
      tpu.vector_store %arg15[%93, %c0_76, %c0_77], %96 {strides = array<i32>} : memref<13x13x64xf32, #tpu.memory_space<vmem>>, vector<1x13x64xf32>,
    }
    %c13_i32_6 = arith.constant 13 : i32
    %cst = arith.constant 0.000000e+00 : f32
    %3 = vector.broadcast %cst : f32 to vector<1x512xf32>
    %c0_i32_7 = arith.constant 0 : i32
    %c7_i32 = arith.constant 7 : i32
    %4 = arith.addi %c0_i32_7, %c7_i32 : i32
    %c1_i32_8 = arith.constant 1 : i32
    %5 = scf.for %arg16 = %c0_i32_7 to %4 step %c1_i32_8 iter_args(%arg17 = %3) -> (vector<1x512xf32>)  : i32 {
      %c2_i32 = arith.constant 2 : i32
      %17 = arith.muli %c2_i32, %arg16 : i32
      %18 = arith.index_cast %17 : i32 to index
      %c0_20 = arith.constant 0 : index
      %c0_21 = arith.constant 0 : index
      %19 = vector.load %arg15[%18, %c0_20, %c0_21] : memref<13x13x64xf32, #tpu.memory_space<vmem>>, vector<1x13x64xf32>
      %20 = vector.shape_cast %19 : vector<1x13x64xf32> to vector<13x64xf32>
      %21 = vector.extract_strided_slice %20 {offsets = [0, 0], sizes = [1, 64], strides = [1, 1]} : vector<13x64xf32> to vector<1x64xf32>
      %c7_i32_22 = arith.constant 7 : i32
      %22 = arith.muli %arg16, %c7_i32_22 : i32
      %c0_i32_23 = arith.constant 0 : i32
      %23 = arith.addi %22, %c0_i32_23 : i32
      %24 = arith.index_cast %23 : i32 to index
      %c0_24 = arith.constant 0 : index
      %c0_25 = arith.constant 0 : index
      %25 = vector.load %arg8[%24, %c0_24, %c0_25] : memref<49x64x512xbf16, #tpu.memory_space<vmem>>, vector<1x64x512xbf16>
      %26 = vector.shape_cast %25 : vector<1x64x512xbf16> to vector<64x512xbf16>
      %27 = arith.extf %26 : vector<64x512xbf16> to vector<64x512xf32>
      %cst_26 = arith.constant dense<0.000000e+00> : vector<1x512xf32>
      %28 = tpu.matmul %21, %27, %cst_26 {dimension_numbers = #tpu.dot_dimension_numbers<[1], [0], [0], [1], [0, 0, 1, 1], [], []>} : vector<1x64xf32>, vector<64x512xf32>, vector<1x512xf32> -> vector<1x512xf32>
      %29 = arith.addf %arg17, %28 : vector<1x512xf32>
      %30 = vector.extract_strided_slice %20 {offsets = [2, 0], sizes = [1, 64], strides = [1, 1]} : vector<13x64xf32> to vector<1x64xf32>
      %c7_i32_27 = arith.constant 7 : i32
      %31 = arith.muli %arg16, %c7_i32_27 : i32
      %c1_i32_28 = arith.constant 1 : i32
      %32 = arith.addi %31, %c1_i32_28 : i32
      %33 = arith.index_cast %32 : i32 to index
      %c0_29 = arith.constant 0 : index
      %c0_30 = arith.constant 0 : index
      %34 = vector.load %arg8[%33, %c0_29, %c0_30] : memref<49x64x512xbf16, #tpu.memory_space<vmem>>, vector<1x64x512xbf16>
      %35 = vector.shape_cast %34 : vector<1x64x512xbf16> to vector<64x512xbf16>
      %36 = arith.extf %35 : vector<64x512xbf16> to vector<64x512xf32>
      %cst_31 = arith.constant dense<0.000000e+00> : vector<1x512xf32>
      %37 = tpu.matmul %30, %36, %cst_31 {dimension_numbers = #tpu.dot_dimension_numbers<[1], [0], [0], [1], [0, 0, 1, 1], [], []>} : vector<1x64xf32>, vector<64x512xf32>, vector<1x512xf32> -> vector<1x512xf32>
      %38 = arith.addf %29, %37 : vector<1x512xf32>
      %39 = vector.extract_strided_slice %20 {offsets = [4, 0], sizes = [1, 64], strides = [1, 1]} : vector<13x64xf32> to vector<1x64xf32>
      %c7_i32_32 = arith.constant 7 : i32
      %40 = arith.muli %arg16, %c7_i32_32 : i32
      %c2_i32_33 = arith.constant 2 : i32
      %41 = arith.addi %40, %c2_i32_33 : i32
      %42 = arith.index_cast %41 : i32 to index
      %c0_34 = arith.constant 0 : index
      %c0_35 = arith.constant 0 : index
      %43 = vector.load %arg8[%42, %c0_34, %c0_35] : memref<49x64x512xbf16, #tpu.memory_space<vmem>>, vector<1x64x512xbf16>
      %44 = vector.shape_cast %43 : vector<1x64x512xbf16> to vector<64x512xbf16>
      %45 = arith.extf %44 : vector<64x512xbf16> to vector<64x512xf32>
      %cst_36 = arith.constant dense<0.000000e+00> : vector<1x512xf32>
      %46 = tpu.matmul %39, %45, %cst_36 {dimension_numbers = #tpu.dot_dimension_numbers<[1], [0], [0], [1], [0, 0, 1, 1], [], []>} : vector<1x64xf32>, vector<64x512xf32>, vector<1x512xf32> -> vector<1x512xf32>
      %47 = arith.addf %38, %46 : vector<1x512xf32>
      %48 = vector.extract_strided_slice %20 {offsets = [6, 0], sizes = [1, 64], strides = [1, 1]} : vector<13x64xf32> to vector<1x64xf32>
      %c7_i32_37 = arith.constant 7 : i32
      %49 = arith.muli %arg16, %c7_i32_37 : i32
      %c3_i32 = arith.constant 3 : i32
      %50 = arith.addi %49, %c3_i32 : i32
      %51 = arith.index_cast %50 : i32 to index
      %c0_38 = arith.constant 0 : index
      %c0_39 = arith.constant 0 : index
      %52 = vector.load %arg8[%51, %c0_38, %c0_39] : memref<49x64x512xbf16, #tpu.memory_space<vmem>>, vector<1x64x512xbf16>
      %53 = vector.shape_cast %52 : vector<1x64x512xbf16> to vector<64x512xbf16>
      %54 = arith.extf %53 : vector<64x512xbf16> to vector<64x512xf32>
      %cst_40 = arith.constant dense<0.000000e+00> : vector<1x512xf32>
      %55 = tpu.matmul %48, %54, %cst_40 {dimension_numbers = #tpu.dot_dimension_numbers<[1], [0], [0], [1], [0, 0, 1, 1], [], []>} : vector<1x64xf32>, vector<64x512xf32>, vector<1x512xf32> -> vector<1x512xf32>
      %56 = arith.addf %47, %55 : vector<1x512xf32>
      %57 = vector.extract_strided_slice %20 {offsets = [8, 0], sizes = [1, 64], strides = [1, 1]} : vector<13x64xf32> to vector<1x64xf32>
      %c7_i32_41 = arith.constant 7 : i32
      %58 = arith.muli %arg16, %c7_i32_41 : i32
      %c4_i32 = arith.constant 4 : i32
      %59 = arith.addi %58, %c4_i32 : i32
      %60 = arith.index_cast %59 : i32 to index
      %c0_42 = arith.constant 0 : index
      %c0_43 = arith.constant 0 : index
      %61 = vector.load %arg8[%60, %c0_42, %c0_43] : memref<49x64x512xbf16, #tpu.memory_space<vmem>>, vector<1x64x512xbf16>
      %62 = vector.shape_cast %61 : vector<1x64x512xbf16> to vector<64x512xbf16>
      %63 = arith.extf %62 : vector<64x512xbf16> to vector<64x512xf32>
      %cst_44 = arith.constant dense<0.000000e+00> : vector<1x512xf32>
      %64 = tpu.matmul %57, %63, %cst_44 {dimension_numbers = #tpu.dot_dimension_numbers<[1], [0], [0], [1], [0, 0, 1, 1], [], []>} : vector<1x64xf32>, vector<64x512xf32>, vector<1x512xf32> -> vector<1x512xf32>
      %65 = arith.addf %56, %64 : vector<1x512xf32>
      %66 = vector.extract_strided_slice %20 {offsets = [10, 0], sizes = [1, 64], strides = [1, 1]} : vector<13x64xf32> to vector<1x64xf32>
      %c7_i32_45 = arith.constant 7 : i32
      %67 = arith.muli %arg16, %c7_i32_45 : i32
      %c5_i32 = arith.constant 5 : i32
      %68 = arith.addi %67, %c5_i32 : i32
      %69 = arith.index_cast %68 : i32 to index
      %c0_46 = arith.constant 0 : index
      %c0_47 = arith.constant 0 : index
      %70 = vector.load %arg8[%69, %c0_46, %c0_47] : memref<49x64x512xbf16, #tpu.memory_space<vmem>>, vector<1x64x512xbf16>
      %71 = vector.shape_cast %70 : vector<1x64x512xbf16> to vector<64x512xbf16>
      %72 = arith.extf %71 : vector<64x512xbf16> to vector<64x512xf32>
      %cst_48 = arith.constant dense<0.000000e+00> : vector<1x512xf32>
      %73 = tpu.matmul %66, %72, %cst_48 {dimension_numbers = #tpu.dot_dimension_numbers<[1], [0], [0], [1], [0, 0, 1, 1], [], []>} : vector<1x64xf32>, vector<64x512xf32>, vector<1x512xf32> -> vector<1x512xf32>
      %74 = arith.addf %65, %73 : vector<1x512xf32>
      %75 = vector.extract_strided_slice %20 {offsets = [12, 0], sizes = [1, 64], strides = [1, 1]} : vector<13x64xf32> to vector<1x64xf32>
      %c7_i32_49 = arith.constant 7 : i32
      %76 = arith.muli %arg16, %c7_i32_49 : i32
      %c6_i32 = arith.constant 6 : i32
      %77 = arith.addi %76, %c6_i32 : i32
      %78 = arith.index_cast %77 : i32 to index
      %c0_50 = arith.constant 0 : index
      %c0_51 = arith.constant 0 : index
      %79 = vector.load %arg8[%78, %c0_50, %c0_51] : memref<49x64x512xbf16, #tpu.memory_space<vmem>>, vector<1x64x512xbf16>
      %80 = vector.shape_cast %79 : vector<1x64x512xbf16> to vector<64x512xbf16>
      %81 = arith.extf %80 : vector<64x512xbf16> to vector<64x512xf32>
      %cst_52 = arith.constant dense<0.000000e+00> : vector<1x512xf32>
      %82 = tpu.matmul %75, %81, %cst_52 {dimension_numbers = #tpu.dot_dimension_numbers<[1], [0], [0], [1], [0, 0, 1, 1], [], []>} : vector<1x64xf32>, vector<64x512xf32>, vector<1x512xf32> -> vector<1x512xf32>
      %83 = arith.addf %74, %82 : vector<1x512xf32>
      scf.yield %83 : vector<1x512xf32>
    }
    %c7_i32_9 = arith.constant 7 : i32
    %c0 = arith.constant 0 : index
    %c0_10 = arith.constant 0 : index
    %6 = vector.load %arg9[%c0, %c0_10] : memref<1x512xf32, #tpu.memory_space<vmem>>, vector<1x512xf32>
    %7 = arith.addf %5, %6 : vector<1x512xf32>
    %cst_11 = arith.constant 0.000000e+00 : f32
    %8 = vector.broadcast %cst_11 : f32 to vector<1x512xf32>
    %9 = arith.maximumf %7, %8 : vector<1x512xf32>
    %c0_12 = arith.constant 0 : index
    %c0_13 = arith.constant 0 : index
    %10 = vector.load %arg10[%c0_12, %c0_13] : memref<512x7xf32, #tpu.memory_space<vmem>>, vector<512x7xf32>
    %cst_14 = arith.constant dense<0.000000e+00> : vector<1x7xf32>
    %11 = tpu.matmul %9, %10, %cst_14 {dimension_numbers = #tpu.dot_dimension_numbers<[1], [0], [0], [1], [0, 0, 1, 1], [], []>} : vector<1x512xf32>, vector<512x7xf32>, vector<1x7xf32> -> vector<1x7xf32>
    %c0_15 = arith.constant 0 : index
    %c0_16 = arith.constant 0 : index
    %12 = vector.load %arg11[%c0_15, %c0_16] : memref<1x7xf32, #tpu.memory_space<vmem>>, vector<1x7xf32>
    %13 = arith.addf %11, %12 : vector<1x7xf32>
    %c0_17 = arith.constant 0 : index
    %c0_18 = arith.constant 0 : index
    %c0_19 = arith.constant 0 : index
    %14 = vector.load %arg12[%c0_17, %c0_18, %c0_19] : memref<1x1x7xf32, #tpu.memory_space<vmem>>, vector<1x1x7xf32>
    %15 = vector.shape_cast %14 : vector<1x1x7xf32> to vector<1x7xf32>
    %16 = vector.shape_cast %13 : vector<1x7xf32> to vector<1x1x7xf32>
    tpu.vector_store %arg12[%c0_17, %c0_18, %c0_19], %16 {strides = array<i32>} : memref<1x1x7xf32, #tpu.memory_space<vmem>>, vector<1x1x7xf32>,
    return
  }
  func.func @transform_0(%arg0: i32) -> (i32, i32, i32, i32) {
    %c0_i32 = arith.constant 0 : i32
    %c0_i32_0 = arith.constant 0 : i32
    %c0_i32_1 = arith.constant 0 : i32
    %c0_i32_2 = arith.constant 0 : i32
    return %arg0, %c0_i32, %c0_i32_0, %c0_i32_1 : i32, i32, i32, i32
  }
  func.func @transform_1(%arg0: i32) -> (i32, i32, i32) {
    %c0_i32 = arith.constant 0 : i32
    %c0_i32_0 = arith.constant 0 : i32
    %c0_i32_1 = arith.constant 0 : i32
    %c0_i32_2 = arith.constant 0 : i32
    return %c0_i32, %c0_i32_0, %c0_i32_1 : i32, i32, i32
  }
  func.func @transform_2(%arg0: i32) -> (i32, i32) {
    %c0_i32 = arith.constant 0 : i32
    %c0_i32_0 = arith.constant 0 : i32
    %c0_i32_1 = arith.constant 0 : i32
    return %c0_i32, %c0_i32_0 : i32, i32
  }
  func.func @transform_3(%arg0: i32) -> (i32, i32, i32) {
    %c0_i32 = arith.constant 0 : i32
    %c0_i32_0 = arith.constant 0 : i32
    %c0_i32_1 = arith.constant 0 : i32
    %c0_i32_2 = arith.constant 0 : i32
    return %c0_i32, %c0_i32_0, %c0_i32_1 : i32, i32, i32
  }
  func.func @transform_4(%arg0: i32) -> (i32, i32) {
    %c0_i32 = arith.constant 0 : i32
    %c0_i32_0 = arith.constant 0 : i32
    %c0_i32_1 = arith.constant 0 : i32
    return %c0_i32, %c0_i32_0 : i32, i32
  }
  func.func @transform_5(%arg0: i32) -> (i32, i32, i32) {
    %c0_i32 = arith.constant 0 : i32
    %c0_i32_0 = arith.constant 0 : i32
    %c0_i32_1 = arith.constant 0 : i32
    %c0_i32_2 = arith.constant 0 : i32
    return %c0_i32, %c0_i32_0, %c0_i32_1 : i32, i32, i32
  }
  func.func @transform_6(%arg0: i32) -> (i32, i32) {
    %c0_i32 = arith.constant 0 : i32
    %c0_i32_0 = arith.constant 0 : i32
    %c0_i32_1 = arith.constant 0 : i32
    return %c0_i32, %c0_i32_0 : i32, i32
  }
  func.func @transform_7(%arg0: i32) -> (i32, i32, i32) {
    %c0_i32 = arith.constant 0 : i32
    %c0_i32_0 = arith.constant 0 : i32
    %c0_i32_1 = arith.constant 0 : i32
    %c0_i32_2 = arith.constant 0 : i32
    return %c0_i32, %c0_i32_0, %c0_i32_1 : i32, i32, i32
  }
  func.func @transform_8(%arg0: i32) -> (i32, i32) {
    %c0_i32 = arith.constant 0 : i32
    %c0_i32_0 = arith.constant 0 : i32
    %c0_i32_1 = arith.constant 0 : i32
    return %c0_i32, %c0_i32_0 : i32, i32
  }
  func.func @transform_9(%arg0: i32) -> (i32, i32) {
    %c0_i32 = arith.constant 0 : i32
    %c0_i32_0 = arith.constant 0 : i32
    %c0_i32_1 = arith.constant 0 : i32
    return %c0_i32, %c0_i32_0 : i32, i32
  }
  func.func @transform_10(%arg0: i32) -> (i32, i32) {
    %c0_i32 = arith.constant 0 : i32
    %c0_i32_0 = arith.constant 0 : i32
    %c0_i32_1 = arith.constant 0 : i32
    return %c0_i32, %c0_i32_0 : i32, i32
  }
  func.func @transform_11(%arg0: i32) -> (i32, i32, i32) {
    %c0_i32 = arith.constant 0 : i32
    %c0_i32_0 = arith.constant 0 : i32
    %c0_i32_1 = arith.constant 0 : i32
    return %arg0, %c0_i32, %c0_i32_0 : i32, i32, i32
  }
}

</mosaic_0001>

<llo_original>
// kernel: dqn_forward.1
$region0: #{dqn_forward.1}
  #allocation0 [shape = 'u32[]', space=smem, size = 0x4, offset = 0x4, fixed_abs, tag = 'smem constant byte address 0x4 - core index']
  #allocation1 [shape = 'u32[144,128]{1,0:T(1,128)}', space=vmem, size = 0x12000, scoped, tag = 'internal scratch']
  #allocation2 [shape = 'f32[20,20,32]{2,1,0:T(8,128)}', space=vmem, size = 0x3c000, scoped, tag = 'scratch operand']
  #allocation3 [shape = 'f32[17,17,64]{2,1,0:T(8,128)}', space=vmem, size = 0x33000, scoped, tag = 'scratch operand']
  #allocation4 [shape = 'f32[13,13,64]{2,1,0:T(8,128)}', space=vmem, size = 0x1a000, scoped, tag = 'scratch operand']
  %s0 = inlined_call_operand.vmem [shape: f32[2,21,21,16], index: 0, kind: input, shape index: {}]
  %s1 = inlined_call_operand.vmem [shape: f32[4,16,32], index: 1, kind: input, shape index: {}]
  %s2 = inlined_call_operand.vmem [shape: f32[1,32], index: 2, kind: input, shape index: {}]
  %s3 = inlined_call_operand.vmem [shape: f32[16,32,64], index: 3, kind: input, shape index: {}]
  %s4 = inlined_call_operand.vmem [shape: f32[1,64], index: 4, kind: input, shape index: {}]
  %s5 = inlined_call_operand.vmem [shape: f32[9,64,64], index: 5, kind: input, shape index: {}]
  %s6 = inlined_call_operand.vmem [shape: f32[1,64], index: 6, kind: input, shape index: {}]
  %s7 = inlined_call_operand.vmem [shape: bf16[49,64,512], index: 7, kind: input, shape index: {}]
  %s8 = inlined_call_operand.vmem [shape: f32[1,512], index: 8, kind: input, shape index: {}]
  %s9 = inlined_call_operand.vmem [shape: f32[512,7], index: 9, kind: input, shape index: {}]
  %s10 = inlined_call_operand.vmem [shape: f32[1,7], index: 10, kind: input, shape index: {}]
  %s11 = inlined_call_operand.hbm [shape: f32[2,1,7], index: 11, kind: output, shape index: {}]
  %s12 = sld [smem:[#allocation0]]
  $region105: #{dqn_forward.1} parent=0
    _
  %s14 = ssub.s32 1, %s12
  %s15 = scalar_select 0, %s14, %s12
  $region1: #{dqn_forward.1} parent=0
    #allocation5 [shape = 'u8[1024]{0}', space=vmem, size = 0x400, scoped, tag = 'output window, operand 0']
    #allocation6 [shape = 's32[2]{0}', space=sflag, size = 0x8, scoped, tag = 'scoped memory for dqn_forward.1']
    %16 = vsyncpa [#allocation6], 0
    %s17 = scalar_lea.sflag [#allocation6], 1
    %18 = vsyncpa %s17, 0
    loop: start=0, step=1, limit=4
    $region2: #{dqn_forward.1} parent=1 // loop_pre_header
      _
    $region3: #{dqn_forward.1} parent=1 // loop_header
      %s20 = sphi 0, %s24
      %p21 = scmp.ge.s32.totalorder %s20, 4
      %s30 = sphi 0, %s32
      %s33 = sphi 0, %s30
      %s34 = sphi 0, %s33
      %s50 = sphi 0, %s34
      %s54 = sphi 0, %s54
      %s56 = sphi 0, %s54
      %s57 = sphi 0, %s56
      %s71 = sphi 0, %s57
      %s75 = sphi 0, %s75
      %s77 = sphi 0, %s75
      %s78 = sphi 0, %s77
      %s92 = sphi 0, %s78
      %s96 = sphi 0, %s96
      %s98 = sphi 0, %s96
      %s99 = sphi 0, %s98
      %s113 = sphi 0, %s99
      %s117 = sphi 0, %s117
      %s119 = sphi 0, %s117
      %s120 = sphi 0, %s119
      %s134 = sphi 0, %s120
      %s138 = sphi 0, %s138
      %s140 = sphi 0, %s138
      %s141 = sphi 0, %s140
      %s155 = sphi 0, %s141
      %s159 = sphi 0, %s159
      %s161 = sphi 0, %s159
      %s162 = sphi 0, %s161
      %s176 = sphi 0, %s162
      %s180 = sphi 0, %s180
      %s182 = sphi 0, %s180
      %s183 = sphi 0, %s182
      %s197 = sphi 0, %s183
      %s201 = sphi 0, %s201
      %s203 = sphi 0, %s201
      %s204 = sphi 0, %s203
      %s218 = sphi 0, %s204
      %s222 = sphi 0, %s222
      %s224 = sphi 0, %s222
      %s225 = sphi 0, %s224
      %s239 = sphi 0, %s225
      %s243 = sphi 0, %s243
      %s245 = sphi 0, %s243
      %s246 = sphi 0, %s245
      %s260 = sphi 0, %s246
      %s266 = sphi 0, %s268
      %s269 = sphi 0, %s266
      %s270 = sphi 0, %s269
      %s286 = sphi 0, %s270
    $region4: #{dqn_forward.1} parent=1 // loop_header_branch
      %23 = sbr.rel (%p21) target = $region8
    $region5: #{dqn_forward.1} parent=1 // loop_body
      %s25 = ssub.s32 %s20, 1
      %s26 = ssub.s32 %s20, 2
      %s27 = sadd.s32 %s20, 1
      %s28 = ssub.s32 %s20, %s27
      %p29 = scmp.eq.s32.totalorder %s28, 0
      %s31 = sadd.s32 %s30, 1
      %s32 = scalar_select %p29, %s30, %s31
      %p35 = pneg %p29
      %p36 = scmp.eq.s32.totalorder %s20, 1
      %p37 = por %p35, %p36
      %p38 = scmp.ne.s32.totalorder %s30, %s33
      %p39 = scmp.eq.s32.totalorder %s20, 0
      %p40 = por %p38, %p39
      %p41 = scmp.ne.s32.totalorder %s30, %s33
      %p42 = scmp.eq.s32.totalorder %s25, 1
      %p43 = por %p41, %p42
      %p44 = scmp.ne.s32.totalorder %s33, %s34
      %p45 = scmp.eq.s32.totalorder %s25, 0
      %p46 = por %p44, %p45
      %p47 = scmp.ne.s32.totalorder %s33, %s34
      %p48 = scmp.eq.s32.totalorder %s26, 1
      %p49 = por %p47, %p48
      %p51 = scmp.ne.s32.totalorder %s34, %s50
      %p52 = scmp.eq.s32.totalorder %s26, 0
      %p53 = por %p51, %p52
      %s55 = sadd.s32 %s54, 1
      %p58 = scmp.eq.s32.totalorder %s20, 1
      %p59 = scmp.ne.s32.totalorder %s54, %s56
      %p60 = scmp.eq.s32.totalorder %s20, 0
      %p61 = por %p59, %p60
      %p62 = scmp.ne.s32.totalorder %s54, %s56
      %p63 = scmp.eq.s32.totalorder %s25, 1
      %p64 = por %p62, %p63
      %p65 = scmp.ne.s32.totalorder %s56, %s57
      %p66 = scmp.eq.s32.totalorder %s25, 0
      %p67 = por %p65, %p66
      %p68 = scmp.ne.s32.totalorder %s56, %s57
      %p69 = scmp.eq.s32.totalorder %s26, 1
      %p70 = por %p68, %p69
      %p72 = scmp.ne.s32.totalorder %s57, %s71
      %p73 = scmp.eq.s32.totalorder %s26, 0
      %p74 = por %p72, %p73
      %s76 = sadd.s32 %s75, 1
      %p79 = scmp.eq.s32.totalorder %s20, 1
      %p80 = scmp.ne.s32.totalorder %s75, %s77
      %p81 = scmp.eq.s32.totalorder %s20, 0
      %p82 = por %p80, %p81
      %p83 = scmp.ne.s32.totalorder %s75, %s77
      %p84 = scmp.eq.s32.totalorder %s25, 1
      %p85 = por %p83, %p84
      %p86 = scmp.ne.s32.totalorder %s77, %s78
      %p87 = scmp.eq.s32.totalorder %s25, 0
      %p88 = por %p86, %p87
      %p89 = scmp.ne.s32.totalorder %s77, %s78
      %p90 = scmp.eq.s32.totalorder %s26, 1
      %p91 = por %p89, %p90
      %p93 = scmp.ne.s32.totalorder %s78, %s92
      %p94 = scmp.eq.s32.totalorder %s26, 0
      %p95 = por %p93, %p94
      %s97 = sadd.s32 %s96, 1
      %p100 = scmp.eq.s32.totalorder %s20, 1
      %p101 = scmp.ne.s32.totalorder %s96, %s98
      %p102 = scmp.eq.s32.totalorder %s20, 0
      %p103 = por %p101, %p102
      %p104 = scmp.ne.s32.totalorder %s96, %s98
      %p105 = scmp.eq.s32.totalorder %s25, 1
      %p106 = por %p104, %p105
      %p107 = scmp.ne.s32.totalorder %s98, %s99
      %p108 = scmp.eq.s32.totalorder %s25, 0
      %p109 = por %p107, %p108
      %p110 = scmp.ne.s32.totalorder %s98, %s99
      %p111 = scmp.eq.s32.totalorder %s26, 1
      %p112 = por %p110, %p111
      %p114 = scmp.ne.s32.totalorder %s99, %s113
      %p115 = scmp.eq.s32.totalorder %s26, 0
      %p116 = por %p114, %p115
      %s118 = sadd.s32 %s117, 1
      %p121 = scmp.eq.s32.totalorder %s20, 1
      %p122 = scmp.ne.s32.totalorder %s117, %s119
      %p123 = scmp.eq.s32.totalorder %s20, 0
      %p124 = por %p122, %p123
      %p125 = scmp.ne.s32.totalorder %s117, %s119
      %p126 = scmp.eq.s32.totalorder %s25, 1
      %p127 = por %p125, %p126
      %p128 = scmp.ne.s32.totalorder %s119, %s120
      %p129 = scmp.eq.s32.totalorder %s25, 0
      %p130 = por %p128, %p129
      %p131 = scmp.ne.s32.totalorder %s119, %s120
      %p132 = scmp.eq.s32.totalorder %s26, 1
      %p133 = por %p131, %p132
      %p135 = scmp.ne.s32.totalorder %s120, %s134
      %p136 = scmp.eq.s32.totalorder %s26, 0
      %p137 = por %p135, %p136
      %s139 = sadd.s32 %s138, 1
      %p142 = scmp.eq.s32.totalorder %s20, 1
      %p143 = scmp.ne.s32.totalorder %s138, %s140
      %p144 = scmp.eq.s32.totalorder %s20, 0
      %p145 = por %p143, %p144
      %p146 = scmp.ne.s32.totalorder %s138, %s140
      %p147 = scmp.eq.s32.totalorder %s25, 1
      %p148 = por %p146, %p147
      %p149 = scmp.ne.s32.totalorder %s140, %s141
      %p150 = scmp.eq.s32.totalorder %s25, 0
      %p151 = por %p149, %p150
      %p152 = scmp.ne.s32.totalorder %s140, %s141
      %p153 = scmp.eq.s32.totalorder %s26, 1
      %p154 = por %p152, %p153
      %p156 = scmp.ne.s32.totalorder %s141, %s155
      %p157 = scmp.eq.s32.totalorder %s26, 0
      %p158 = por %p156, %p157
      %s160 = sadd.s32 %s159, 1
      %p163 = scmp.eq.s32.totalorder %s20, 1
      %p164 = scmp.ne.s32.totalorder %s159, %s161
      %p165 = scmp.eq.s32.totalorder %s20, 0
      %p166 = por %p164, %p165
      %p167 = scmp.ne.s32.totalorder %s159, %s161
      %p168 = scmp.eq.s32.totalorder %s25, 1
      %p169 = por %p167, %p168
      %p170 = scmp.ne.s32.totalorder %s161, %s162
      %p171 = scmp.eq.s32.totalorder %s25, 0
      %p172 = por %p170, %p171
      %p173 = scmp.ne.s32.totalorder %s161, %s162
      %p174 = scmp.eq.s32.totalorder %s26, 1
      %p175 = por %p173, %p174
      %p177 = scmp.ne.s32.totalorder %s162, %s176
      %p178 = scmp.eq.s32.totalorder %s26, 0
      %p179 = por %p177, %p178
      %s181 = sadd.s32 %s180, 1
      %p184 = scmp.eq.s32.totalorder %s20, 1
      %p185 = scmp.ne.s32.totalorder %s180, %s182
      %p186 = scmp.eq.s32.totalorder %s20, 0
      %p187 = por %p185, %p186
      %p188 = scmp.ne.s32.totalorder %s180, %s182
      %p189 = scmp.eq.s32.totalorder %s25, 1
      %p190 = por %p188, %p189
      %p191 = scmp.ne.s32.totalorder %s182, %s183
      %p192 = scmp.eq.s32.totalorder %s25, 0
      %p193 = por %p191, %p192
      %p194 = scmp.ne.s32.totalorder %s182, %s183
      %p195 = scmp.eq.s32.totalorder %s26, 1
      %p196 = por %p194, %p195
      %p198 = scmp.ne.s32.totalorder %s183, %s197
      %p199 = scmp.eq.s32.totalorder %s26, 0
      %p200 = por %p198, %p199
      %s202 = sadd.s32 %s201, 1
      %p205 = scmp.eq.s32.totalorder %s20, 1
      %p206 = scmp.ne.s32.totalorder %s201, %s203
      %p207 = scmp.eq.s32.totalorder %s20, 0
      %p208 = por %p206, %p207
      %p209 = scmp.ne.s32.totalorder %s201, %s203
      %p210 = scmp.eq.s32.totalorder %s25, 1
      %p211 = por %p209, %p210
      %p212 = scmp.ne.s32.totalorder %s203, %s204
      %p213 = scmp.eq.s32.totalorder %s25, 0
      %p214 = por %p212, %p213
      %p215 = scmp.ne.s32.totalorder %s203, %s204
      %p216 = scmp.eq.s32.totalorder %s26, 1
      %p217 = por %p215, %p216
      %p219 = scmp.ne.s32.totalorder %s204, %s218
      %p220 = scmp.eq.s32.totalorder %s26, 0
      %p221 = por %p219, %p220
      %s223 = sadd.s32 %s222, 1
      %p226 = scmp.eq.s32.totalorder %s20, 1
      %p227 = scmp.ne.s32.totalorder %s222, %s224
      %p228 = scmp.eq.s32.totalorder %s20, 0
      %p229 = por %p227, %p228
      %p230 = scmp.ne.s32.totalorder %s222, %s224
      %p231 = scmp.eq.s32.totalorder %s25, 1
      %p232 = por %p230, %p231
      %p233 = scmp.ne.s32.totalorder %s224, %s225
      %p234 = scmp.eq.s32.totalorder %s25, 0
      %p235 = por %p233, %p234
      %p236 = scmp.ne.s32.totalorder %s224, %s225
      %p237 = scmp.eq.s32.totalorder %s26, 1
      %p238 = por %p236, %p237
      %p240 = scmp.ne.s32.totalorder %s225, %s239
      %p241 = scmp.eq.s32.totalorder %s26, 0
      %p242 = por %p240, %p241
      %s244 = sadd.s32 %s243, 1
      %p247 = scmp.eq.s32.totalorder %s20, 1
      %p248 = scmp.ne.s32.totalorder %s243, %s245
      %p249 = scmp.eq.s32.totalorder %s20, 0
      %p250 = por %p248, %p249
      %p251 = scmp.ne.s32.totalorder %s243, %s245
      %p252 = scmp.eq.s32.totalorder %s25, 1
      %p253 = por %p251, %p252
      %p254 = scmp.ne.s32.totalorder %s245, %s246
      %p255 = scmp.eq.s32.totalorder %s25, 0
      %p256 = por %p254, %p255
      %p257 = scmp.ne.s32.totalorder %s245, %s246
      %p258 = scmp.eq.s32.totalorder %s26, 1
      %p259 = por %p257, %p258
      %p261 = scmp.ne.s32.totalorder %s246, %s260
      %p262 = scmp.eq.s32.totalorder %s26, 0
      %p263 = por %p261, %p262
      %s264 = ssub.s32 %s20, %s27
      %p265 = scmp.eq.s32.totalorder %s264, 0
      %s267 = sadd.s32 %s266, 1
      %s268 = scalar_select %p265, %s266, %s267
      %p271 = pneg %p265
      %p272 = scmp.eq.s32.totalorder %s20, 1
      %p273 = por %p271, %p272
      %p274 = scmp.ne.s32.totalorder %s266, %s269
      %p275 = scmp.eq.s32.totalorder %s20, 0
      %p276 = por %p274, %p275
      %p277 = scmp.ne.s32.totalorder %s266, %s269
      %p278 = scmp.eq.s32.totalorder %s25, 1
      %p279 = por %p277, %p278
      %p280 = scmp.ne.s32.totalorder %s269, %s270
      %p281 = scmp.eq.s32.totalorder %s25, 0
      %p282 = por %p280, %p281
      %p283 = scmp.ne.s32.totalorder %s269, %s270
      %p284 = scmp.eq.s32.totalorder %s26, 1
      %p285 = por %p283, %p284
      %p287 = scmp.ne.s32.totalorder %s270, %s286
      %p288 = scmp.eq.s32.totalorder %s26, 0
      %p289 = por %p287, %p288
      %p290 = scmp.le.s32.totalorder 1, %s20
      %p291 = scmp.lt.s32.totalorder %s20, 3
      %p292 = pnand %p290, %p291
      %p293 = pneg %p292
      // Predicated region
      $region9: #{dqn_forward.1} parent=5 // pred_check
        _
      $region10: #{dqn_forward.1} parent=5 // pred_check_branch
        %295 = sbr.rel (%p292) target = $region12
      $region11: #{dqn_forward.1} parent=5 // pred_region
        %s296 = ssub.s32 %s20, 1
        // Predicated region
        $region13: #{dqn_forward.1} parent=11 // pred_check
          %p297 = pneg %p67
        $region14: #{dqn_forward.1} parent=11 // pred_check_branch
          %299 = sbr.rel (%p297) target = $region16
        $region15: #{dqn_forward.1} parent=11 // pred_region
          _
        $region16: #{dqn_forward.1} parent=11 // pred_fallthru
          _
        // Predicated region
        $region17: #{dqn_forward.1} parent=11 // pred_check
          %p300 = pneg %p88
        $region18: #{dqn_forward.1} parent=11 // pred_check_branch
          %302 = sbr.rel (%p300) target = $region20
        $region19: #{dqn_forward.1} parent=11 // pred_region
          _
        $region20: #{dqn_forward.1} parent=11 // pred_fallthru
          _
        // Predicated region
        $region21: #{dqn_forward.1} parent=11 // pred_check
          %p303 = pneg %p109
        $region22: #{dqn_forward.1} parent=11 // pred_check_branch
          %305 = sbr.rel (%p303) target = $region24
        $region23: #{dqn_forward.1} parent=11 // pred_region
          _
        $region24: #{dqn_forward.1} parent=11 // pred_fallthru
          _
        // Predicated region
        $region25: #{dqn_forward.1} parent=11 // pred_check
          %p306 = pneg %p130
        $region26: #{dqn_forward.1} parent=11 // pred_check_branch
          %308 = sbr.rel (%p306) target = $region28
        $region27: #{dqn_forward.1} parent=11 // pred_region
          _
        $region28: #{dqn_forward.1} parent=11 // pred_fallthru
          _
        // Predicated region
        $region29: #{dqn_forward.1} parent=11 // pred_check
          %p309 = pneg %p151
        $region30: #{dqn_forward.1} parent=11 // pred_check_branch
          %311 = sbr.rel (%p309) target = $region32
        $region31: #{dqn_forward.1} parent=11 // pred_region
          _
        $region32: #{dqn_forward.1} parent=11 // pred_fallthru
          _
        // Predicated region
        $region33: #{dqn_forward.1} parent=11 // pred_check
          %p312 = pneg %p172
        $region34: #{dqn_forward.1} parent=11 // pred_check_branch
          %314 = sbr.rel (%p312) target = $region36
        $region35: #{dqn_forward.1} parent=11 // pred_region
          _
        $region36: #{dqn_forward.1} parent=11 // pred_fallthru
          _
        // Predicated region
        $region37: #{dqn_forward.1} parent=11 // pred_check
          %p315 = pneg %p193
        $region38: #{dqn_forward.1} parent=11 // pred_check_branch
          %317 = sbr.rel (%p315) target = $region40
        $region39: #{dqn_forward.1} parent=11 // pred_region
          _
        $region40: #{dqn_forward.1} parent=11 // pred_fallthru
          _
        // Predicated region
        $region41: #{dqn_forward.1} parent=11 // pred_check
          %p318 = pneg %p214
        $region42: #{dqn_forward.1} parent=11 // pred_check_branch
          %320 = sbr.rel (%p318) target = $region44
        $region43: #{dqn_forward.1} parent=11 // pred_region
          _
        $region44: #{dqn_forward.1} parent=11 // pred_fallthru
          _
        // Predicated region
        $region45: #{dqn_forward.1} parent=11 // pred_check
          %p321 = pneg %p235
        $region46: #{dqn_forward.1} parent=11 // pred_check_branch
          %323 = sbr.rel (%p321) target = $region48
        $region47: #{dqn_forward.1} parent=11 // pred_region
          _
        $region48: #{dqn_forward.1} parent=11 // pred_fallthru
          _
        // Predicated region
        $region49: #{dqn_forward.1} parent=11 // pred_check
          %p324 = pneg %p256
        $region50: #{dqn_forward.1} parent=11 // pred_check_branch
          %326 = sbr.rel (%p324) target = $region52
        $region51: #{dqn_forward.1} parent=11 // pred_region
          _
        $region52: #{dqn_forward.1} parent=11 // pred_fallthru
          _
      $region12: #{dqn_forward.1} parent=5 // pred_fallthru
        _
      %p327 = scmp.lt.s32.totalorder %s20, 2
      // Predicated region
      $region53: #{dqn_forward.1} parent=5 // pred_check
        %p328 = pneg %p327
      $region54: #{dqn_forward.1} parent=5 // pred_check_branch
        %330 = sbr.rel (%p328) target = $region56
      $region55: #{dqn_forward.1} parent=5 // pred_region
        // Predicated region
        $region57: #{dqn_forward.1} parent=55 // pred_check
          %p331 = pneg %p40
        $region58: #{dqn_forward.1} parent=55 // pred_check_branch
          %333 = sbr.rel (%p331) target = $region60
        $region59: #{dqn_forward.1} parent=55 // pred_region
          %p334 = scmp.lt.s32.totalorder %s20, 1
          %s335 = scalar_select %p334, %s20, 1
          %s336 = smul.addr %s335, 63
          %s337 = smul.addr %s336, 8
          %s338 = scalar_lea.vmem %s0, %s337
        $region60: #{dqn_forward.1} parent=55 // pred_fallthru
          _
      $region56: #{dqn_forward.1} parent=5 // pred_fallthru
        _
      %p339 = scmp.le.s32.totalorder 1, %s20
      %p340 = scmp.lt.s32.totalorder %s20, 3
      %p341 = pnand %p339, %p340
      %p342 = pneg %p341
      // Predicated region
      $region61: #{dqn_forward.1} parent=5 // pred_check
        _
      $region62: #{dqn_forward.1} parent=5 // pred_check_branch
        %344 = sbr.rel (%p341) target = $region64
      $region63: #{dqn_forward.1} parent=5 // pred_region
        %s345 = ssub.s32 %s20, 1
        %p346 = scmp.lt.s32.totalorder %s25, 1
        %s347 = scalar_select %p346, %s25, 1
        %s348 = smul.addr %s347, 63
        %s349 = smul.addr %s348, 8
        %s350 = scalar_lea.vmem %s0, %s349
        %p351 = pneg %p46
        %p352 = pneg %p43
        %p353 = pneg %p67
        %p354 = pneg %p64
        %p355 = pneg %p88
        %p356 = pneg %p85
        %p357 = pneg %p109
        %p358 = pneg %p106
        %p359 = pneg %p130
        %p360 = pneg %p127
        %p361 = pneg %p151
        %p362 = pneg %p148
        %p363 = pneg %p172
        %p364 = pneg %p169
        %p365 = pneg %p193
        %p366 = pneg %p190
        %p367 = pneg %p214
        %p368 = pneg %p211
        %p369 = pneg %p235
        %p370 = pneg %p232
        %p371 = pneg %p256
        %p372 = pneg %p253
        %p373 = pneg %p282
        %p374 = pneg %p279
        %s375 = sand.u32 %s269, 1
        %s376 = scalar_lea.sflag [#allocation6], %s375
        %s377 = sand.u32 %s269, 1
        %s378 = scalar_lea.vmem [#allocation5], %s377
        %p379 = scmp.lt.s32.totalorder %s25, 1
        %s380 = scalar_select %p379, %s25, 1
        %s381 = smul.addr %s380, 63
        %s382 = smul.addr %s381, 8
        %s383 = scalar_lea.vmem %s0, %s382
        loop: start=0, step=1, limit=20
        $region65: #{dqn_forward.1} parent=63 // loop_pre_header
          _
        $region66: #{dqn_forward.1} parent=63 // loop_header
          %s385 = sphi 0, %s389
          %p386 = scmp.ge.s32.totalorder %s385, 20
        $region67: #{dqn_forward.1} parent=63 // loop_header_branch
          %388 = sbr.rel (%p386) target = $region71
        $region68: #{dqn_forward.1} parent=63 // loop_body
          %s390 = smul.u32 %s385, 24
          %s391 = scalar_lea.vmem %s383, %s390
          %v392 = vld [vmem:[%s391] sm:$0xff]
          %v393 = vld [vmem:[%s391 + $0x8] sm:$0xff]
          %v394 = vld [vmem:[%s391 + $0x10] sm:$0xf]
          %v395 = vld [vmem:[%s1] sm:$0xff]
          %v396 = vld [vmem:[%s1 + $0x8] sm:$0xff]
          %v397 = vld [vmem:[%s391 + $0x1] sm:$0xff]
          %v398 = vld [vmem:[%s391 + $0x9] sm:$0xff]
          %v399 = vld [vmem:[%s391 + $0x11] sm:$0xf]
          %s400 = scalar_lea.vmem %s1, 16
          %v401 = vld [vmem:[%s400] sm:$0xff]
          %v402 = vld [vmem:[%s400 + $0x8] sm:$0xff]
          %vm403 = vcmask 130048
          %v405 = vsel %vm403, %v397, 0
          %v408 = vsel %vm403, %v398, 0
          %v411 = vsel %vm403, %v399, 0
          %413 = vmatprep.subr.mxu0 0.0
          %414 = vmatpush1.msra.mxu0 %v401
          %415 = vmatprep.subr.mxu0 0.0
          %416 = vmatpush1.msra.mxu0 %v402
          %417 = vmatprep.subr.mxu0 0.0
          %418 = vmatpush1.msra.mxu0 0.0
          %419 = vmatprep.subr.mxu0 0.0
          %420 = vmatpush1.msra.mxu0 0.0
          %421 = vmatprep.subr.mxu0 0.0
          %422 = vmatpush1.msra.mxu0 0.0
          %423 = vmatprep.subr.mxu0 0.0
          %424 = vmatpush1.msra.mxu0 0.0
          %425 = vmatprep.subr.mxu0 0.0
          %426 = vmatpush1.msra.mxu0 0.0
          %427 = vmatprep.subr.mxu0 0.0
          %428 = vmatpush1.msra.mxu0 0.0
          %429 = vmatprep.subr.mxu0 0.0
          %430 = vmatpush1.msra.mxu0 0.0
          %431 = vmatprep.subr.mxu0 0.0
          %432 = vmatpush1.msra.mxu0 0.0
          %433 = vmatprep.subr.mxu0 0.0
          %434 = vmatpush1.msra.mxu0 0.0
          %435 = vmatprep.subr.mxu0 0.0
          %436 = vmatpush1.msra.mxu0 0.0
          %437 = vmatprep.subr.mxu0 0.0
          %438 = vmatpush1.msra.mxu0 0.0
          %439 = vmatprep.subr.mxu0 0.0
          %440 = vmatpush1.msra.mxu0 0.0
          %441 = vmatprep.subr.mxu0 0.0
          %442 = vmatpush1.msra.mxu0 0.0
          %443 = vmatprep.subr.mxu0 0.0
          %444 = vmatpush1.msra.mxu0 0.0
          %445 = vmatprep.subr.mxu0 0.0
          %446 = vmatpush1.msra.mxu0 0.0
          %447 = vmatprep.subr.mxu0 0.0
          %448 = vmatpush1.msra.mxu0 0.0
          %449 = vmatprep.subr.mxu0 0.0
          %450 = vmatpush1.msra.mxu0 0.0
          %451 = vmatprep.subr.mxu0 0.0
          %452 = vmatpush1.msra.mxu0 0.0
          %453 = vmatprep.subr.mxu0 0.0
          %454 = vmatpush1.msra.mxu0 0.0
          %455 = vmatprep.subr.mxu0 0.0
          %456 = vmatpush1.msra.mxu0 0.0
          %457 = vmatprep.subr.mxu0 0.0
          %458 = vmatpush1.msra.mxu0 0.0
          %459 = vmatprep.subr.mxu0 0.0
          %460 = vmatpush1.msra.mxu0 0.0
          %461 = vmatprep.subr.mxu0 0.0
          %462 = vmatpush1.msra.mxu0 0.0
          %463 = vmatprep.subr.mxu0 0.0
          %464 = vmatpush1.msra.mxu0 0.0
          %465 = vmatprep.subr.mxu0 0.0
          %466 = vmatpush1.msra.mxu0 0.0
          %467 = vmatprep.subr.mxu0 0.0
          %468 = vmatpush1.msra.mxu0 0.0
          %469 = vmatprep.subr.mxu0 0.0
          %470 = vmatpush1.msra.mxu0 0.0
          %471 = vmatprep.subr.mxu0 0.0
          %472 = vmatpush1.msra.mxu0 0.0
          %473 = vmatprep.subr.mxu0 0.0
          %474 = vmatpush1.msra.mxu0 0.0
          %475 = vmatprep.subr.mxu0 0.0
          %476 = vmatpush1.msra.mxu0 0.0
          %477 = vmatprep.mubr.f32.mxu0 0.0
          %478 = vmatmul.mubr.f32.gmra.mrb[0].mxu0 %v405
          %v479 = vpop.f32.mrb[0].mxu0
          %v480 = vadd.f32 0.0, %v479
          %v481 = vpop.f32.mrb[0].mxu0
          %482 = vmatprep.mubr.f32.mxu0 0.0
          %483 = vmatmul.mubr.f32.gmra.mrb[0].mxu0 %v408
          %v484 = vpop.f32.mrb[0].mxu0
          %v485 = vadd.f32 0.0, %v484
          %v486 = vpop.f32.mrb[0].mxu0
          %487 = vmatprep.mubr.f32.mxu0 0.0
          %488 = vmatmul.mubr.f32.gmra.mrb[0].mxu0 %v411
          %v489 = vpop.f32.mrb[0].mxu0
          %v490 = vadd.f32 0.0, %v489
          %v491 = vpop.f32.mrb[0].mxu0
          %492 = vdwg.mxu0
          %v494 = vsel %vm403, %v392, 0
          %v497 = vsel %vm403, %v393, 0
          %v500 = vsel %vm403, %v394, 0
          %502 = vmatprep.subr.mxu0 0.0
          %503 = vmatpush1.msra.mxu0 %v395
          %504 = vmatprep.subr.mxu0 0.0
          %505 = vmatpush1.msra.mxu0 %v396
          %506 = vmatprep.subr.mxu0 0.0
          %507 = vmatpush1.msra.mxu0 0.0
          %508 = vmatprep.subr.mxu0 0.0
          %509 = vmatpush1.msra.mxu0 0.0
          %510 = vmatprep.subr.mxu0 0.0
          %511 = vmatpush1.msra.mxu0 0.0
          %512 = vmatprep.subr.mxu0 0.0
          %513 = vmatpush1.msra.mxu0 0.0
          %514 = vmatprep.subr.mxu0 0.0
          %515 = vmatpush1.msra.mxu0 0.0
          %516 = vmatprep.subr.mxu0 0.0
          %517 = vmatpush1.msra.mxu0 0.0
          %518 = vmatprep.subr.mxu0 0.0
          %519 = vmatpush1.msra.mxu0 0.0
          %520 = vmatprep.subr.mxu0 0.0
          %521 = vmatpush1.msra.mxu0 0.0
          %522 = vmatprep.subr.mxu0 0.0
          %523 = vmatpush1.msra.mxu0 0.0
          %524 = vmatprep.subr.mxu0 0.0
          %525 = vmatpush1.msra.mxu0 0.0
          %526 = vmatprep.subr.mxu0 0.0
          %527 = vmatpush1.msra.mxu0 0.0
          %528 = vmatprep.subr.mxu0 0.0
          %529 = vmatpush1.msra.mxu0 0.0
          %530 = vmatprep.subr.mxu0 0.0
          %531 = vmatpush1.msra.mxu0 0.0
          %532 = vmatprep.subr.mxu0 0.0
          %533 = vmatpush1.msra.mxu0 0.0
          %534 = vmatprep.subr.mxu0 0.0
          %535 = vmatpush1.msra.mxu0 0.0
          %536 = vmatprep.subr.mxu0 0.0
          %537 = vmatpush1.msra.mxu0 0.0
          %538 = vmatprep.subr.mxu0 0.0
          %539 = vmatpush1.msra.mxu0 0.0
          %540 = vmatprep.subr.mxu0 0.0
          %541 = vmatpush1.msra.mxu0 0.0
          %542 = vmatprep.subr.mxu0 0.0
          %543 = vmatpush1.msra.mxu0 0.0
          %544 = vmatprep.subr.mxu0 0.0
          %545 = vmatpush1.msra.mxu0 0.0
          %546 = vmatprep.subr.mxu0 0.0
          %547 = vmatpush1.msra.mxu0 0.0
          %548 = vmatprep.subr.mxu0 0.0
          %549 = vmatpush1.msra.mxu0 0.0
          %550 = vmatprep.subr.mxu0 0.0
          %551 = vmatpush1.msra.mxu0 0.0
          %552 = vmatprep.subr.mxu0 0.0
          %553 = vmatpush1.msra.mxu0 0.0
          %554 = vmatprep.subr.mxu0 0.0
          %555 = vmatpush1.msra.mxu0 0.0
          %556 = vmatprep.subr.mxu0 0.0
          %557 = vmatpush1.msra.mxu0 0.0
          %558 = vmatprep.subr.mxu0 0.0
          %559 = vmatpush1.msra.mxu0 0.0
          %560 = vmatprep.subr.mxu0 0.0
          %561 = vmatpush1.msra.mxu0 0.0
          %562 = vmatprep.subr.mxu0 0.0
          %563 = vmatpush1.msra.mxu0 0.0
          %564 = vmatprep.subr.mxu0 0.0
          %565 = vmatpush1.msra.mxu0 0.0
          %566 = vmatprep.mubr.f32.mxu0 0.0
          %567 = vmatmul.mubr.f32.gmra.mrb[0].mxu0 %v494
          %v568 = vpop.f32.mrb[0].mxu0
          %v569 = vadd.f32 %v480, %v568
          %v570 = vpop.f32.mrb[0].mxu0
          %571 = vmatprep.mubr.f32.mxu0 0.0
          %572 = vmatmul.mubr.f32.gmra.mrb[0].mxu0 %v497
          %v573 = vpop.f32.mrb[0].mxu0
          %v574 = vadd.f32 %v485, %v573
          %v575 = vpop.f32.mrb[0].mxu0
          %576 = vmatprep.mubr.f32.mxu0 0.0
          %577 = vmatmul.mubr.f32.gmra.mrb[0].mxu0 %v500
          %v578 = vpop.f32.mrb[0].mxu0
          %v579 = vadd.f32 %v490, %v578
          %v580 = vpop.f32.mrb[0].mxu0
          %581 = vdwg.mxu0
          %s582 = sadd.s32 %s385, 1
          %s583 = smul.u32 %s582, 24
          %s584 = scalar_lea.vmem %s383, %s583
          %v585 = vld [vmem:[%s584] sm:$0xff]
          %v586 = vld [vmem:[%s584 + $0x8] sm:$0xff]
          %v587 = vld [vmem:[%s584 + $0x10] sm:$0xf]
          %s588 = scalar_lea.vmem %s1, 32
          %v589 = vld [vmem:[%s588] sm:$0xff]
          %v590 = vld [vmem:[%s588 + $0x8] sm:$0xff]
          %v592 = vsel %vm403, %v585, 0
          %v595 = vsel %vm403, %v586, 0
          %v598 = vsel %vm403, %v587, 0
          %600 = vmatprep.subr.mxu0 0.0
          %601 = vmatpush1.msra.mxu0 %v589
          %602 = vmatprep.subr.mxu0 0.0
          %603 = vmatpush1.msra.mxu0 %v590
          %604 = vmatprep.subr.mxu0 0.0
          %605 = vmatpush1.msra.mxu0 0.0
          %606 = vmatprep.subr.mxu0 0.0
          %607 = vmatpush1.msra.mxu0 0.0
          %608 = vmatprep.subr.mxu0 0.0
          %609 = vmatpush1.msra.mxu0 0.0
          %610 = vmatprep.subr.mxu0 0.0
          %611 = vmatpush1.msra.mxu0 0.0
          %612 = vmatprep.subr.mxu0 0.0
          %613 = vmatpush1.msra.mxu0 0.0
          %614 = vmatprep.subr.mxu0 0.0
          %615 = vmatpush1.msra.mxu0 0.0
          %616 = vmatprep.subr.mxu0 0.0
          %617 = vmatpush1.msra.mxu0 0.0
          %618 = vmatprep.subr.mxu0 0.0
          %619 = vmatpush1.msra.mxu0 0.0
          %620 = vmatprep.subr.mxu0 0.0
          %621 = vmatpush1.msra.mxu0 0.0
          %622 = vmatprep.subr.mxu0 0.0
          %623 = vmatpush1.msra.mxu0 0.0
          %624 = vmatprep.subr.mxu0 0.0
          %625 = vmatpush1.msra.mxu0 0.0
          %626 = vmatprep.subr.mxu0 0.0
          %627 = vmatpush1.msra.mxu0 0.0
          %628 = vmatprep.subr.mxu0 0.0
          %629 = vmatpush1.msra.mxu0 0.0
          %630 = vmatprep.subr.mxu0 0.0
          %631 = vmatpush1.msra.mxu0 0.0
          %632 = vmatprep.subr.mxu0 0.0
          %633 = vmatpush1.msra.mxu0 0.0
          %634 = vmatprep.subr.mxu0 0.0
          %635 = vmatpush1.msra.mxu0 0.0
          %636 = vmatprep.subr.mxu0 0.0
          %637 = vmatpush1.msra.mxu0 0.0
          %638 = vmatprep.subr.mxu0 0.0
          %639 = vmatpush1.msra.mxu0 0.0
          %640 = vmatprep.subr.mxu0 0.0
          %641 = vmatpush1.msra.mxu0 0.0
          %642 = vmatprep.subr.mxu0 0.0
          %643 = vmatpush1.msra.mxu0 0.0
          %644 = vmatprep.subr.mxu0 0.0
          %645 = vmatpush1.msra.mxu0 0.0
          %646 = vmatprep.subr.mxu0 0.0
          %647 = vmatpush1.msra.mxu0 0.0
          %648 = vmatprep.subr.mxu0 0.0
          %649 = vmatpush1.msra.mxu0 0.0
          %650 = vmatprep.subr.mxu0 0.0
          %651 = vmatpush1.msra.mxu0 0.0
          %652 = vmatprep.subr.mxu0 0.0
          %653 = vmatpush1.msra.mxu0 0.0
          %654 = vmatprep.subr.mxu0 0.0
          %655 = vmatpush1.msra.mxu0 0.0
          %656 = vmatprep.subr.mxu0 0.0
          %657 = vmatpush1.msra.mxu0 0.0
          %658 = vmatprep.subr.mxu0 0.0
          %659 = vmatpush1.msra.mxu0 0.0
          %660 = vmatprep.subr.mxu0 0.0
          %661 = vmatpush1.msra.mxu0 0.0
          %662 = vmatprep.subr.mxu0 0.0
          %663 = vmatpush1.msra.mxu0 0.0
          %664 = vmatprep.mubr.f32.mxu0 0.0
          %665 = vmatmul.mubr.f32.gmra.mrb[0].mxu0 %v592
          %v666 = vpop.f32.mrb[0].mxu0
          %v667 = vadd.f32 0.0, %v666
          %v668 = vpop.f32.mrb[0].mxu0
          %669 = vmatprep.mubr.f32.mxu0 0.0
          %670 = vmatmul.mubr.f32.gmra.mrb[0].mxu0 %v595
          %v671 = vpop.f32.mrb[0].mxu0
          %v672 = vadd.f32 0.0, %v671
          %v673 = vpop.f32.mrb[0].mxu0
          %674 = vmatprep.mubr.f32.mxu0 0.0
          %675 = vmatmul.mubr.f32.gmra.mrb[0].mxu0 %v598
          %v676 = vpop.f32.mrb[0].mxu0
          %v677 = vadd.f32 0.0, %v676
          %v678 = vpop.f32.mrb[0].mxu0
          %679 = vdwg.mxu0
          %v680 = vadd.f32 %v569, %v667
          %v681 = vadd.f32 %v574, %v672
          %v682 = vadd.f32 %v579, %v677
          %v683 = vld [vmem:[%s584 + $0x1] sm:$0xff]
          %v684 = vld [vmem:[%s584 + $0x9] sm:$0xff]
          %v685 = vld [vmem:[%s584 + $0x11] sm:$0xf]
          %s686 = scalar_lea.vmem %s1, 48
          %v687 = vld [vmem:[%s686] sm:$0xff]
          %v688 = vld [vmem:[%s686 + $0x8] sm:$0xff]
          %v690 = vsel %vm403, %v683, 0
          %v693 = vsel %vm403, %v684, 0
          %v696 = vsel %vm403, %v685, 0
          %698 = vmatprep.subr.mxu0 0.0
          %699 = vmatpush1.msra.mxu0 %v687
          %700 = vmatprep.subr.mxu0 0.0
          %701 = vmatpush1.msra.mxu0 %v688
          %702 = vmatprep.subr.mxu0 0.0
          %703 = vmatpush1.msra.mxu0 0.0
          %704 = vmatprep.subr.mxu0 0.0
          %705 = vmatpush1.msra.mxu0 0.0
          %706 = vmatprep.subr.mxu0 0.0
          %707 = vmatpush1.msra.mxu0 0.0
          %708 = vmatprep.subr.mxu0 0.0
          %709 = vmatpush1.msra.mxu0 0.0
          %710 = vmatprep.subr.mxu0 0.0
          %711 = vmatpush1.msra.mxu0 0.0
          %712 = vmatprep.subr.mxu0 0.0
          %713 = vmatpush1.msra.mxu0 0.0
          %714 = vmatprep.subr.mxu0 0.0
          %715 = vmatpush1.msra.mxu0 0.0
          %716 = vmatprep.subr.mxu0 0.0
          %717 = vmatpush1.msra.mxu0 0.0
          %718 = vmatprep.subr.mxu0 0.0
          %719 = vmatpush1.msra.mxu0 0.0
          %720 = vmatprep.subr.mxu0 0.0
          %721 = vmatpush1.msra.mxu0 0.0
          %722 = vmatprep.subr.mxu0 0.0
          %723 = vmatpush1.msra.mxu0 0.0
          %724 = vmatprep.subr.mxu0 0.0
          %725 = vmatpush1.msra.mxu0 0.0
          %726 = vmatprep.subr.mxu0 0.0
          %727 = vmatpush1.msra.mxu0 0.0
          %728 = vmatprep.subr.mxu0 0.0
          %729 = vmatpush1.msra.mxu0 0.0
          %730 = vmatprep.subr.mxu0 0.0
          %731 = vmatpush1.msra.mxu0 0.0
          %732 = vmatprep.subr.mxu0 0.0
          %733 = vmatpush1.msra.mxu0 0.0
          %734 = vmatprep.subr.mxu0 0.0
          %735 = vmatpush1.msra.mxu0 0.0
          %736 = vmatprep.subr.mxu0 0.0
          %737 = vmatpush1.msra.mxu0 0.0
          %738 = vmatprep.subr.mxu0 0.0
          %739 = vmatpush1.msra.mxu0 0.0
          %740 = vmatprep.subr.mxu0 0.0
          %741 = vmatpush1.msra.mxu0 0.0
          %742 = vmatprep.subr.mxu0 0.0
          %743 = vmatpush1.msra.mxu0 0.0
          %744 = vmatprep.subr.mxu0 0.0
          %745 = vmatpush1.msra.mxu0 0.0
          %746 = vmatprep.subr.mxu0 0.0
          %747 = vmatpush1.msra.mxu0 0.0
          %748 = vmatprep.subr.mxu0 0.0
          %749 = vmatpush1.msra.mxu0 0.0
          %750 = vmatprep.subr.mxu0 0.0
          %751 = vmatpush1.msra.mxu0 0.0
          %752 = vmatprep.subr.mxu0 0.0
          %753 = vmatpush1.msra.mxu0 0.0
          %754 = vmatprep.subr.mxu0 0.0
          %755 = vmatpush1.msra.mxu0 0.0
          %756 = vmatprep.subr.mxu0 0.0
          %757 = vmatpush1.msra.mxu0 0.0
          %758 = vmatprep.subr.mxu0 0.0
          %759 = vmatpush1.msra.mxu0 0.0
          %760 = vmatprep.subr.mxu0 0.0
          %761 = vmatpush1.msra.mxu0 0.0
          %762 = vmatprep.mubr.f32.mxu0 0.0
          %763 = vmatmul.mubr.f32.gmra.mrb[0].mxu0 %v690
          %v764 = vpop.f32.mrb[0].mxu0
          %v765 = vadd.f32 0.0, %v764
          %v766 = vpop.f32.mrb[0].mxu0
          %767 = vmatprep.mubr.f32.mxu0 0.0
          %768 = vmatmul.mubr.f32.gmra.mrb[0].mxu0 %v693
          %v769 = vpop.f32.mrb[0].mxu0
          %v770 = vadd.f32 0.0, %v769
          %v771 = vpop.f32.mrb[0].mxu0
          %772 = vmatprep.mubr.f32.mxu0 0.0
          %773 = vmatmul.mubr.f32.gmra.mrb[0].mxu0 %v696
          %v774 = vpop.f32.mrb[0].mxu0
          %v775 = vadd.f32 0.0, %v774
          %v776 = vpop.f32.mrb[0].mxu0
          %777 = vdwg.mxu0
          %v778 = vadd.f32 %v680, %v765
          %v779 = vadd.f32 %v681, %v770
          %v780 = vadd.f32 %v682, %v775
          %v781 = vld [vmem:[%s2] sm:$0x1]
          %v783 = vlaneseq
          %v784 = vshrl.u32 %v783, 7
          %v785 = vsub.s32 0, %v784
          %v786 = vrot.slane %v781, %v785
          %v788 = vadd.f32 %v778, %v786
          %v789 = vadd.f32 %v779, %v786
          %v790 = vadd.f32 %v780, %v786
          %v791 = vmax.f32 %v788, 0.0
          %v792 = vmax.f32 %v789, 0.0
          %v793 = vmax.f32 %v790, 0.0
          %s794 = scalar_lea.vmem [#allocation2], %s390
          %vm795 = vcmask 261120
          %796 = vst.msk [vmem:[%s794] sm:$0xff] %vm795, %v791
          %797 = vst.msk [vmem:[%s794 + $0x8] sm:$0xff] %vm795, %v792
          %vm798 = vcmask 257024
          %799 = vst.msk [vmem:[%s794 + $0x10] sm:$0xf] %vm798, %v793
        $region69: #{dqn_forward.1} parent=63 // loop_footer
          %s389 = sadd.s32 1, %s385
        $region70: #{dqn_forward.1} parent=63 // loop_footer_branch
          %384 = sbr.rel target = $region66
        $region71: #{dqn_forward.1} parent=63 // loop_exit
          _
        loop: start=0, step=1, limit=17
        $region72: #{dqn_forward.1} parent=63 // loop_pre_header
          _
        $region73: #{dqn_forward.1} parent=63 // loop_header
          %s801 = sphi 0, %s805
          %p802 = scmp.ge.s32.totalorder %s801, 17
        $region74: #{dqn_forward.1} parent=63 // loop_header_branch
          %804 = sbr.rel (%p802) target = $region78
        $region75: #{dqn_forward.1} parent=63 // loop_body
          %s806 = smul.u32 %s801, 24
          %s807 = scalar_lea.vmem [#allocation2], %s806
          %v808 = vld [vmem:[%s807] sm:$0xff]
          %v809 = vld [vmem:[%s807 + $0x8] sm:$0xff]
          %v810 = vld [vmem:[%s807 + $0x10] sm:$0x1]
          %v811 = vld [vmem:[%s3] sm:$0xff]
          %v812 = vld [vmem:[%s3 + $0x8] sm:$0xff]
          %v813 = vld [vmem:[%s3 + $0x10] sm:$0xff]
          %v814 = vld [vmem:[%s3 + $0x18] sm:$0xff]
          %v815 = vld [vmem:[%s807 + $0x1] sm:$0xff]
          %v816 = vld [vmem:[%s807 + $0x9] sm:$0xff]
          %v817 = vld [vmem:[%s807 + $0x11] sm:$0x1]
          %s818 = scalar_lea.vmem %s3, 32
          %v819 = vld [vmem:[%s818] sm:$0xff]
          %v820 = vld [vmem:[%s818 + $0x8] sm:$0xff]
          %v821 = vld [vmem:[%s818 + $0x10] sm:$0xff]
          %v822 = vld [vmem:[%s818 + $0x18] sm:$0xff]
          %vm823 = vcmask 261120
          %v825 = vsel %vm823, %v815, 0
          %v828 = vsel %vm823, %v816, 0
          %v831 = vsel %vm823, %v817, 0
          %833 = vmatprep.subr.mxu0 0.0
          %834 = vmatpush1.msra.mxu0 %v819
          %835 = vmatprep.subr.mxu0 0.0
          %836 = vmatpush1.msra.mxu0 %v820
          %837 = vmatprep.subr.mxu0 0.0
          %838 = vmatpush1.msra.mxu0 %v821
          %839 = vmatprep.subr.mxu0 0.0
          %840 = vmatpush1.msra.mxu0 %v822
          %841 = vmatprep.subr.mxu0 0.0
          %842 = vmatpush1.msra.mxu0 0.0
          %843 = vmatprep.subr.mxu0 0.0
          %844 = vmatpush1.msra.mxu0 0.0
          %845 = vmatprep.subr.mxu0 0.0
          %846 = vmatpush1.msra.mxu0 0.0
          %847 = vmatprep.subr.mxu0 0.0
          %848 = vmatpush1.msra.mxu0 0.0
          %849 = vmatprep.subr.mxu0 0.0
          %850 = vmatpush1.msra.mxu0 0.0
          %851 = vmatprep.subr.mxu0 0.0
          %852 = vmatpush1.msra.mxu0 0.0
          %853 = vmatprep.subr.mxu0 0.0
          %854 = vmatpush1.msra.mxu0 0.0
          %855 = vmatprep.subr.mxu0 0.0
          %856 = vmatpush1.msra.mxu0 0.0
          %857 = vmatprep.subr.mxu0 0.0
          %858 = vmatpush1.msra.mxu0 0.0
          %859 = vmatprep.subr.mxu0 0.0
          %860 = vmatpush1.msra.mxu0 0.0
          %861 = vmatprep.subr.mxu0 0.0
          %862 = vmatpush1.msra.mxu0 0.0
          %863 = vmatprep.subr.mxu0 0.0
          %864 = vmatpush1.msra.mxu0 0.0
          %865 = vmatprep.subr.mxu0 0.0
          %866 = vmatpush1.msra.mxu0 0.0
          %867 = vmatprep.subr.mxu0 0.0
          %868 = vmatpush1.msra.mxu0 0.0
          %869 = vmatprep.subr.mxu0 0.0
          %870 = vmatpush1.msra.mxu0 0.0
          %871 = vmatprep.subr.mxu0 0.0
          %872 = vmatpush1.msra.mxu0 0.0
          %873 = vmatprep.subr.mxu0 0.0
          %874 = vmatpush1.msra.mxu0 0.0
          %875 = vmatprep.subr.mxu0 0.0
          %876 = vmatpush1.msra.mxu0 0.0
          %877 = vmatprep.subr.mxu0 0.0
          %878 = vmatpush1.msra.mxu0 0.0
          %879 = vmatprep.subr.mxu0 0.0
          %880 = vmatpush1.msra.mxu0 0.0
          %881 = vmatprep.subr.mxu0 0.0
          %882 = vmatpush1.msra.mxu0 0.0
          %883 = vmatprep.subr.mxu0 0.0
          %884 = vmatpush1.msra.mxu0 0.0
          %885 = vmatprep.subr.mxu0 0.0
          %886 = vmatpush1.msra.mxu0 0.0
          %887 = vmatprep.subr.mxu0 0.0
          %888 = vmatpush1.msra.mxu0 0.0
          %889 = vmatprep.subr.mxu0 0.0
          %890 = vmatpush1.msra.mxu0 0.0
          %891 = vmatprep.subr.mxu0 0.0
          %892 = vmatpush1.msra.mxu0 0.0
          %893 = vmatprep.subr.mxu0 0.0
          %894 = vmatpush1.msra.mxu0 0.0
          %895 = vmatprep.subr.mxu0 0.0
          %896 = vmatpush1.msra.mxu0 0.0
          %897 = vmatprep.mubr.f32.mxu0 0.0
          %898 = vmatmul.mubr.f32.gmra.mrb[0].mxu0 %v825
          %v899 = vpop.f32.mrb[0].mxu0
          %v900 = vadd.f32 0.0, %v899
          %v901 = vpop.f32.mrb[0].mxu0
          %902 = vmatprep.mubr.f32.mxu0 0.0
          %903 = vmatmul.mubr.f32.gmra.mrb[0].mxu0 %v828
          %v904 = vpop.f32.mrb[0].mxu0
          %v905 = vadd.f32 0.0, %v904
          %v906 = vpop.f32.mrb[0].mxu0
          %907 = vmatprep.mubr.f32.mxu0 0.0
          %908 = vmatmul.mubr.f32.gmra.mrb[0].mxu0 %v831
          %v909 = vpop.f32.mrb[0].mxu0
          %v910 = vadd.f32 0.0, %v909
          %v911 = vpop.f32.mrb[0].mxu0
          %912 = vdwg.mxu0
          %v914 = vsel %vm823, %v808, 0
          %v917 = vsel %vm823, %v809, 0
          %v920 = vsel %vm823, %v810, 0
          %922 = vmatprep.subr.mxu0 0.0
          %923 = vmatpush1.msra.mxu0 %v811
          %924 = vmatprep.subr.mxu0 0.0
          %925 = vmatpush1.msra.mxu0 %v812
          %926 = vmatprep.subr.mxu0 0.0
          %927 = vmatpush1.msra.mxu0 %v813
          %928 = vmatprep.subr.mxu0 0.0
          %929 = vmatpush1.msra.mxu0 %v814
          %930 = vmatprep.subr.mxu0 0.0
          %931 = vmatpush1.msra.mxu0 0.0
          %932 = vmatprep.subr.mxu0 0.0
          %933 = vmatpush1.msra.mxu0 0.0
          %934 = vmatprep.subr.mxu0 0.0
          %935 = vmatpush1.msra.mxu0 0.0
          %936 = vmatprep.subr.mxu0 0.0
          %937 = vmatpush1.msra.mxu0 0.0
          %938 = vmatprep.subr.mxu0 0.0
          %939 = vmatpush1.msra.mxu0 0.0
          %940 = vmatprep.subr.mxu0 0.0
          %941 = vmatpush1.msra.mxu0 0.0
          %942 = vmatprep.subr.mxu0 0.0
          %943 = vmatpush1.msra.mxu0 0.0
          %944 = vmatprep.subr.mxu0 0.0
          %945 = vmatpush1.msra.mxu0 0.0
          %946 = vmatprep.subr.mxu0 0.0
          %947 = vmatpush1.msra.mxu0 0.0
          %948 = vmatprep.subr.mxu0 0.0
          %949 = vmatpush1.msra.mxu0 0.0
          %950 = vmatprep.subr.mxu0 0.0
          %951 = vmatpush1.msra.mxu0 0.0
          %952 = vmatprep.subr.mxu0 0.0
          %953 = vmatpush1.msra.mxu0 0.0
          %954 = vmatprep.subr.mxu0 0.0
          %955 = vmatpush1.msra.mxu0 0.0
          %956 = vmatprep.subr.mxu0 0.0
          %957 = vmatpush1.msra.mxu0 0.0
          %958 = vmatprep.subr.mxu0 0.0
          %959 = vmatpush1.msra.mxu0 0.0
          %960 = vmatprep.subr.mxu0 0.0
          %961 = vmatpush1.msra.mxu0 0.0
          %962 = vmatprep.subr.mxu0 0.0
          %963 = vmatpush1.msra.mxu0 0.0
          %964 = vmatprep.subr.mxu0 0.0
          %965 = vmatpush1.msra.mxu0 0.0
          %966 = vmatprep.subr.mxu0 0.0
          %967 = vmatpush1.msra.mxu0 0.0
          %968 = vmatprep.subr.mxu0 0.0
          %969 = vmatpush1.msra.mxu0 0.0
          %970 = vmatprep.subr.mxu0 0.0
          %971 = vmatpush1.msra.mxu0 0.0
          %972 = vmatprep.subr.mxu0 0.0
          %973 = vmatpush1.msra.mxu0 0.0
          %974 = vmatprep.subr.mxu0 0.0
          %975 = vmatpush1.msra.mxu0 0.0
          %976 = vmatprep.subr.mxu0 0.0
          %977 = vmatpush1.msra.mxu0 0.0
          %978 = vmatprep.subr.mxu0 0.0
          %979 = vmatpush1.msra.mxu0 0.0
          %980 = vmatprep.subr.mxu0 0.0
          %981 = vmatpush1.msra.mxu0 0.0
          %982 = vmatprep.subr.mxu0 0.0
          %983 = vmatpush1.msra.mxu0 0.0
          %984 = vmatprep.subr.mxu0 0.0
          %985 = vmatpush1.msra.mxu0 0.0
          %986 = vmatprep.mubr.f32.mxu0 0.0
          %987 = vmatmul.mubr.f32.gmra.mrb[0].mxu0 %v914
          %v988 = vpop.f32.mrb[0].mxu0
          %v989 = vadd.f32 %v900, %v988
          %v990 = vpop.f32.mrb[0].mxu0
          %991 = vmatprep.mubr.f32.mxu0 0.0
          %992 = vmatmul.mubr.f32.gmra.mrb[0].mxu0 %v917
          %v993 = vpop.f32.mrb[0].mxu0
          %v994 = vadd.f32 %v905, %v993
          %v995 = vpop.f32.mrb[0].mxu0
          %996 = vmatprep.mubr.f32.mxu0 0.0
          %997 = vmatmul.mubr.f32.gmra.mrb[0].mxu0 %v920
          %v998 = vpop.f32.mrb[0].mxu0
          %v999 = vadd.f32 %v910, %v998
          %v1000 = vpop.f32.mrb[0].mxu0
          %1001 = vdwg.mxu0
          %v1002 = vld [vmem:[%s807 + $0x2] sm:$0xff]
          %v1003 = vld [vmem:[%s807 + $0xa] sm:$0xff]
          %v1004 = vld [vmem:[%s807 + $0x12] sm:$0x1]
          %s1005 = scalar_lea.vmem %s3, 64
          %v1006 = vld [vmem:[%s1005] sm:$0xff]
          %v1007 = vld [vmem:[%s1005 + $0x8] sm:$0xff]
          %v1008 = vld [vmem:[%s1005 + $0x10] sm:$0xff]
          %v1009 = vld [vmem:[%s1005 + $0x18] sm:$0xff]
          %v1011 = vsel %vm823, %v1002, 0
          %v1014 = vsel %vm823, %v1003, 0
          %v1017 = vsel %vm823, %v1004, 0
          %1019 = vmatprep.subr.mxu0 0.0
          %1020 = vmatpush1.msra.mxu0 %v1006
          %1021 = vmatprep.subr.mxu0 0.0
          %1022 = vmatpush1.msra.mxu0 %v1007
          %1023 = vmatprep.subr.mxu0 0.0
          %1024 = vmatpush1.msra.mxu0 %v1008
          %1025 = vmatprep.subr.mxu0 0.0
          %1026 = vmatpush1.msra.mxu0 %v1009
          %1027 = vmatprep.subr.mxu0 0.0
          %1028 = vmatpush1.msra.mxu0 0.0
          %1029 = vmatprep.subr.mxu0 0.0
          %1030 = vmatpush1.msra.mxu0 0.0
          %1031 = vmatprep.subr.mxu0 0.0
          %1032 = vmatpush1.msra.mxu0 0.0
          %1033 = vmatprep.subr.mxu0 0.0
          %1034 = vmatpush1.msra.mxu0 0.0
          %1035 = vmatprep.subr.mxu0 0.0
          %1036 = vmatpush1.msra.mxu0 0.0
          %1037 = vmatprep.subr.mxu0 0.0
          %1038 = vmatpush1.msra.mxu0 0.0
          %1039 = vmatprep.subr.mxu0 0.0
          %1040 = vmatpush1.msra.mxu0 0.0
          %1041 = vmatprep.subr.mxu0 0.0
          %1042 = vmatpush1.msra.mxu0 0.0
          %1043 = vmatprep.subr.mxu0 0.0
          %1044 = vmatpush1.msra.mxu0 0.0
          %1045 = vmatprep.subr.mxu0 0.0
          %1046 = vmatpush1.msra.mxu0 0.0
          %1047 = vmatprep.subr.mxu0 0.0
          %1048 = vmatpush1.msra.mxu0 0.0
          %1049 = vmatprep.subr.mxu0 0.0
          %1050 = vmatpush1.msra.mxu0 0.0
          %1051 = vmatprep.subr.mxu0 0.0
          %1052 = vmatpush1.msra.mxu0 0.0
          %1053 = vmatprep.subr.mxu0 0.0
          %1054 = vmatpush1.msra.mxu0 0.0
          %1055 = vmatprep.subr.mxu0 0.0
          %1056 = vmatpush1.msra.mxu0 0.0
          %1057 = vmatprep.subr.mxu0 0.0
          %1058 = vmatpush1.msra.mxu0 0.0
          %1059 = vmatprep.subr.mxu0 0.0
          %1060 = vmatpush1.msra.mxu0 0.0
          %1061 = vmatprep.subr.mxu0 0.0
          %1062 = vmatpush1.msra.mxu0 0.0
          %1063 = vmatprep.subr.mxu0 0.0
          %1064 = vmatpush1.msra.mxu0 0.0
          %1065 = vmatprep.subr.mxu0 0.0
          %1066 = vmatpush1.msra.mxu0 0.0
          %1067 = vmatprep.subr.mxu0 0.0
          %1068 = vmatpush1.msra.mxu0 0.0
          %1069 = vmatprep.subr.mxu0 0.0
          %1070 = vmatpush1.msra.mxu0 0.0
          %1071 = vmatprep.subr.mxu0 0.0
          %1072 = vmatpush1.msra.mxu0 0.0
          %1073 = vmatprep.subr.mxu0 0.0
          %1074 = vmatpush1.msra.mxu0 0.0
          %1075 = vmatprep.subr.mxu0 0.0
          %1076 = vmatpush1.msra.mxu0 0.0
          %1077 = vmatprep.subr.mxu0 0.0
          %1078 = vmatpush1.msra.mxu0 0.0
          %1079 = vmatprep.subr.mxu0 0.0
          %1080 = vmatpush1.msra.mxu0 0.0
          %1081 = vmatprep.subr.mxu0 0.0
          %1082 = vmatpush1.msra.mxu0 0.0
          %1083 = vmatprep.mubr.f32.mxu0 0.0
          %1084 = vmatmul.mubr.f32.gmra.mrb[0].mxu0 %v1011
          %v1085 = vpop.f32.mrb[0].mxu0
          %v1086 = vadd.f32 0.0, %v1085
          %v1087 = vpop.f32.mrb[0].mxu0
          %1088 = vmatprep.mubr.f32.mxu0 0.0
          %1089 = vmatmul.mubr.f32.gmra.mrb[0].mxu0 %v1014
          %v1090 = vpop.f32.mrb[0].mxu0
          %v1091 = vadd.f32 0.0, %v1090
          %v1092 = vpop.f32.mrb[0].mxu0
          %1093 = vmatprep.mubr.f32.mxu0 0.0
          %1094 = vmatmul.mubr.f32.gmra.mrb[0].mxu0 %v1017
          %v1095 = vpop.f32.mrb[0].mxu0
          %v1096 = vadd.f32 0.0, %v1095
          %v1097 = vpop.f32.mrb[0].mxu0
          %1098 = vdwg.mxu0
          %v1099 = vadd.f32 %v989, %v1086
          %v1100 = vadd.f32 %v994, %v1091
          %v1101 = vadd.f32 %v999, %v1096
          %v1102 = vld [vmem:[%s807 + $0x3] sm:$0xff]
          %v1103 = vld [vmem:[%s807 + $0xb] sm:$0xff]
          %v1104 = vld [vmem:[%s807 + $0x13] sm:$0x1]
          %s1105 = scalar_lea.vmem %s3, 96
          %v1106 = vld [vmem:[%s1105] sm:$0xff]
          %v1107 = vld [vmem:[%s1105 + $0x8] sm:$0xff]
          %v1108 = vld [vmem:[%s1105 + $0x10] sm:$0xff]
          %v1109 = vld [vmem:[%s1105 + $0x18] sm:$0xff]
          %v1111 = vsel %vm823, %v1102, 0
          %v1114 = vsel %vm823, %v1103, 0
          %v1117 = vsel %vm823, %v1104, 0
          %1119 = vmatprep.subr.mxu0 0.0
          %1120 = vmatpush1.msra.mxu0 %v1106
          %1121 = vmatprep.subr.mxu0 0.0
          %1122 = vmatpush1.msra.mxu0 %v1107
          %1123 = vmatprep.subr.mxu0 0.0
          %1124 = vmatpush1.msra.mxu0 %v1108
          %1125 = vmatprep.subr.mxu0 0.0
          %1126 = vmatpush1.msra.mxu0 %v1109
          %1127 = vmatprep.subr.mxu0 0.0
          %1128 = vmatpush1.msra.mxu0 0.0
          %1129 = vmatprep.subr.mxu0 0.0
          %1130 = vmatpush1.msra.mxu0 0.0
          %1131 = vmatprep.subr.mxu0 0.0
          %1132 = vmatpush1.msra.mxu0 0.0
          %1133 = vmatprep.subr.mxu0 0.0
          %1134 = vmatpush1.msra.mxu0 0.0
          %1135 = vmatprep.subr.mxu0 0.0
          %1136 = vmatpush1.msra.mxu0 0.0
          %1137 = vmatprep.subr.mxu0 0.0
          %1138 = vmatpush1.msra.mxu0 0.0
          %1139 = vmatprep.subr.mxu0 0.0
          %1140 = vmatpush1.msra.mxu0 0.0
          %1141 = vmatprep.subr.mxu0 0.0
          %1142 = vmatpush1.msra.mxu0 0.0
          %1143 = vmatprep.subr.mxu0 0.0
          %1144 = vmatpush1.msra.mxu0 0.0
          %1145 = vmatprep.subr.mxu0 0.0
          %1146 = vmatpush1.msra.mxu0 0.0
          %1147 = vmatprep.subr.mxu0 0.0
          %1148 = vmatpush1.msra.mxu0 0.0
          %1149 = vmatprep.subr.mxu0 0.0
          %1150 = vmatpush1.msra.mxu0 0.0
          %1151 = vmatprep.subr.mxu0 0.0
          %1152 = vmatpush1.msra.mxu0 0.0
          %1153 = vmatprep.subr.mxu0 0.0
          %1154 = vmatpush1.msra.mxu0 0.0
          %1155 = vmatprep.subr.mxu0 0.0
          %1156 = vmatpush1.msra.mxu0 0.0
          %1157 = vmatprep.subr.mxu0 0.0
          %1158 = vmatpush1.msra.mxu0 0.0
          %1159 = vmatprep.subr.mxu0 0.0
          %1160 = vmatpush1.msra.mxu0 0.0
          %1161 = vmatprep.subr.mxu0 0.0
          %1162 = vmatpush1.msra.mxu0 0.0
          %1163 = vmatprep.subr.mxu0 0.0
          %1164 = vmatpush1.msra.mxu0 0.0
          %1165 = vmatprep.subr.mxu0 0.0
          %1166 = vmatpush1.msra.mxu0 0.0
          %1167 = vmatprep.subr.mxu0 0.0
          %1168 = vmatpush1.msra.mxu0 0.0
          %1169 = vmatprep.subr.mxu0 0.0
          %1170 = vmatpush1.msra.mxu0 0.0
          %1171 = vmatprep.subr.mxu0 0.0
          %1172 = vmatpush1.msra.mxu0 0.0
          %1173 = vmatprep.subr.mxu0 0.0
          %1174 = vmatpush1.msra.mxu0 0.0
          %1175 = vmatprep.subr.mxu0 0.0
          %1176 = vmatpush1.msra.mxu0 0.0
          %1177 = vmatprep.subr.mxu0 0.0
          %1178 = vmatpush1.msra.mxu0 0.0
          %1179 = vmatprep.subr.mxu0 0.0
          %1180 = vmatpush1.msra.mxu0 0.0
          %1181 = vmatprep.subr.mxu0 0.0
          %1182 = vmatpush1.msra.mxu0 0.0
          %1183 = vmatprep.mubr.f32.mxu0 0.0
          %1184 = vmatmul.mubr.f32.gmra.mrb[0].mxu0 %v1111
          %v1185 = vpop.f32.mrb[0].mxu0
          %v1186 = vadd.f32 0.0, %v1185
          %v1187 = vpop.f32.mrb[0].mxu0
          %1188 = vmatprep.mubr.f32.mxu0 0.0
          %1189 = vmatmul.mubr.f32.gmra.mrb[0].mxu0 %v1114
          %v1190 = vpop.f32.mrb[0].mxu0
          %v1191 = vadd.f32 0.0, %v1190
          %v1192 = vpop.f32.mrb[0].mxu0
          %1193 = vmatprep.mubr.f32.mxu0 0.0
          %1194 = vmatmul.mubr.f32.gmra.mrb[0].mxu0 %v1117
          %v1195 = vpop.f32.mrb[0].mxu0
          %v1196 = vadd.f32 0.0, %v1195
          %v1197 = vpop.f32.mrb[0].mxu0
          %1198 = vdwg.mxu0
          %v1199 = vadd.f32 %v1099, %v1186
          %v1200 = vadd.f32 %v1100, %v1191
          %v1201 = vadd.f32 %v1101, %v1196
          %s1202 = sadd.s32 %s801, 1
          %s1203 = smul.u32 %s1202, 24
          %s1204 = scalar_lea.vmem [#allocation2], %s1203
          %v1205 = vld [vmem:[%s1204] sm:$0xff]
          %v1206 = vld [vmem:[%s1204 + $0x8] sm:$0xff]
          %v1207 = vld [vmem:[%s1204 + $0x10] sm:$0x1]
          %s1208 = scalar_lea.vmem %s3, 128
          %v1209 = vld [vmem:[%s1208] sm:$0xff]
          %v1210 = vld [vmem:[%s1208 + $0x8] sm:$0xff]
          %v1211 = vld [vmem:[%s1208 + $0x10] sm:$0xff]
          %v1212 = vld [vmem:[%s1208 + $0x18] sm:$0xff]
          %v1214 = vsel %vm823, %v1205, 0
          %v1217 = vsel %vm823, %v1206, 0
          %v1220 = vsel %vm823, %v1207, 0
          %1222 = vmatprep.subr.mxu0 0.0
          %1223 = vmatpush1.msra.mxu0 %v1209
          %1224 = vmatprep.subr.mxu0 0.0
          %1225 = vmatpush1.msra.mxu0 %v1210
          %1226 = vmatprep.subr.mxu0 0.0
          %1227 = vmatpush1.msra.mxu0 %v1211
          %1228 = vmatprep.subr.mxu0 0.0
          %1229 = vmatpush1.msra.mxu0 %v1212
          %1230 = vmatprep.subr.mxu0 0.0
          %1231 = vmatpush1.msra.mxu0 0.0
          %1232 = vmatprep.subr.mxu0 0.0
          %1233 = vmatpush1.msra.mxu0 0.0
          %1234 = vmatprep.subr.mxu0 0.0
          %1235 = vmatpush1.msra.mxu0 0.0
          %1236 = vmatprep.subr.mxu0 0.0
          %1237 = vmatpush1.msra.mxu0 0.0
          %1238 = vmatprep.subr.mxu0 0.0
          %1239 = vmatpush1.msra.mxu0 0.0
          %1240 = vmatprep.subr.mxu0 0.0
          %1241 = vmatpush1.msra.mxu0 0.0
          %1242 = vmatprep.subr.mxu0 0.0
          %1243 = vmatpush1.msra.mxu0 0.0
          %1244 = vmatprep.subr.mxu0 0.0
          %1245 = vmatpush1.msra.mxu0 0.0
          %1246 = vmatprep.subr.mxu0 0.0
          %1247 = vmatpush1.msra.mxu0 0.0
          %1248 = vmatprep.subr.mxu0 0.0
          %1249 = vmatpush1.msra.mxu0 0.0
          %1250 = vmatprep.subr.mxu0 0.0
          %1251 = vmatpush1.msra.mxu0 0.0
          %1252 = vmatprep.subr.mxu0 0.0
          %1253 = vmatpush1.msra.mxu0 0.0
          %1254 = vmatprep.subr.mxu0 0.0
          %1255 = vmatpush1.msra.mxu0 0.0
          %1256 = vmatprep.subr.mxu0 0.0
          %1257 = vmatpush1.msra.mxu0 0.0
          %1258 = vmatprep.subr.mxu0 0.0
          %1259 = vmatpush1.msra.mxu0 0.0
          %1260 = vmatprep.subr.mxu0 0.0
          %1261 = vmatpush1.msra.mxu0 0.0
          %1262 = vmatprep.subr.mxu0 0.0
          %1263 = vmatpush1.msra.mxu0 0.0
          %1264 = vmatprep.subr.mxu0 0.0
          %1265 = vmatpush1.msra.mxu0 0.0
          %1266 = vmatprep.subr.mxu0 0.0
          %1267 = vmatpush1.msra.mxu0 0.0
          %1268 = vmatprep.subr.mxu0 0.0
          %1269 = vmatpush1.msra.mxu0 0.0
          %1270 = vmatprep.subr.mxu0 0.0
          %1271 = vmatpush1.msra.mxu0 0.0
          %1272 = vmatprep.subr.mxu0 0.0
          %1273 = vmatpush1.msra.mxu0 0.0
          %1274 = vmatprep.subr.mxu0 0.0
          %1275 = vmatpush1.msra.mxu0 0.0
          %1276 = vmatprep.subr.mxu0 0.0
          %1277 = vmatpush1.msra.mxu0 0.0
          %1278 = vmatprep.subr.mxu0 0.0
          %1279 = vmatpush1.msra.mxu0 0.0
          %1280 = vmatprep.subr.mxu0 0.0
          %1281 = vmatpush1.msra.mxu0 0.0
          %1282 = vmatprep.subr.mxu0 0.0
          %1283 = vmatpush1.msra.mxu0 0.0
          %1284 = vmatprep.subr.mxu0 0.0
          %1285 = vmatpush1.msra.mxu0 0.0
          %1286 = vmatprep.mubr.f32.mxu0 0.0
          %1287 = vmatmul.mubr.f32.gmra.mrb[0].mxu0 %v1214
          %v1288 = vpop.f32.mrb[0].mxu0
          %v1289 = vadd.f32 0.0, %v1288
          %v1290 = vpop.f32.mrb[0].mxu0
          %1291 = vmatprep.mubr.f32.mxu0 0.0
          %1292 = vmatmul.mubr.f32.gmra.mrb[0].mxu0 %v1217
          %v1293 = vpop.f32.mrb[0].mxu0
          %v1294 = vadd.f32 0.0, %v1293
          %v1295 = vpop.f32.mrb[0].mxu0
          %1296 = vmatprep.mubr.f32.mxu0 0.0
          %1297 = vmatmul.mubr.f32.gmra.mrb[0].mxu0 %v1220
          %v1298 = vpop.f32.mrb[0].mxu0
          %v1299 = vadd.f32 0.0, %v1298
          %v1300 = vpop.f32.mrb[0].mxu0
          %1301 = vdwg.mxu0
          %v1302 = vadd.f32 %v1199, %v1289
          %v1303 = vadd.f32 %v1200, %v1294
          %v1304 = vadd.f32 %v1201, %v1299
          %v1305 = vld [vmem:[%s1204 + $0x1] sm:$0xff]
          %v1306 = vld [vmem:[%s1204 + $0x9] sm:$0xff]
          %v1307 = vld [vmem:[%s1204 + $0x11] sm:$0x1]
          %s1308 = scalar_lea.vmem %s3, 160
          %v1309 = vld [vmem:[%s1308] sm:$0xff]
          %v1310 = vld [vmem:[%s1308 + $0x8] sm:$0xff]
          %v1311 = vld [vmem:[%s1308 + $0x10] sm:$0xff]
          %v1312 = vld [vmem:[%s1308 + $0x18] sm:$0xff]
          %v1314 = vsel %vm823, %v1305, 0
          %v1317 = vsel %vm823, %v1306, 0
          %v1320 = vsel %vm823, %v1307, 0
          %1322 = vmatprep.subr.mxu0 0.0
          %1323 = vmatpush1.msra.mxu0 %v1309
          %1324 = vmatprep.subr.mxu0 0.0
          %1325 = vmatpush1.msra.mxu0 %v1310
          %1326 = vmatprep.subr.mxu0 0.0
          %1327 = vmatpush1.msra.mxu0 %v1311
          %1328 = vmatprep.subr.mxu0 0.0
          %1329 = vmatpush1.msra.mxu0 %v1312
          %1330 = vmatprep.subr.mxu0 0.0
          %1331 = vmatpush1.msra.mxu0 0.0
          %1332 = vmatprep.subr.mxu0 0.0
          %1333 = vmatpush1.msra.mxu0 0.0
          %1334 = vmatprep.subr.mxu0 0.0
          %1335 = vmatpush1.msra.mxu0 0.0
          %1336 = vmatprep.subr.mxu0 0.0
          %1337 = vmatpush1.msra.mxu0 0.0
          %1338 = vmatprep.subr.mxu0 0.0
          %1339 = vmatpush1.msra.mxu0 0.0
          %1340 = vmatprep.subr.mxu0 0.0
          %1341 = vmatpush1.msra.mxu0 0.0
          %1342 = vmatprep.subr.mxu0 0.0
          %1343 = vmatpush1.msra.mxu0 0.0
          %1344 = vmatprep.subr.mxu0 0.0
          %1345 = vmatpush1.msra.mxu0 0.0
          %1346 = vmatprep.subr.mxu0 0.0
          %1347 = vmatpush1.msra.mxu0 0.0
          %1348 = vmatprep.subr.mxu0 0.0
          %1349 = vmatpush1.msra.mxu0 0.0
          %1350 = vmatprep.subr.mxu0 0.0
          %1351 = vmatpush1.msra.mxu0 0.0
          %1352 = vmatprep.subr.mxu0 0.0
          %1353 = vmatpush1.msra.mxu0 0.0
          %1354 = vmatprep.subr.mxu0 0.0
          %1355 = vmatpush1.msra.mxu0 0.0
          %1356 = vmatprep.subr.mxu0 0.0
          %1357 = vmatpush1.msra.mxu0 0.0
          %1358 = vmatprep.subr.mxu0 0.0
          %1359 = vmatpush1.msra.mxu0 0.0
          %1360 = vmatprep.subr.mxu0 0.0
          %1361 = vmatpush1.msra.mxu0 0.0
          %1362 = vmatprep.subr.mxu0 0.0
          %1363 = vmatpush1.msra.mxu0 0.0
          %1364 = vmatprep.subr.mxu0 0.0
          %1365 = vmatpush1.msra.mxu0 0.0
          %1366 = vmatprep.subr.mxu0 0.0
          %1367 = vmatpush1.msra.mxu0 0.0
          %1368 = vmatprep.subr.mxu0 0.0
          %1369 = vmatpush1.msra.mxu0 0.0
          %1370 = vmatprep.subr.mxu0 0.0
          %1371 = vmatpush1.msra.mxu0 0.0
          %1372 = vmatprep.subr.mxu0 0.0
          %1373 = vmatpush1.msra.mxu0 0.0
          %1374 = vmatprep.subr.mxu0 0.0
          %1375 = vmatpush1.msra.mxu0 0.0
          %1376 = vmatprep.subr.mxu0 0.0
          %1377 = vmatpush1.msra.mxu0 0.0
          %1378 = vmatprep.subr.mxu0 0.0
          %1379 = vmatpush1.msra.mxu0 0.0
          %1380 = vmatprep.subr.mxu0 0.0
          %1381 = vmatpush1.msra.mxu0 0.0
          %1382 = vmatprep.subr.mxu0 0.0
          %1383 = vmatpush1.msra.mxu0 0.0
          %1384 = vmatprep.subr.mxu0 0.0
          %1385 = vmatpush1.msra.mxu0 0.0
          %1386 = vmatprep.mubr.f32.mxu0 0.0
          %1387 = vmatmul.mubr.f32.gmra.mrb[0].mxu0 %v1314
          %v1388 = vpop.f32.mrb[0].mxu0
          %v1389 = vadd.f32 0.0, %v1388
          %v1390 = vpop.f32.mrb[0].mxu0
          %1391 = vmatprep.mubr.f32.mxu0 0.0
          %1392 = vmatmul.mubr.f32.gmra.mrb[0].mxu0 %v1317
          %v1393 = vpop.f32.mrb[0].mxu0
          %v1394 = vadd.f32 0.0, %v1393
          %v1395 = vpop.f32.mrb[0].mxu0
          %1396 = vmatprep.mubr.f32.mxu0 0.0
          %1397 = vmatmul.mubr.f32.gmra.mrb[0].mxu0 %v1320
          %v1398 = vpop.f32.mrb[0].mxu0
          %v1399 = vadd.f32 0.0, %v1398
          %v1400 = vpop.f32.mrb[0].mxu0
          %1401 = vdwg.mxu0
          %v1402 = vadd.f32 %v1302, %v1389
          %v1403 = vadd.f32 %v1303, %v1394
          %v1404 = vadd.f32 %v1304, %v1399
          %v1405 = vld [vmem:[%s1204 + $0x2] sm:$0xff]
          %v1406 = vld [vmem:[%s1204 + $0xa] sm:$0xff]
          %v1407 = vld [vmem:[%s1204 + $0x12] sm:$0x1]
          %s1408 = scalar_lea.vmem %s3, 192
          %v1409 = vld [vmem:[%s1408] sm:$0xff]
          %v1410 = vld [vmem:[%s1408 + $0x8] sm:$0xff]
          %v1411 = vld [vmem:[%s1408 + $0x10] sm:$0xff]
          %v1412 = vld [vmem:[%s1408 + $0x18] sm:$0xff]
          %v1414 = vsel %vm823, %v1405, 0
          %v1417 = vsel %vm823, %v1406, 0
          %v1420 = vsel %vm823, %v1407, 0
          %1422 = vmatprep.subr.mxu0 0.0
          %1423 = vmatpush1.msra.mxu0 %v1409
          %1424 = vmatprep.subr.mxu0 0.0
          %1425 = vmatpush1.msra.mxu0 %v1410
          %1426 = vmatprep.subr.mxu0 0.0
          %1427 = vmatpush1.msra.mxu0 %v1411
          %1428 = vmatprep.subr.mxu0 0.0
          %1429 = vmatpush1.msra.mxu0 %v1412
          %1430 = vmatprep.subr.mxu0 0.0
          %1431 = vmatpush1.msra.mxu0 0.0
          %1432 = vmatprep.subr.mxu0 0.0
          %1433 = vmatpush1.msra.mxu0 0.0
          %1434 = vmatprep.subr.mxu0 0.0
          %1435 = vmatpush1.msra.mxu0 0.0
          %1436 = vmatprep.subr.mxu0 0.0
          %1437 = vmatpush1.msra.mxu0 0.0
          %1438 = vmatprep.subr.mxu0 0.0
          %1439 = vmatpush1.msra.mxu0 0.0
          %1440 = vmatprep.subr.mxu0 0.0
          %1441 = vmatpush1.msra.mxu0 0.0
          %1442 = vmatprep.subr.mxu0 0.0
          %1443 = vmatpush1.msra.mxu0 0.0
          %1444 = vmatprep.subr.mxu0 0.0
          %1445 = vmatpush1.msra.mxu0 0.0
          %1446 = vmatprep.subr.mxu0 0.0
          %1447 = vmatpush1.msra.mxu0 0.0
          %1448 = vmatprep.subr.mxu0 0.0
          %1449 = vmatpush1.msra.mxu0 0.0
          %1450 = vmatprep.subr.mxu0 0.0
          %1451 = vmatpush1.msra.mxu0 0.0
          %1452 = vmatprep.subr.mxu0 0.0
          %1453 = vmatpush1.msra.mxu0 0.0
          %1454 = vmatprep.subr.mxu0 0.0
          %1455 = vmatpush1.msra.mxu0 0.0
          %1456 = vmatprep.subr.mxu0 0.0
          %1457 = vmatpush1.msra.mxu0 0.0
          %1458 = vmatprep.subr.mxu0 0.0
          %1459 = vmatpush1.msra.mxu0 0.0
          %1460 = vmatprep.subr.mxu0 0.0
          %1461 = vmatpush1.msra.mxu0 0.0
          %1462 = vmatprep.subr.mxu0 0.0
          %1463 = vmatpush1.msra.mxu0 0.0
          %1464 = vmatprep.subr.mxu0 0.0
          %1465 = vmatpush1.msra.mxu0 0.0
          %1466 = vmatprep.subr.mxu0 0.0
          %1467 = vmatpush1.msra.mxu0 0.0
          %1468 = vmatprep.subr.mxu0 0.0
          %1469 = vmatpush1.msra.mxu0 0.0
          %1470 = vmatprep.subr.mxu0 0.0
          %1471 = vmatpush1.msra.mxu0 0.0
          %1472 = vmatprep.subr.mxu0 0.0
          %1473 = vmatpush1.msra.mxu0 0.0
          %1474 = vmatprep.subr.mxu0 0.0
          %1475 = vmatpush1.msra.mxu0 0.0
          %1476 = vmatprep.subr.mxu0 0.0
          %1477 = vmatpush1.msra.mxu0 0.0
          %1478 = vmatprep.subr.mxu0 0.0
          %1479 = vmatpush1.msra.mxu0 0.0
          %1480 = vmatprep.subr.mxu0 0.0
          %1481 = vmatpush1.msra.mxu0 0.0
          %1482 = vmatprep.subr.mxu0 0.0
          %1483 = vmatpush1.msra.mxu0 0.0
          %1484 = vmatprep.subr.mxu0 0.0
          %1485 = vmatpush1.msra.mxu0 0.0
          %1486 = vmatprep.mubr.f32.mxu0 0.0
          %1487 = vmatmul.mubr.f32.gmra.mrb[0].mxu0 %v1414
          %v1488 = vpop.f32.mrb[0].mxu0
          %v1489 = vadd.f32 0.0, %v1488
          %v1490 = vpop.f32.mrb[0].mxu0
          %1491 = vmatprep.mubr.f32.mxu0 0.0
          %1492 = vmatmul.mubr.f32.gmra.mrb[0].mxu0 %v1417
          %v1493 = vpop.f32.mrb[0].mxu0
          %v1494 = vadd.f32 0.0, %v1493
          %v1495 = vpop.f32.mrb[0].mxu0
          %1496 = vmatprep.mubr.f32.mxu0 0.0
          %1497 = vmatmul.mubr.f32.gmra.mrb[0].mxu0 %v1420
          %v1498 = vpop.f32.mrb[0].mxu0
          %v1499 = vadd.f32 0.0, %v1498
          %v1500 = vpop.f32.mrb[0].mxu0
          %1501 = vdwg.mxu0
          %v1502 = vadd.f32 %v1402, %v1489
          %v1503 = vadd.f32 %v1403, %v1494
          %v1504 = vadd.f32 %v1404, %v1499
          %v1505 = vld [vmem:[%s1204 + $0x3] sm:$0xff]
          %v1506 = vld [vmem:[%s1204 + $0xb] sm:$0xff]
          %v1507 = vld [vmem:[%s1204 + $0x13] sm:$0x1]
          %s1508 = scalar_lea.vmem %s3, 224
          %v1509 = vld [vmem:[%s1508] sm:$0xff]
          %v1510 = vld [vmem:[%s1508 + $0x8] sm:$0xff]
          %v1511 = vld [vmem:[%s1508 + $0x10] sm:$0xff]
          %v1512 = vld [vmem:[%s1508 + $0x18] sm:$0xff]
          %v1514 = vsel %vm823, %v1505, 0
          %v1517 = vsel %vm823, %v1506, 0
          %v1520 = vsel %vm823, %v1507, 0
          %1522 = vmatprep.subr.mxu0 0.0
          %1523 = vmatpush1.msra.mxu0 %v1509
          %1524 = vmatprep.subr.mxu0 0.0
          %1525 = vmatpush1.msra.mxu0 %v1510
          %1526 = vmatprep.subr.mxu0 0.0
          %1527 = vmatpush1.msra.mxu0 %v1511
          %1528 = vmatprep.subr.mxu0 0.0
          %1529 = vmatpush1.msra.mxu0 %v1512
          %1530 = vmatprep.subr.mxu0 0.0
          %1531 = vmatpush1.msra.mxu0 0.0
          %1532 = vmatprep.subr.mxu0 0.0
          %1533 = vmatpush1.msra.mxu0 0.0
          %1534 = vmatprep.subr.mxu0 0.0
          %1535 = vmatpush1.msra.mxu0 0.0
          %1536 = vmatprep.subr.mxu0 0.0
          %1537 = vmatpush1.msra.mxu0 0.0
          %1538 = vmatprep.subr.mxu0 0.0
          %1539 = vmatpush1.msra.mxu0 0.0
          %1540 = vmatprep.subr.mxu0 0.0
          %1541 = vmatpush1.msra.mxu0 0.0
          %1542 = vmatprep.subr.mxu0 0.0
          %1543 = vmatpush1.msra.mxu0 0.0
          %1544 = vmatprep.subr.mxu0 0.0
          %1545 = vmatpush1.msra.mxu0 0.0
          %1546 = vmatprep.subr.mxu0 0.0
          %1547 = vmatpush1.msra.mxu0 0.0
          %1548 = vmatprep.subr.mxu0 0.0
          %1549 = vmatpush1.msra.mxu0 0.0
          %1550 = vmatprep.subr.mxu0 0.0
          %1551 = vmatpush1.msra.mxu0 0.0
          %1552 = vmatprep.subr.mxu0 0.0
          %1553 = vmatpush1.msra.mxu0 0.0
          %1554 = vmatprep.subr.mxu0 0.0
          %1555 = vmatpush1.msra.mxu0 0.0
          %1556 = vmatprep.subr.mxu0 0.0
          %1557 = vmatpush1.msra.mxu0 0.0
          %1558 = vmatprep.subr.mxu0 0.0
          %1559 = vmatpush1.msra.mxu0 0.0
          %1560 = vmatprep.subr.mxu0 0.0
          %1561 = vmatpush1.msra.mxu0 0.0
          %1562 = vmatprep.subr.mxu0 0.0
          %1563 = vmatpush1.msra.mxu0 0.0
          %1564 = vmatprep.subr.mxu0 0.0
          %1565 = vmatpush1.msra.mxu0 0.0
          %1566 = vmatprep.subr.mxu0 0.0
          %1567 = vmatpush1.msra.mxu0 0.0
          %1568 = vmatprep.subr.mxu0 0.0
          %1569 = vmatpush1.msra.mxu0 0.0
          %1570 = vmatprep.subr.mxu0 0.0
          %1571 = vmatpush1.msra.mxu0 0.0
          %1572 = vmatprep.subr.mxu0 0.0
          %1573 = vmatpush1.msra.mxu0 0.0
          %1574 = vmatprep.subr.mxu0 0.0
          %1575 = vmatpush1.msra.mxu0 0.0
          %1576 = vmatprep.subr.mxu0 0.0
          %1577 = vmatpush1.msra.mxu0 0.0
          %1578 = vmatprep.subr.mxu0 0.0
          %1579 = vmatpush1.msra.mxu0 0.0
          %1580 = vmatprep.subr.mxu0 0.0
          %1581 = vmatpush1.msra.mxu0 0.0
          %1582 = vmatprep.subr.mxu0 0.0
          %1583 = vmatpush1.msra.mxu0 0.0
          %1584 = vmatprep.subr.mxu0 0.0
          %1585 = vmatpush1.msra.mxu0 0.0
          %1586 = vmatprep.mubr.f32.mxu0 0.0
          %1587 = vmatmul.mubr.f32.gmra.mrb[0].mxu0 %v1514
          %v1588 = vpop.f32.mrb[0].mxu0
          %v1589 = vadd.f32 0.0, %v1588
          %v1590 = vpop.f32.mrb[0].mxu0
          %1591 = vmatprep.mubr.f32.mxu0 0.0
          %1592 = vmatmul.mubr.f32.gmra.mrb[0].mxu0 %v1517
          %v1593 = vpop.f32.mrb[0].mxu0
          %v1594 = vadd.f32 0.0, %v1593
          %v1595 = vpop.f32.mrb[0].mxu0
          %1596 = vmatprep.mubr.f32.mxu0 0.0
          %1597 = vmatmul.mubr.f32.gmra.mrb[0].mxu0 %v1520
          %v1598 = vpop.f32.mrb[0].mxu0
          %v1599 = vadd.f32 0.0, %v1598
          %v1600 = vpop.f32.mrb[0].mxu0
          %1601 = vdwg.mxu0
          %v1602 = vadd.f32 %v1502, %v1589
          %v1603 = vadd.f32 %v1503, %v1594
          %v1604 = vadd.f32 %v1504, %v1599
          %s1605 = sadd.s32 %s801, 2
          %s1606 = smul.u32 %s1605, 24
          %s1607 = scalar_lea.vmem [#allocation2], %s1606
          %v1608 = vld [vmem:[%s1607] sm:$0xff]
          %v1609 = vld [vmem:[%s1607 + $0x8] sm:$0xff]
          %v1610 = vld [vmem:[%s1607 + $0x10] sm:$0x1]
          %s1611 = scalar_lea.vmem %s3, 256
          %v1612 = vld [vmem:[%s1611] sm:$0xff]
          %v1613 = vld [vmem:[%s1611 + $0x8] sm:$0xff]
          %v1614 = vld [vmem:[%s1611 + $0x10] sm:$0xff]
          %v1615 = vld [vmem:[%s1611 + $0x18] sm:$0xff]
          %v1617 = vsel %vm823, %v1608, 0
          %v1620 = vsel %vm823, %v1609, 0
          %v1623 = vsel %vm823, %v1610, 0
          %1625 = vmatprep.subr.mxu0 0.0
          %1626 = vmatpush1.msra.mxu0 %v1612
          %1627 = vmatprep.subr.mxu0 0.0
          %1628 = vmatpush1.msra.mxu0 %v1613
          %1629 = vmatprep.subr.mxu0 0.0
          %1630 = vmatpush1.msra.mxu0 %v1614
          %1631 = vmatprep.subr.mxu0 0.0
          %1632 = vmatpush1.msra.mxu0 %v1615
          %1633 = vmatprep.subr.mxu0 0.0
          %1634 = vmatpush1.msra.mxu0 0.0
          %1635 = vmatprep.subr.mxu0 0.0
          %1636 = vmatpush1.msra.mxu0 0.0
          %1637 = vmatprep.subr.mxu0 0.0
          %1638 = vmatpush1.msra.mxu0 0.0
          %1639 = vmatprep.subr.mxu0 0.0
          %1640 = vmatpush1.msra.mxu0 0.0
          %1641 = vmatprep.subr.mxu0 0.0
          %1642 = vmatpush1.msra.mxu0 0.0
          %1643 = vmatprep.subr.mxu0 0.0
          %1644 = vmatpush1.msra.mxu0 0.0
          %1645 = vmatprep.subr.mxu0 0.0
          %1646 = vmatpush1.msra.mxu0 0.0
          %1647 = vmatprep.subr.mxu0 0.0
          %1648 = vmatpush1.msra.mxu0 0.0
          %1649 = vmatprep.subr.mxu0 0.0
          %1650 = vmatpush1.msra.mxu0 0.0
          %1651 = vmatprep.subr.mxu0 0.0
          %1652 = vmatpush1.msra.mxu0 0.0
          %1653 = vmatprep.subr.mxu0 0.0
          %1654 = vmatpush1.msra.mxu0 0.0
          %1655 = vmatprep.subr.mxu0 0.0
          %1656 = vmatpush1.msra.mxu0 0.0
          %1657 = vmatprep.subr.mxu0 0.0
          %1658 = vmatpush1.msra.mxu0 0.0
          %1659 = vmatprep.subr.mxu0 0.0
          %1660 = vmatpush1.msra.mxu0 0.0
          %1661 = vmatprep.subr.mxu0 0.0
          %1662 = vmatpush1.msra.mxu0 0.0
          %1663 = vmatprep.subr.mxu0 0.0
          %1664 = vmatpush1.msra.mxu0 0.0
          %1665 = vmatprep.subr.mxu0 0.0
          %1666 = vmatpush1.msra.mxu0 0.0
          %1667 = vmatprep.subr.mxu0 0.0
          %1668 = vmatpush1.msra.mxu0 0.0
          %1669 = vmatprep.subr.mxu0 0.0
          %1670 = vmatpush1.msra.mxu0 0.0
          %1671 = vmatprep.subr.mxu0 0.0
          %1672 = vmatpush1.msra.mxu0 0.0
          %1673 = vmatprep.subr.mxu0 0.0
          %1674 = vmatpush1.msra.mxu0 0.0
          %1675 = vmatprep.subr.mxu0 0.0
          %1676 = vmatpush1.msra.mxu0 0.0
          %1677 = vmatprep.subr.mxu0 0.0
          %1678 = vmatpush1.msra.mxu0 0.0
          %1679 = vmatprep.subr.mxu0 0.0
          %1680 = vmatpush1.msra.mxu0 0.0
          %1681 = vmatprep.subr.mxu0 0.0
          %1682 = vmatpush1.msra.mxu0 0.0
          %1683 = vmatprep.subr.mxu0 0.0
          %1684 = vmatpush1.msra.mxu0 0.0
          %1685 = vmatprep.subr.mxu0 0.0
          %1686 = vmatpush1.msra.mxu0 0.0
          %1687 = vmatprep.subr.mxu0 0.0
          %1688 = vmatpush1.msra.mxu0 0.0
          %1689 = vmatprep.mubr.f32.mxu0 0.0
          %1690 = vmatmul.mubr.f32.gmra.mrb[0].mxu0 %v1617
          %v1691 = vpop.f32.mrb[0].mxu0
          %v1692 = vadd.f32 0.0, %v1691
          %v1693 = vpop.f32.mrb[0].mxu0
          %1694 = vmatprep.mubr.f32.mxu0 0.0
          %1695 = vmatmul.mubr.f32.gmra.mrb[0].mxu0 %v1620
          %v1696 = vpop.f32.mrb[0].mxu0
          %v1697 = vadd.f32 0.0, %v1696
          %v1698 = vpop.f32.mrb[0].mxu0
          %1699 = vmatprep.mubr.f32.mxu0 0.0
          %1700 = vmatmul.mubr.f32.gmra.mrb[0].mxu0 %v1623
          %v1701 = vpop.f32.mrb[0].mxu0
          %v1702 = vadd.f32 0.0, %v1701
          %v1703 = vpop.f32.mrb[0].mxu0
          %1704 = vdwg.mxu0
          %v1705 = vadd.f32 %v1602, %v1692
          %v1706 = vadd.f32 %v1603, %v1697
          %v1707 = vadd.f32 %v1604, %v1702
          %v1708 = vld [vmem:[%s1607 + $0x1] sm:$0xff]
          %v1709 = vld [vmem:[%s1607 + $0x9] sm:$0xff]
          %v1710 = vld [vmem:[%s1607 + $0x11] sm:$0x1]
          %s1711 = scalar_lea.vmem %s3, 288
          %v1712 = vld [vmem:[%s1711] sm:$0xff]
          %v1713 = vld [vmem:[%s1711 + $0x8] sm:$0xff]
          %v1714 = vld [vmem:[%s1711 + $0x10] sm:$0xff]
          %v1715 = vld [vmem:[%s1711 + $0x18] sm:$0xff]
          %v1717 = vsel %vm823, %v1708, 0
          %v1720 = vsel %vm823, %v1709, 0
          %v1723 = vsel %vm823, %v1710, 0
          %1725 = vmatprep.subr.mxu0 0.0
          %1726 = vmatpush1.msra.mxu0 %v1712
          %1727 = vmatprep.subr.mxu0 0.0
          %1728 = vmatpush1.msra.mxu0 %v1713
          %1729 = vmatprep.subr.mxu0 0.0
          %1730 = vmatpush1.msra.mxu0 %v1714
          %1731 = vmatprep.subr.mxu0 0.0
          %1732 = vmatpush1.msra.mxu0 %v1715
          %1733 = vmatprep.subr.mxu0 0.0
          %1734 = vmatpush1.msra.mxu0 0.0
          %1735 = vmatprep.subr.mxu0 0.0
          %1736 = vmatpush1.msra.mxu0 0.0
          %1737 = vmatprep.subr.mxu0 0.0
          %1738 = vmatpush1.msra.mxu0 0.0
          %1739 = vmatprep.subr.mxu0 0.0
          %1740 = vmatpush1.msra.mxu0 0.0
          %1741 = vmatprep.subr.mxu0 0.0
          %1742 = vmatpush1.msra.mxu0 0.0
          %1743 = vmatprep.subr.mxu0 0.0
          %1744 = vmatpush1.msra.mxu0 0.0
          %1745 = vmatprep.subr.mxu0 0.0
          %1746 = vmatpush1.msra.mxu0 0.0
          %1747 = vmatprep.subr.mxu0 0.0
          %1748 = vmatpush1.msra.mxu0 0.0
          %1749 = vmatprep.subr.mxu0 0.0
          %1750 = vmatpush1.msra.mxu0 0.0
          %1751 = vmatprep.subr.mxu0 0.0
          %1752 = vmatpush1.msra.mxu0 0.0
          %1753 = vmatprep.subr.mxu0 0.0
          %1754 = vmatpush1.msra.mxu0 0.0
          %1755 = vmatprep.subr.mxu0 0.0
          %1756 = vmatpush1.msra.mxu0 0.0
          %1757 = vmatprep.subr.mxu0 0.0
          %1758 = vmatpush1.msra.mxu0 0.0
          %1759 = vmatprep.subr.mxu0 0.0
          %1760 = vmatpush1.msra.mxu0 0.0
          %1761 = vmatprep.subr.mxu0 0.0
          %1762 = vmatpush1.msra.mxu0 0.0
          %1763 = vmatprep.subr.mxu0 0.0
          %1764 = vmatpush1.msra.mxu0 0.0
          %1765 = vmatprep.subr.mxu0 0.0
          %1766 = vmatpush1.msra.mxu0 0.0
          %1767 = vmatprep.subr.mxu0 0.0
          %1768 = vmatpush1.msra.mxu0 0.0
          %1769 = vmatprep.subr.mxu0 0.0
          %1770 = vmatpush1.msra.mxu0 0.0
          %1771 = vmatprep.subr.mxu0 0.0
          %1772 = vmatpush1.msra.mxu0 0.0
          %1773 = vmatprep.subr.mxu0 0.0
          %1774 = vmatpush1.msra.mxu0 0.0
          %1775 = vmatprep.subr.mxu0 0.0
          %1776 = vmatpush1.msra.mxu0 0.0
          %1777 = vmatprep.subr.mxu0 0.0
          %1778 = vmatpush1.msra.mxu0 0.0
          %1779 = vmatprep.subr.mxu0 0.0
          %1780 = vmatpush1.msra.mxu0 0.0
          %1781 = vmatprep.subr.mxu0 0.0
          %1782 = vmatpush1.msra.mxu0 0.0
          %1783 = vmatprep.subr.mxu0 0.0
          %1784 = vmatpush1.msra.mxu0 0.0
          %1785 = vmatprep.subr.mxu0 0.0
          %1786 = vmatpush1.msra.mxu0 0.0
          %1787 = vmatprep.subr.mxu0 0.0
          %1788 = vmatpush1.msra.mxu0 0.0
          %1789 = vmatprep.mubr.f32.mxu0 0.0
          %1790 = vmatmul.mubr.f32.gmra.mrb[0].mxu0 %v1717
          %v1791 = vpop.f32.mrb[0].mxu0
          %v1792 = vadd.f32 0.0, %v1791
          %v1793 = vpop.f32.mrb[0].mxu0
          %1794 = vmatprep.mubr.f32.mxu0 0.0
          %1795 = vmatmul.mubr.f32.gmra.mrb[0].mxu0 %v1720
          %v1796 = vpop.f32.mrb[0].mxu0
          %v1797 = vadd.f32 0.0, %v1796
          %v1798 = vpop.f32.mrb[0].mxu0
          %1799 = vmatprep.mubr.f32.mxu0 0.0
          %1800 = vmatmul.mubr.f32.gmra.mrb[0].mxu0 %v1723
          %v1801 = vpop.f32.mrb[0].mxu0
          %v1802 = vadd.f32 0.0, %v1801
          %v1803 = vpop.f32.mrb[0].mxu0
          %1804 = vdwg.mxu0
          %v1805 = vadd.f32 %v1705, %v1792
          %v1806 = vadd.f32 %v1706, %v1797
          %v1807 = vadd.f32 %v1707, %v1802
          %v1808 = vld [vmem:[%s1607 + $0x2] sm:$0xff]
          %v1809 = vld [vmem:[%s1607 + $0xa] sm:$0xff]
          %v1810 = vld [vmem:[%s1607 + $0x12] sm:$0x1]
          %s1811 = scalar_lea.vmem %s3, 320
          %v1812 = vld [vmem:[%s1811] sm:$0xff]
          %v1813 = vld [vmem:[%s1811 + $0x8] sm:$0xff]
          %v1814 = vld [vmem:[%s1811 + $0x10] sm:$0xff]
          %v1815 = vld [vmem:[%s1811 + $0x18] sm:$0xff]
          %v1817 = vsel %vm823, %v1808, 0
          %v1820 = vsel %vm823, %v1809, 0
          %v1823 = vsel %vm823, %v1810, 0
          %1825 = vmatprep.subr.mxu0 0.0
          %1826 = vmatpush1.msra.mxu0 %v1812
          %1827 = vmatprep.subr.mxu0 0.0
          %1828 = vmatpush1.msra.mxu0 %v1813
          %1829 = vmatprep.subr.mxu0 0.0
          %1830 = vmatpush1.msra.mxu0 %v1814
          %1831 = vmatprep.subr.mxu0 0.0
          %1832 = vmatpush1.msra.mxu0 %v1815
          %1833 = vmatprep.subr.mxu0 0.0
          %1834 = vmatpush1.msra.mxu0 0.0
          %1835 = vmatprep.subr.mxu0 0.0
          %1836 = vmatpush1.msra.mxu0 0.0
          %1837 = vmatprep.subr.mxu0 0.0
          %1838 = vmatpush1.msra.mxu0 0.0
          %1839 = vmatprep.subr.mxu0 0.0
          %1840 = vmatpush1.msra.mxu0 0.0
          %1841 = vmatprep.subr.mxu0 0.0
          %1842 = vmatpush1.msra.mxu0 0.0
          %1843 = vmatprep.subr.mxu0 0.0
          %1844 = vmatpush1.msra.mxu0 0.0
          %1845 = vmatprep.subr.mxu0 0.0
          %1846 = vmatpush1.msra.mxu0 0.0
          %1847 = vmatprep.subr.mxu0 0.0
          %1848 = vmatpush1.msra.mxu0 0.0
          %1849 = vmatprep.subr.mxu0 0.0
          %1850 = vmatpush1.msra.mxu0 0.0
          %1851 = vmatprep.subr.mxu0 0.0
          %1852 = vmatpush1.msra.mxu0 0.0
          %1853 = vmatprep.subr.mxu0 0.0
          %1854 = vmatpush1.msra.mxu0 0.0
          %1855 = vmatprep.subr.mxu0 0.0
          %1856 = vmatpush1.msra.mxu0 0.0
          %1857 = vmatprep.subr.mxu0 0.0
          %1858 = vmatpush1.msra.mxu0 0.0
          %1859 = vmatprep.subr.mxu0 0.0
          %1860 = vmatpush1.msra.mxu0 0.0
          %1861 = vmatprep.subr.mxu0 0.0
          %1862 = vmatpush1.msra.mxu0 0.0
          %1863 = vmatprep.subr.mxu0 0.0
          %1864 = vmatpush1.msra.mxu0 0.0
          %1865 = vmatprep.subr.mxu0 0.0
          %1866 = vmatpush1.msra.mxu0 0.0
          %1867 = vmatprep.subr.mxu0 0.0
          %1868 = vmatpush1.msra.mxu0 0.0
          %1869 = vmatprep.subr.mxu0 0.0
          %1870 = vmatpush1.msra.mxu0 0.0
          %1871 = vmatprep.subr.mxu0 0.0
          %1872 = vmatpush1.msra.mxu0 0.0
          %1873 = vmatprep.subr.mxu0 0.0
          %1874 = vmatpush1.msra.mxu0 0.0
          %1875 = vmatprep.subr.mxu0 0.0
          %1876 = vmatpush1.msra.mxu0 0.0
          %1877 = vmatprep.subr.mxu0 0.0
          %1878 = vmatpush1.msra.mxu0 0.0
          %1879 = vmatprep.subr.mxu0 0.0
          %1880 = vmatpush1.msra.mxu0 0.0
          %1881 = vmatprep.subr.mxu0 0.0
          %1882 = vmatpush1.msra.mxu0 0.0
          %1883 = vmatprep.subr.mxu0 0.0
          %1884 = vmatpush1.msra.mxu0 0.0
          %1885 = vmatprep.subr.mxu0 0.0
          %1886 = vmatpush1.msra.mxu0 0.0
          %1887 = vmatprep.subr.mxu0 0.0
          %1888 = vmatpush1.msra.mxu0 0.0
          %1889 = vmatprep.mubr.f32.mxu0 0.0
          %1890 = vmatmul.mubr.f32.gmra.mrb[0].mxu0 %v1817
          %v1891 = vpop.f32.mrb[0].mxu0
          %v1892 = vadd.f32 0.0, %v1891
          %v1893 = vpop.f32.mrb[0].mxu0
          %1894 = vmatprep.mubr.f32.mxu0 0.0
          %1895 = vmatmul.mubr.f32.gmra.mrb[0].mxu0 %v1820
          %v1896 = vpop.f32.mrb[0].mxu0
          %v1897 = vadd.f32 0.0, %v1896
          %v1898 = vpop.f32.mrb[0].mxu0
          %1899 = vmatprep.mubr.f32.mxu0 0.0
          %1900 = vmatmul.mubr.f32.gmra.mrb[0].mxu0 %v1823
          %v1901 = vpop.f32.mrb[0].mxu0
          %v1902 = vadd.f32 0.0, %v1901
          %v1903 = vpop.f32.mrb[0].mxu0
          %1904 = vdwg.mxu0
          %v1905 = vadd.f32 %v1805, %v1892
          %v1906 = vadd.f32 %v1806, %v1897
          %v1907 = vadd.f32 %v1807, %v1902
          %v1908 = vld [vmem:[%s1607 + $0x3] sm:$0xff]
          %v1909 = vld [vmem:[%s1607 + $0xb] sm:$0xff]
          %v1910 = vld [vmem:[%s1607 + $0x13] sm:$0x1]
          %s1911 = scalar_lea.vmem %s3, 352
          %v1912 = vld [vmem:[%s1911] sm:$0xff]
          %v1913 = vld [vmem:[%s1911 + $0x8] sm:$0xff]
          %v1914 = vld [vmem:[%s1911 + $0x10] sm:$0xff]
          %v1915 = vld [vmem:[%s1911 + $0x18] sm:$0xff]
          %v1917 = vsel %vm823, %v1908, 0
          %v1920 = vsel %vm823, %v1909, 0
          %v1923 = vsel %vm823, %v1910, 0
          %1925 = vmatprep.subr.mxu0 0.0
          %1926 = vmatpush1.msra.mxu0 %v1912
          %1927 = vmatprep.subr.mxu0 0.0
          %1928 = vmatpush1.msra.mxu0 %v1913
          %1929 = vmatprep.subr.mxu0 0.0
          %1930 = vmatpush1.msra.mxu0 %v1914
          %1931 = vmatprep.subr.mxu0 0.0
          %1932 = vmatpush1.msra.mxu0 %v1915
          %1933 = vmatprep.subr.mxu0 0.0
          %1934 = vmatpush1.msra.mxu0 0.0
          %1935 = vmatprep.subr.mxu0 0.0
          %1936 = vmatpush1.msra.mxu0 0.0
          %1937 = vmatprep.subr.mxu0 0.0
          %1938 = vmatpush1.msra.mxu0 0.0
          %1939 = vmatprep.subr.mxu0 0.0
          %1940 = vmatpush1.msra.mxu0 0.0
          %1941 = vmatprep.subr.mxu0 0.0
          %1942 = vmatpush1.msra.mxu0 0.0
          %1943 = vmatprep.subr.mxu0 0.0
          %1944 = vmatpush1.msra.mxu0 0.0
          %1945 = vmatprep.subr.mxu0 0.0
          %1946 = vmatpush1.msra.mxu0 0.0
          %1947 = vmatprep.subr.mxu0 0.0
          %1948 = vmatpush1.msra.mxu0 0.0
          %1949 = vmatprep.subr.mxu0 0.0
          %1950 = vmatpush1.msra.mxu0 0.0
          %1951 = vmatprep.subr.mxu0 0.0
          %1952 = vmatpush1.msra.mxu0 0.0
          %1953 = vmatprep.subr.mxu0 0.0
          %1954 = vmatpush1.msra.mxu0 0.0
          %1955 = vmatprep.subr.mxu0 0.0
          %1956 = vmatpush1.msra.mxu0 0.0
          %1957 = vmatprep.subr.mxu0 0.0
          %1958 = vmatpush1.msra.mxu0 0.0
          %1959 = vmatprep.subr.mxu0 0.0
          %1960 = vmatpush1.msra.mxu0 0.0
          %1961 = vmatprep.subr.mxu0 0.0
          %1962 = vmatpush1.msra.mxu0 0.0
          %1963 = vmatprep.subr.mxu0 0.0
          %1964 = vmatpush1.msra.mxu0 0.0
          %1965 = vmatprep.subr.mxu0 0.0
          %1966 = vmatpush1.msra.mxu0 0.0
          %1967 = vmatprep.subr.mxu0 0.0
          %1968 = vmatpush1.msra.mxu0 0.0
          %1969 = vmatprep.subr.mxu0 0.0
          %1970 = vmatpush1.msra.mxu0 0.0
          %1971 = vmatprep.subr.mxu0 0.0
          %1972 = vmatpush1.msra.mxu0 0.0
          %1973 = vmatprep.subr.mxu0 0.0
          %1974 = vmatpush1.msra.mxu0 0.0
          %1975 = vmatprep.subr.mxu0 0.0
          %1976 = vmatpush1.msra.mxu0 0.0
          %1977 = vmatprep.subr.mxu0 0.0
          %1978 = vmatpush1.msra.mxu0 0.0
          %1979 = vmatprep.subr.mxu0 0.0
          %1980 = vmatpush1.msra.mxu0 0.0
          %1981 = vmatprep.subr.mxu0 0.0
          %1982 = vmatpush1.msra.mxu0 0.0
          %1983 = vmatprep.subr.mxu0 0.0
          %1984 = vmatpush1.msra.mxu0 0.0
          %1985 = vmatprep.subr.mxu0 0.0
          %1986 = vmatpush1.msra.mxu0 0.0
          %1987 = vmatprep.subr.mxu0 0.0
          %1988 = vmatpush1.msra.mxu0 0.0
          %1989 = vmatprep.mubr.f32.mxu0 0.0
          %1990 = vmatmul.mubr.f32.gmra.mrb[0].mxu0 %v1917
          %v1991 = vpop.f32.mrb[0].mxu0
          %v1992 = vadd.f32 0.0, %v1991
          %v1993 = vpop.f32.mrb[0].mxu0
          %1994 = vmatprep.mubr.f32.mxu0 0.0
          %1995 = vmatmul.mubr.f32.gmra.mrb[0].mxu0 %v1920
          %v1996 = vpop.f32.mrb[0].mxu0
          %v1997 = vadd.f32 0.0, %v1996
          %v1998 = vpop.f32.mrb[0].mxu0
          %1999 = vmatprep.mubr.f32.mxu0 0.0
          %2000 = vmatmul.mubr.f32.gmra.mrb[0].mxu0 %v1923
          %v2001 = vpop.f32.mrb[0].mxu0
          %v2002 = vadd.f32 0.0, %v2001
          %v2003 = vpop.f32.mrb[0].mxu0
          %2004 = vdwg.mxu0
          %v2005 = vadd.f32 %v1905, %v1992
          %v2006 = vadd.f32 %v1906, %v1997
          %v2007 = vadd.f32 %v1907, %v2002
          %s2008 = sadd.s32 %s801, 3
          %s2009 = smul.u32 %s2008, 24
          %s2010 = scalar_lea.vmem [#allocation2], %s2009
          %v2011 = vld [vmem:[%s2010] sm:$0xff]
          %v2012 = vld [vmem:[%s2010 + $0x8] sm:$0xff]
          %v2013 = vld [vmem:[%s2010 + $0x10] sm:$0x1]
          %s2014 = scalar_lea.vmem %s3, 384
          %v2015 = vld [vmem:[%s2014] sm:$0xff]
          %v2016 = vld [vmem:[%s2014 + $0x8] sm:$0xff]
          %v2017 = vld [vmem:[%s2014 + $0x10] sm:$0xff]
          %v2018 = vld [vmem:[%s2014 + $0x18] sm:$0xff]
          %v2020 = vsel %vm823, %v2011, 0
          %v2023 = vsel %vm823, %v2012, 0
          %v2026 = vsel %vm823, %v2013, 0
          %2028 = vmatprep.subr.mxu0 0.0
          %2029 = vmatpush1.msra.mxu0 %v2015
          %2030 = vmatprep.subr.mxu0 0.0
          %2031 = vmatpush1.msra.mxu0 %v2016
          %2032 = vmatprep.subr.mxu0 0.0
          %2033 = vmatpush1.msra.mxu0 %v2017
          %2034 = vmatprep.subr.mxu0 0.0
          %2035 = vmatpush1.msra.mxu0 %v2018
          %2036 = vmatprep.subr.mxu0 0.0
          %2037 = vmatpush1.msra.mxu0 0.0
          %2038 = vmatprep.subr.mxu0 0.0
          %2039 = vmatpush1.msra.mxu0 0.0
          %2040 = vmatprep.subr.mxu0 0.0
          %2041 = vmatpush1.msra.mxu0 0.0
          %2042 = vmatprep.subr.mxu0 0.0
          %2043 = vmatpush1.msra.mxu0 0.0
          %2044 = vmatprep.subr.mxu0 0.0
          %2045 = vmatpush1.msra.mxu0 0.0
          %2046 = vmatprep.subr.mxu0 0.0
          %2047 = vmatpush1.msra.mxu0 0.0
          %2048 = vmatprep.subr.mxu0 0.0
          %2049 = vmatpush1.msra.mxu0 0.0
          %2050 = vmatprep.subr.mxu0 0.0
          %2051 = vmatpush1.msra.mxu0 0.0
          %2052 = vmatprep.subr.mxu0 0.0
          %2053 = vmatpush1.msra.mxu0 0.0
          %2054 = vmatprep.subr.mxu0 0.0
          %2055 = vmatpush1.msra.mxu0 0.0
          %2056 = vmatprep.subr.mxu0 0.0
          %2057 = vmatpush1.msra.mxu0 0.0
          %2058 = vmatprep.subr.mxu0 0.0
          %2059 = vmatpush1.msra.mxu0 0.0
          %2060 = vmatprep.subr.mxu0 0.0
          %2061 = vmatpush1.msra.mxu0 0.0
          %2062 = vmatprep.subr.mxu0 0.0
          %2063 = vmatpush1.msra.mxu0 0.0
          %2064 = vmatprep.subr.mxu0 0.0
          %2065 = vmatpush1.msra.mxu0 0.0
          %2066 = vmatprep.subr.mxu0 0.0
          %2067 = vmatpush1.msra.mxu0 0.0
          %2068 = vmatprep.subr.mxu0 0.0
          %2069 = vmatpush1.msra.mxu0 0.0
          %2070 = vmatprep.subr.mxu0 0.0
          %2071 = vmatpush1.msra.mxu0 0.0
          %2072 = vmatprep.subr.mxu0 0.0
          %2073 = vmatpush1.msra.mxu0 0.0
          %2074 = vmatprep.subr.mxu0 0.0
          %2075 = vmatpush1.msra.mxu0 0.0
          %2076 = vmatprep.subr.mxu0 0.0
          %2077 = vmatpush1.msra.mxu0 0.0
          %2078 = vmatprep.subr.mxu0 0.0
          %2079 = vmatpush1.msra.mxu0 0.0
          %2080 = vmatprep.subr.mxu0 0.0
          %2081 = vmatpush1.msra.mxu0 0.0
          %2082 = vmatprep.subr.mxu0 0.0
          %2083 = vmatpush1.msra.mxu0 0.0
          %2084 = vmatprep.subr.mxu0 0.0
          %2085 = vmatpush1.msra.mxu0 0.0
          %2086 = vmatprep.subr.mxu0 0.0
          %2087 = vmatpush1.msra.mxu0 0.0
          %2088 = vmatprep.subr.mxu0 0.0
          %2089 = vmatpush1.msra.mxu0 0.0
          %2090 = vmatprep.subr.mxu0 0.0
          %2091 = vmatpush1.msra.mxu0 0.0
          %2092 = vmatprep.mubr.f32.mxu0 0.0
          %2093 = vmatmul.mubr.f32.gmra.mrb[0].mxu0 %v2020
          %v2094 = vpop.f32.mrb[0].mxu0
          %v2095 = vadd.f32 0.0, %v2094
          %v2096 = vpop.f32.mrb[0].mxu0
          %2097 = vmatprep.mubr.f32.mxu0 0.0
          %2098 = vmatmul.mubr.f32.gmra.mrb[0].mxu0 %v2023
          %v2099 = vpop.f32.mrb[0].mxu0
          %v2100 = vadd.f32 0.0, %v2099
          %v2101 = vpop.f32.mrb[0].mxu0
          %2102 = vmatprep.mubr.f32.mxu0 0.0
          %2103 = vmatmul.mubr.f32.gmra.mrb[0].mxu0 %v2026
          %v2104 = vpop.f32.mrb[0].mxu0
          %v2105 = vadd.f32 0.0, %v2104
          %v2106 = vpop.f32.mrb[0].mxu0
          %2107 = vdwg.mxu0
          %v2108 = vadd.f32 %v2005, %v2095
          %v2109 = vadd.f32 %v2006, %v2100
          %v2110 = vadd.f32 %v2007, %v2105
          %v2111 = vld [vmem:[%s2010 + $0x1] sm:$0xff]
          %v2112 = vld [vmem:[%s2010 + $0x9] sm:$0xff]
          %v2113 = vld [vmem:[%s2010 + $0x11] sm:$0x1]
          %s2114 = scalar_lea.vmem %s3, 416
          %v2115 = vld [vmem:[%s2114] sm:$0xff]
          %v2116 = vld [vmem:[%s2114 + $0x8] sm:$0xff]
          %v2117 = vld [vmem:[%s2114 + $0x10] sm:$0xff]
          %v2118 = vld [vmem:[%s2114 + $0x18] sm:$0xff]
          %v2120 = vsel %vm823, %v2111, 0
          %v2123 = vsel %vm823, %v2112, 0
          %v2126 = vsel %vm823, %v2113, 0
          %2128 = vmatprep.subr.mxu0 0.0
          %2129 = vmatpush1.msra.mxu0 %v2115
          %2130 = vmatprep.subr.mxu0 0.0
          %2131 = vmatpush1.msra.mxu0 %v2116
          %2132 = vmatprep.subr.mxu0 0.0
          %2133 = vmatpush1.msra.mxu0 %v2117
          %2134 = vmatprep.subr.mxu0 0.0
          %2135 = vmatpush1.msra.mxu0 %v2118
          %2136 = vmatprep.subr.mxu0 0.0
          %2137 = vmatpush1.msra.mxu0 0.0
          %2138 = vmatprep.subr.mxu0 0.0
          %2139 = vmatpush1.msra.mxu0 0.0
          %2140 = vmatprep.subr.mxu0 0.0
          %2141 = vmatpush1.msra.mxu0 0.0
          %2142 = vmatprep.subr.mxu0 0.0
          %2143 = vmatpush1.msra.mxu0 0.0
          %2144 = vmatprep.subr.mxu0 0.0
          %2145 = vmatpush1.msra.mxu0 0.0
          %2146 = vmatprep.subr.mxu0 0.0
          %2147 = vmatpush1.msra.mxu0 0.0
          %2148 = vmatprep.subr.mxu0 0.0
          %2149 = vmatpush1.msra.mxu0 0.0
          %2150 = vmatprep.subr.mxu0 0.0
          %2151 = vmatpush1.msra.mxu0 0.0
          %2152 = vmatprep.subr.mxu0 0.0
          %2153 = vmatpush1.msra.mxu0 0.0
          %2154 = vmatprep.subr.mxu0 0.0
          %2155 = vmatpush1.msra.mxu0 0.0
          %2156 = vmatprep.subr.mxu0 0.0
          %2157 = vmatpush1.msra.mxu0 0.0
          %2158 = vmatprep.subr.mxu0 0.0
          %2159 = vmatpush1.msra.mxu0 0.0
          %2160 = vmatprep.subr.mxu0 0.0
          %2161 = vmatpush1.msra.mxu0 0.0
          %2162 = vmatprep.subr.mxu0 0.0
          %2163 = vmatpush1.msra.mxu0 0.0
          %2164 = vmatprep.subr.mxu0 0.0
          %2165 = vmatpush1.msra.mxu0 0.0
          %2166 = vmatprep.subr.mxu0 0.0
          %2167 = vmatpush1.msra.mxu0 0.0
          %2168 = vmatprep.subr.mxu0 0.0
          %2169 = vmatpush1.msra.mxu0 0.0
          %2170 = vmatprep.subr.mxu0 0.0
          %2171 = vmatpush1.msra.mxu0 0.0
          %2172 = vmatprep.subr.mxu0 0.0
          %2173 = vmatpush1.msra.mxu0 0.0
          %2174 = vmatprep.subr.mxu0 0.0
          %2175 = vmatpush1.msra.mxu0 0.0
          %2176 = vmatprep.subr.mxu0 0.0
          %2177 = vmatpush1.msra.mxu0 0.0
          %2178 = vmatprep.subr.mxu0 0.0
          %2179 = vmatpush1.msra.mxu0 0.0
          %2180 = vmatprep.subr.mxu0 0.0
          %2181 = vmatpush1.msra.mxu0 0.0
          %2182 = vmatprep.subr.mxu0 0.0
          %2183 = vmatpush1.msra.mxu0 0.0
          %2184 = vmatprep.subr.mxu0 0.0
          %2185 = vmatpush1.msra.mxu0 0.0
          %2186 = vmatprep.subr.mxu0 0.0
          %2187 = vmatpush1.msra.mxu0 0.0
          %2188 = vmatprep.subr.mxu0 0.0
          %2189 = vmatpush1.msra.mxu0 0.0
          %2190 = vmatprep.subr.mxu0 0.0
          %2191 = vmatpush1.msra.mxu0 0.0
          %2192 = vmatprep.mubr.f32.mxu0 0.0
          %2193 = vmatmul.mubr.f32.gmra.mrb[0].mxu0 %v2120
          %v2194 = vpop.f32.mrb[0].mxu0
          %v2195 = vadd.f32 0.0, %v2194
          %v2196 = vpop.f32.mrb[0].mxu0
          %2197 = vmatprep.mubr.f32.mxu0 0.0
          %2198 = vmatmul.mubr.f32.gmra.mrb[0].mxu0 %v2123
          %v2199 = vpop.f32.mrb[0].mxu0
          %v2200 = vadd.f32 0.0, %v2199
          %v2201 = vpop.f32.mrb[0].mxu0
          %2202 = vmatprep.mubr.f32.mxu0 0.0
          %2203 = vmatmul.mubr.f32.gmra.mrb[0].mxu0 %v2126
          %v2204 = vpop.f32.mrb[0].mxu0
          %v2205 = vadd.f32 0.0, %v2204
          %v2206 = vpop.f32.mrb[0].mxu0
          %2207 = vdwg.mxu0
          %v2208 = vadd.f32 %v2108, %v2195
          %v2209 = vadd.f32 %v2109, %v2200
          %v2210 = vadd.f32 %v2110, %v2205
          %v2211 = vld [vmem:[%s2010 + $0x2] sm:$0xff]
          %v2212 = vld [vmem:[%s2010 + $0xa] sm:$0xff]
          %v2213 = vld [vmem:[%s2010 + $0x12] sm:$0x1]
          %s2214 = scalar_lea.vmem %s3, 448
          %v2215 = vld [vmem:[%s2214] sm:$0xff]
          %v2216 = vld [vmem:[%s2214 + $0x8] sm:$0xff]
          %v2217 = vld [vmem:[%s2214 + $0x10] sm:$0xff]
          %v2218 = vld [vmem:[%s2214 + $0x18] sm:$0xff]
          %v2220 = vsel %vm823, %v2211, 0
          %v2223 = vsel %vm823, %v2212, 0
          %v2226 = vsel %vm823, %v2213, 0
          %2228 = vmatprep.subr.mxu0 0.0
          %2229 = vmatpush1.msra.mxu0 %v2215
          %2230 = vmatprep.subr.mxu0 0.0
          %2231 = vmatpush1.msra.mxu0 %v2216
          %2232 = vmatprep.subr.mxu0 0.0
          %2233 = vmatpush1.msra.mxu0 %v2217
          %2234 = vmatprep.subr.mxu0 0.0
          %2235 = vmatpush1.msra.mxu0 %v2218
          %2236 = vmatprep.subr.mxu0 0.0
          %2237 = vmatpush1.msra.mxu0 0.0
          %2238 = vmatprep.subr.mxu0 0.0
          %2239 = vmatpush1.msra.mxu0 0.0
          %2240 = vmatprep.subr.mxu0 0.0
          %2241 = vmatpush1.msra.mxu0 0.0
          %2242 = vmatprep.subr.mxu0 0.0
          %2243 = vmatpush1.msra.mxu0 0.0
          %2244 = vmatprep.subr.mxu0 0.0
          %2245 = vmatpush1.msra.mxu0 0.0
          %2246 = vmatprep.subr.mxu0 0.0
          %2247 = vmatpush1.msra.mxu0 0.0
          %2248 = vmatprep.subr.mxu0 0.0
          %2249 = vmatpush1.msra.mxu0 0.0
          %2250 = vmatprep.subr.mxu0 0.0
          %2251 = vmatpush1.msra.mxu0 0.0
          %2252 = vmatprep.subr.mxu0 0.0
          %2253 = vmatpush1.msra.mxu0 0.0
          %2254 = vmatprep.subr.mxu0 0.0
          %2255 = vmatpush1.msra.mxu0 0.0
          %2256 = vmatprep.subr.mxu0 0.0
          %2257 = vmatpush1.msra.mxu0 0.0
          %2258 = vmatprep.subr.mxu0 0.0
          %2259 = vmatpush1.msra.mxu0 0.0
          %2260 = vmatprep.subr.mxu0 0.0
          %2261 = vmatpush1.msra.mxu0 0.0
          %2262 = vmatprep.subr.mxu0 0.0
          %2263 = vmatpush1.msra.mxu0 0.0
          %2264 = vmatprep.subr.mxu0 0.0
          %2265 = vmatpush1.msra.mxu0 0.0
          %2266 = vmatprep.subr.mxu0 0.0
          %2267 = vmatpush1.msra.mxu0 0.0
          %2268 = vmatprep.subr.mxu0 0.0
          %2269 = vmatpush1.msra.mxu0 0.0
          %2270 = vmatprep.subr.mxu0 0.0
          %2271 = vmatpush1.msra.mxu0 0.0
          %2272 = vmatprep.subr.mxu0 0.0
          %2273 = vmatpush1.msra.mxu0 0.0
          %2274 = vmatprep.subr.mxu0 0.0
          %2275 = vmatpush1.msra.mxu0 0.0
          %2276 = vmatprep.subr.mxu0 0.0
          %2277 = vmatpush1.msra.mxu0 0.0
          %2278 = vmatprep.subr.mxu0 0.0
          %2279 = vmatpush1.msra.mxu0 0.0
          %2280 = vmatprep.subr.mxu0 0.0
          %2281 = vmatpush1.msra.mxu0 0.0
          %2282 = vmatprep.subr.mxu0 0.0
          %2283 = vmatpush1.msra.mxu0 0.0
          %2284 = vmatprep.subr.mxu0 0.0
          %2285 = vmatpush1.msra.mxu0 0.0
          %2286 = vmatprep.subr.mxu0 0.0
          %2287 = vmatpush1.msra.mxu0 0.0
          %2288 = vmatprep.subr.mxu0 0.0
          %2289 = vmatpush1.msra.mxu0 0.0
          %2290 = vmatprep.subr.mxu0 0.0
          %2291 = vmatpush1.msra.mxu0 0.0
          %2292 = vmatprep.mubr.f32.mxu0 0.0
          %2293 = vmatmul.mubr.f32.gmra.mrb[0].mxu0 %v2220
          %v2294 = vpop.f32.mrb[0].mxu0
          %v2295 = vadd.f32 0.0, %v2294
          %v2296 = vpop.f32.mrb[0].mxu0
          %2297 = vmatprep.mubr.f32.mxu0 0.0
          %2298 = vmatmul.mubr.f32.gmra.mrb[0].mxu0 %v2223
          %v2299 = vpop.f32.mrb[0].mxu0
          %v2300 = vadd.f32 0.0, %v2299
          %v2301 = vpop.f32.mrb[0].mxu0
          %2302 = vmatprep.mubr.f32.mxu0 0.0
          %2303 = vmatmul.mubr.f32.gmra.mrb[0].mxu0 %v2226
          %v2304 = vpop.f32.mrb[0].mxu0
          %v2305 = vadd.f32 0.0, %v2304
          %v2306 = vpop.f32.mrb[0].mxu0
          %2307 = vdwg.mxu0
          %v2308 = vadd.f32 %v2208, %v2295
          %v2309 = vadd.f32 %v2209, %v2300
          %v2310 = vadd.f32 %v2210, %v2305
          %v2311 = vld [vmem:[%s2010 + $0x3] sm:$0xff]
          %v2312 = vld [vmem:[%s2010 + $0xb] sm:$0xff]
          %v2313 = vld [vmem:[%s2010 + $0x13] sm:$0x1]
          %s2314 = scalar_lea.vmem %s3, 480
          %v2315 = vld [vmem:[%s2314] sm:$0xff]
          %v2316 = vld [vmem:[%s2314 + $0x8] sm:$0xff]
          %v2317 = vld [vmem:[%s2314 + $0x10] sm:$0xff]
          %v2318 = vld [vmem:[%s2314 + $0x18] sm:$0xff]
          %v2320 = vsel %vm823, %v2311, 0
          %v2323 = vsel %vm823, %v2312, 0
          %v2326 = vsel %vm823, %v2313, 0
          %2328 = vmatprep.subr.mxu0 0.0
          %2329 = vmatpush1.msra.mxu0 %v2315
          %2330 = vmatprep.subr.mxu0 0.0
          %2331 = vmatpush1.msra.mxu0 %v2316
          %2332 = vmatprep.subr.mxu0 0.0
          %2333 = vmatpush1.msra.mxu0 %v2317
          %2334 = vmatprep.subr.mxu0 0.0
          %2335 = vmatpush1.msra.mxu0 %v2318
          %2336 = vmatprep.subr.mxu0 0.0
          %2337 = vmatpush1.msra.mxu0 0.0
          %2338 = vmatprep.subr.mxu0 0.0
          %2339 = vmatpush1.msra.mxu0 0.0
          %2340 = vmatprep.subr.mxu0 0.0
          %2341 = vmatpush1.msra.mxu0 0.0
          %2342 = vmatprep.subr.mxu0 0.0
          %2343 = vmatpush1.msra.mxu0 0.0
          %2344 = vmatprep.subr.mxu0 0.0
          %2345 = vmatpush1.msra.mxu0 0.0
          %2346 = vmatprep.subr.mxu0 0.0
          %2347 = vmatpush1.msra.mxu0 0.0
          %2348 = vmatprep.subr.mxu0 0.0
          %2349 = vmatpush1.msra.mxu0 0.0
          %2350 = vmatprep.subr.mxu0 0.0
          %2351 = vmatpush1.msra.mxu0 0.0
          %2352 = vmatprep.subr.mxu0 0.0
          %2353 = vmatpush1.msra.mxu0 0.0
          %2354 = vmatprep.subr.mxu0 0.0
          %2355 = vmatpush1.msra.mxu0 0.0
          %2356 = vmatprep.subr.mxu0 0.0
          %2357 = vmatpush1.msra.mxu0 0.0
          %2358 = vmatprep.subr.mxu0 0.0
          %2359 = vmatpush1.msra.mxu0 0.0
          %2360 = vmatprep.subr.mxu0 0.0
          %2361 = vmatpush1.msra.mxu0 0.0
          %2362 = vmatprep.subr.mxu0 0.0
          %2363 = vmatpush1.msra.mxu0 0.0
          %2364 = vmatprep.subr.mxu0 0.0
          %2365 = vmatpush1.msra.mxu0 0.0
          %2366 = vmatprep.subr.mxu0 0.0
          %2367 = vmatpush1.msra.mxu0 0.0
          %2368 = vmatprep.subr.mxu0 0.0
          %2369 = vmatpush1.msra.mxu0 0.0
          %2370 = vmatprep.subr.mxu0 0.0
          %2371 = vmatpush1.msra.mxu0 0.0
          %2372 = vmatprep.subr.mxu0 0.0
          %2373 = vmatpush1.msra.mxu0 0.0
          %2374 = vmatprep.subr.mxu0 0.0
          %2375 = vmatpush1.msra.mxu0 0.0
          %2376 = vmatprep.subr.mxu0 0.0
          %2377 = vmatpush1.msra.mxu0 0.0
          %2378 = vmatprep.subr.mxu0 0.0
          %2379 = vmatpush1.msra.mxu0 0.0
          %2380 = vmatprep.subr.mxu0 0.0
          %2381 = vmatpush1.msra.mxu0 0.0
          %2382 = vmatprep.subr.mxu0 0.0
          %2383 = vmatpush1.msra.mxu0 0.0
          %2384 = vmatprep.subr.mxu0 0.0
          %2385 = vmatpush1.msra.mxu0 0.0
          %2386 = vmatprep.subr.mxu0 0.0
          %2387 = vmatpush1.msra.mxu0 0.0
          %2388 = vmatprep.subr.mxu0 0.0
          %2389 = vmatpush1.msra.mxu0 0.0
          %2390 = vmatprep.subr.mxu0 0.0
          %2391 = vmatpush1.msra.mxu0 0.0
          %2392 = vmatprep.mubr.f32.mxu0 0.0
          %2393 = vmatmul.mubr.f32.gmra.mrb[0].mxu0 %v2320
          %v2394 = vpop.f32.mrb[0].mxu0
          %v2395 = vadd.f32 0.0, %v2394
          %v2396 = vpop.f32.mrb[0].mxu0
          %2397 = vmatprep.mubr.f32.mxu0 0.0
          %2398 = vmatmul.mubr.f32.gmra.mrb[0].mxu0 %v2323
          %v2399 = vpop.f32.mrb[0].mxu0
          %v2400 = vadd.f32 0.0, %v2399
          %v2401 = vpop.f32.mrb[0].mxu0
          %2402 = vmatprep.mubr.f32.mxu0 0.0
          %2403 = vmatmul.mubr.f32.gmra.mrb[0].mxu0 %v2326
          %v2404 = vpop.f32.mrb[0].mxu0
          %v2405 = vadd.f32 0.0, %v2404
          %v2406 = vpop.f32.mrb[0].mxu0
          %2407 = vdwg.mxu0
          %v2408 = vadd.f32 %v2308, %v2395
          %v2409 = vadd.f32 %v2309, %v2400
          %v2410 = vadd.f32 %v2310, %v2405
          %v2411 = vld [vmem:[%s4] sm:$0x1]
          %v2413 = vlaneseq
          %v2414 = vshrl.u32 %v2413, 7
          %v2415 = vsub.s32 0, %v2414
          %v2416 = vrot.slane %v2411, %v2415
          %v2418 = vadd.f32 %v2408, %v2416
          %v2419 = vadd.f32 %v2409, %v2416
          %v2420 = vadd.f32 %v2410, %v2416
          %v2421 = vmax.f32 %v2418, 0.0
          %v2422 = vmax.f32 %v2419, 0.0
          %v2423 = vmax.f32 %v2420, 0.0
          %s2424 = scalar_lea.vmem [#allocation3], %s806
          %vm2425 = vcmask 523264
          %2426 = vst.msk [vmem:[%s2424] sm:$0xff] %vm2425, %v2421
          %2427 = vst.msk [vmem:[%s2424 + $0x8] sm:$0xff] %vm2425, %v2422
          %vm2428 = vcmask 516096
          %2429 = vst.msk [vmem:[%s2424 + $0x10] sm:$0x1] %vm2428, %v2423
        $region76: #{dqn_forward.1} parent=63 // loop_footer
          %s805 = sadd.s32 1, %s801
        $region77: #{dqn_forward.1} parent=63 // loop_footer_branch
          %800 = sbr.rel target = $region73
        $region78: #{dqn_forward.1} parent=63 // loop_exit
          _
        loop: start=0, step=1, limit=13
        $region79: #{dqn_forward.1} parent=63 // loop_pre_header
          _
        $region80: #{dqn_forward.1} parent=63 // loop_header
          %s2431 = sphi 0, %s2435
          %p2432 = scmp.ge.s32.totalorder %s2431, 13
        $region81: #{dqn_forward.1} parent=63 // loop_header_branch
          %2434 = sbr.rel (%p2432) target = $region85
        $region82: #{dqn_forward.1} parent=63 // loop_body
          %s2436 = smul.u32 %s2431, 24
          %s2437 = scalar_lea.vmem [#allocation3], %s2436
          %v2438 = vld [vmem:[%s2437] sm:$0xff]
          %v2439 = vld [vmem:[%s2437 + $0x8] sm:$0x1f]
          %v2440 = vld [vmem:[%s5] sm:$0xff]
          %v2441 = vld [vmem:[%s5 + $0x8] sm:$0xff]
          %v2442 = vld [vmem:[%s5 + $0x10] sm:$0xff]
          %v2443 = vld [vmem:[%s5 + $0x18] sm:$0xff]
          %v2444 = vld [vmem:[%s5 + $0x20] sm:$0xff]
          %v2445 = vld [vmem:[%s5 + $0x28] sm:$0xff]
          %v2446 = vld [vmem:[%s5 + $0x30] sm:$0xff]
          %v2447 = vld [vmem:[%s5 + $0x38] sm:$0xff]
          %v2448 = vld [vmem:[%s2437 + $0x2] sm:$0xff]
          %v2449 = vld [vmem:[%s2437 + $0xa] sm:$0x1f]
          %s2450 = scalar_lea.vmem %s5, 64
          %v2451 = vld [vmem:[%s2450] sm:$0xff]
          %v2452 = vld [vmem:[%s2450 + $0x8] sm:$0xff]
          %v2453 = vld [vmem:[%s2450 + $0x10] sm:$0xff]
          %v2454 = vld [vmem:[%s2450 + $0x18] sm:$0xff]
          %v2455 = vld [vmem:[%s2450 + $0x20] sm:$0xff]
          %v2456 = vld [vmem:[%s2450 + $0x28] sm:$0xff]
          %v2457 = vld [vmem:[%s2450 + $0x30] sm:$0xff]
          %v2458 = vld [vmem:[%s2450 + $0x38] sm:$0xff]
          %vm2459 = vcmask 523264
          %v2461 = vsel %vm2459, %v2448, 0
          %v2464 = vsel %vm2459, %v2449, 0
          %2466 = vmatprep.subr.mxu0 0.0
          %2467 = vmatpush1.msra.mxu0 %v2451
          %2468 = vmatprep.subr.mxu0 0.0
          %2469 = vmatpush1.msra.mxu0 %v2452
          %2470 = vmatprep.subr.mxu0 0.0
          %2471 = vmatpush1.msra.mxu0 %v2453
          %2472 = vmatprep.subr.mxu0 0.0
          %2473 = vmatpush1.msra.mxu0 %v2454
          %2474 = vmatprep.subr.mxu0 0.0
          %2475 = vmatpush1.msra.mxu0 %v2455
          %2476 = vmatprep.subr.mxu0 0.0
          %2477 = vmatpush1.msra.mxu0 %v2456
          %2478 = vmatprep.subr.mxu0 0.0
          %2479 = vmatpush1.msra.mxu0 %v2457
          %2480 = vmatprep.subr.mxu0 0.0
          %2481 = vmatpush1.msra.mxu0 %v2458
          %2482 = vmatprep.subr.mxu0 0.0
          %2483 = vmatpush1.msra.mxu0 0.0
          %2484 = vmatprep.subr.mxu0 0.0
          %2485 = vmatpush1.msra.mxu0 0.0
          %2486 = vmatprep.subr.mxu0 0.0
          %2487 = vmatpush1.msra.mxu0 0.0
          %2488 = vmatprep.subr.mxu0 0.0
          %2489 = vmatpush1.msra.mxu0 0.0
          %2490 = vmatprep.subr.mxu0 0.0
          %2491 = vmatpush1.msra.mxu0 0.0
          %2492 = vmatprep.subr.mxu0 0.0
          %2493 = vmatpush1.msra.mxu0 0.0
          %2494 = vmatprep.subr.mxu0 0.0
          %2495 = vmatpush1.msra.mxu0 0.0
          %2496 = vmatprep.subr.mxu0 0.0
          %2497 = vmatpush1.msra.mxu0 0.0
          %2498 = vmatprep.subr.mxu0 0.0
          %2499 = vmatpush1.msra.mxu0 0.0
          %2500 = vmatprep.subr.mxu0 0.0
          %2501 = vmatpush1.msra.mxu0 0.0
          %2502 = vmatprep.subr.mxu0 0.0
          %2503 = vmatpush1.msra.mxu0 0.0
          %2504 = vmatprep.subr.mxu0 0.0
          %2505 = vmatpush1.msra.mxu0 0.0
          %2506 = vmatprep.subr.mxu0 0.0
          %2507 = vmatpush1.msra.mxu0 0.0
          %2508 = vmatprep.subr.mxu0 0.0
          %2509 = vmatpush1.msra.mxu0 0.0
          %2510 = vmatprep.subr.mxu0 0.0
          %2511 = vmatpush1.msra.mxu0 0.0
          %2512 = vmatprep.subr.mxu0 0.0
          %2513 = vmatpush1.msra.mxu0 0.0
          %2514 = vmatprep.subr.mxu0 0.0
          %2515 = vmatpush1.msra.mxu0 0.0
          %2516 = vmatprep.subr.mxu0 0.0
          %2517 = vmatpush1.msra.mxu0 0.0
          %2518 = vmatprep.subr.mxu0 0.0
          %2519 = vmatpush1.msra.mxu0 0.0
          %2520 = vmatprep.subr.mxu0 0.0
          %2521 = vmatpush1.msra.mxu0 0.0
          %2522 = vmatprep.subr.mxu0 0.0
          %2523 = vmatpush1.msra.mxu0 0.0
          %2524 = vmatprep.subr.mxu0 0.0
          %2525 = vmatpush1.msra.mxu0 0.0
          %2526 = vmatprep.subr.mxu0 0.0
          %2527 = vmatpush1.msra.mxu0 0.0
          %2528 = vmatprep.subr.mxu0 0.0
          %2529 = vmatpush1.msra.mxu0 0.0
          %2530 = vmatprep.mubr.f32.mxu0 0.0
          %2531 = vmatmul.mubr.f32.gmra.mrb[0].mxu0 %v2461
          %v2532 = vpop.f32.mrb[0].mxu0
          %v2533 = vadd.f32 0.0, %v2532
          %v2534 = vpop.f32.mrb[0].mxu0
          %2535 = vmatprep.mubr.f32.mxu0 0.0
          %2536 = vmatmul.mubr.f32.gmra.mrb[0].mxu0 %v2464
          %v2537 = vpop.f32.mrb[0].mxu0
          %v2538 = vadd.f32 0.0, %v2537
          %v2539 = vpop.f32.mrb[0].mxu0
          %2540 = vdwg.mxu0
          %v2542 = vsel %vm2459, %v2438, 0
          %v2545 = vsel %vm2459, %v2439, 0
          %2547 = vmatprep.subr.mxu0 0.0
          %2548 = vmatpush1.msra.mxu0 %v2440
          %2549 = vmatprep.subr.mxu0 0.0
          %2550 = vmatpush1.msra.mxu0 %v2441
          %2551 = vmatprep.subr.mxu0 0.0
          %2552 = vmatpush1.msra.mxu0 %v2442
          %2553 = vmatprep.subr.mxu0 0.0
          %2554 = vmatpush1.msra.mxu0 %v2443
          %2555 = vmatprep.subr.mxu0 0.0
          %2556 = vmatpush1.msra.mxu0 %v2444
          %2557 = vmatprep.subr.mxu0 0.0
          %2558 = vmatpush1.msra.mxu0 %v2445
          %2559 = vmatprep.subr.mxu0 0.0
          %2560 = vmatpush1.msra.mxu0 %v2446
          %2561 = vmatprep.subr.mxu0 0.0
          %2562 = vmatpush1.msra.mxu0 %v2447
          %2563 = vmatprep.subr.mxu0 0.0
          %2564 = vmatpush1.msra.mxu0 0.0
          %2565 = vmatprep.subr.mxu0 0.0
          %2566 = vmatpush1.msra.mxu0 0.0
          %2567 = vmatprep.subr.mxu0 0.0
          %2568 = vmatpush1.msra.mxu0 0.0
          %2569 = vmatprep.subr.mxu0 0.0
          %2570 = vmatpush1.msra.mxu0 0.0
          %2571 = vmatprep.subr.mxu0 0.0
          %2572 = vmatpush1.msra.mxu0 0.0
          %2573 = vmatprep.subr.mxu0 0.0
          %2574 = vmatpush1.msra.mxu0 0.0
          %2575 = vmatprep.subr.mxu0 0.0
          %2576 = vmatpush1.msra.mxu0 0.0
          %2577 = vmatprep.subr.mxu0 0.0
          %2578 = vmatpush1.msra.mxu0 0.0
          %2579 = vmatprep.subr.mxu0 0.0
          %2580 = vmatpush1.msra.mxu0 0.0
          %2581 = vmatprep.subr.mxu0 0.0
          %2582 = vmatpush1.msra.mxu0 0.0
          %2583 = vmatprep.subr.mxu0 0.0
          %2584 = vmatpush1.msra.mxu0 0.0
          %2585 = vmatprep.subr.mxu0 0.0
          %2586 = vmatpush1.msra.mxu0 0.0
          %2587 = vmatprep.subr.mxu0 0.0
          %2588 = vmatpush1.msra.mxu0 0.0
          %2589 = vmatprep.subr.mxu0 0.0
          %2590 = vmatpush1.msra.mxu0 0.0
          %2591 = vmatprep.subr.mxu0 0.0
          %2592 = vmatpush1.msra.mxu0 0.0
          %2593 = vmatprep.subr.mxu0 0.0
          %2594 = vmatpush1.msra.mxu0 0.0
          %2595 = vmatprep.subr.mxu0 0.0
          %2596 = vmatpush1.msra.mxu0 0.0
          %2597 = vmatprep.subr.mxu0 0.0
          %2598 = vmatpush1.msra.mxu0 0.0
          %2599 = vmatprep.subr.mxu0 0.0
          %2600 = vmatpush1.msra.mxu0 0.0
          %2601 = vmatprep.subr.mxu0 0.0
          %2602 = vmatpush1.msra.mxu0 0.0
          %2603 = vmatprep.subr.mxu0 0.0
          %2604 = vmatpush1.msra.mxu0 0.0
          %2605 = vmatprep.subr.mxu0 0.0
          %2606 = vmatpush1.msra.mxu0 0.0
          %2607 = vmatprep.subr.mxu0 0.0
          %2608 = vmatpush1.msra.mxu0 0.0
          %2609 = vmatprep.subr.mxu0 0.0
          %2610 = vmatpush1.msra.mxu0 0.0
          %2611 = vmatprep.mubr.f32.mxu0 0.0
          %2612 = vmatmul.mubr.f32.gmra.mrb[0].mxu0 %v2542
          %v2613 = vpop.f32.mrb[0].mxu0
          %v2614 = vadd.f32 %v2533, %v2613
          %v2615 = vpop.f32.mrb[0].mxu0
          %2616 = vmatprep.mubr.f32.mxu0 0.0
          %2617 = vmatmul.mubr.f32.gmra.mrb[0].mxu0 %v2545
          %v2618 = vpop.f32.mrb[0].mxu0
          %v2619 = vadd.f32 %v2538, %v2618
          %v2620 = vpop.f32.mrb[0].mxu0
          %2621 = vdwg.mxu0
          %v2622 = vld [vmem:[%s2437 + $0x4] sm:$0xff]
          %v2623 = vld [vmem:[%s2437 + $0xc] sm:$0x1f]
          %s2624 = scalar_lea.vmem %s5, 128
          %v2625 = vld [vmem:[%s2624] sm:$0xff]
          %v2626 = vld [vmem:[%s2624 + $0x8] sm:$0xff]
          %v2627 = vld [vmem:[%s2624 + $0x10] sm:$0xff]
          %v2628 = vld [vmem:[%s2624 + $0x18] sm:$0xff]
          %v2629 = vld [vmem:[%s2624 + $0x20] sm:$0xff]
          %v2630 = vld [vmem:[%s2624 + $0x28] sm:$0xff]
          %v2631 = vld [vmem:[%s2624 + $0x30] sm:$0xff]
          %v2632 = vld [vmem:[%s2624 + $0x38] sm:$0xff]
          %v2634 = vsel %vm2459, %v2622, 0
          %v2637 = vsel %vm2459, %v2623, 0
          %2639 = vmatprep.subr.mxu0 0.0
          %2640 = vmatpush1.msra.mxu0 %v2625
          %2641 = vmatprep.subr.mxu0 0.0
          %2642 = vmatpush1.msra.mxu0 %v2626
          %2643 = vmatprep.subr.mxu0 0.0
          %2644 = vmatpush1.msra.mxu0 %v2627
          %2645 = vmatprep.subr.mxu0 0.0
          %2646 = vmatpush1.msra.mxu0 %v2628
          %2647 = vmatprep.subr.mxu0 0.0
          %2648 = vmatpush1.msra.mxu0 %v2629
          %2649 = vmatprep.subr.mxu0 0.0
          %2650 = vmatpush1.msra.mxu0 %v2630
          %2651 = vmatprep.subr.mxu0 0.0
          %2652 = vmatpush1.msra.mxu0 %v2631
          %2653 = vmatprep.subr.mxu0 0.0
          %2654 = vmatpush1.msra.mxu0 %v2632
          %2655 = vmatprep.subr.mxu0 0.0
          %2656 = vmatpush1.msra.mxu0 0.0
          %2657 = vmatprep.subr.mxu0 0.0
          %2658 = vmatpush1.msra.mxu0 0.0
          %2659 = vmatprep.subr.mxu0 0.0
          %2660 = vmatpush1.msra.mxu0 0.0
          %2661 = vmatprep.subr.mxu0 0.0
          %2662 = vmatpush1.msra.mxu0 0.0
          %2663 = vmatprep.subr.mxu0 0.0
          %2664 = vmatpush1.msra.mxu0 0.0
          %2665 = vmatprep.subr.mxu0 0.0
          %2666 = vmatpush1.msra.mxu0 0.0
          %2667 = vmatprep.subr.mxu0 0.0
          %2668 = vmatpush1.msra.mxu0 0.0
          %2669 = vmatprep.subr.mxu0 0.0
          %2670 = vmatpush1.msra.mxu0 0.0
          %2671 = vmatprep.subr.mxu0 0.0
          %2672 = vmatpush1.msra.mxu0 0.0
          %2673 = vmatprep.subr.mxu0 0.0
          %2674 = vmatpush1.msra.mxu0 0.0
          %2675 = vmatprep.subr.mxu0 0.0
          %2676 = vmatpush1.msra.mxu0 0.0
          %2677 = vmatprep.subr.mxu0 0.0
          %2678 = vmatpush1.msra.mxu0 0.0
          %2679 = vmatprep.subr.mxu0 0.0
          %2680 = vmatpush1.msra.mxu0 0.0
          %2681 = vmatprep.subr.mxu0 0.0
          %2682 = vmatpush1.msra.mxu0 0.0
          %2683 = vmatprep.subr.mxu0 0.0
          %2684 = vmatpush1.msra.mxu0 0.0
          %2685 = vmatprep.subr.mxu0 0.0
          %2686 = vmatpush1.msra.mxu0 0.0
          %2687 = vmatprep.subr.mxu0 0.0
          %2688 = vmatpush1.msra.mxu0 0.0
          %2689 = vmatprep.subr.mxu0 0.0
          %2690 = vmatpush1.msra.mxu0 0.0
          %2691 = vmatprep.subr.mxu0 0.0
          %2692 = vmatpush1.msra.mxu0 0.0
          %2693 = vmatprep.subr.mxu0 0.0
          %2694 = vmatpush1.msra.mxu0 0.0
          %2695 = vmatprep.subr.mxu0 0.0
          %2696 = vmatpush1.msra.mxu0 0.0
          %2697 = vmatprep.subr.mxu0 0.0
          %2698 = vmatpush1.msra.mxu0 0.0
          %2699 = vmatprep.subr.mxu0 0.0
          %2700 = vmatpush1.msra.mxu0 0.0
          %2701 = vmatprep.subr.mxu0 0.0
          %2702 = vmatpush1.msra.mxu0 0.0
          %2703 = vmatprep.mubr.f32.mxu0 0.0
          %2704 = vmatmul.mubr.f32.gmra.mrb[0].mxu0 %v2634
          %v2705 = vpop.f32.mrb[0].mxu0
          %v2706 = vadd.f32 0.0, %v2705
          %v2707 = vpop.f32.mrb[0].mxu0
          %2708 = vmatprep.mubr.f32.mxu0 0.0
          %2709 = vmatmul.mubr.f32.gmra.mrb[0].mxu0 %v2637
          %v2710 = vpop.f32.mrb[0].mxu0
          %v2711 = vadd.f32 0.0, %v2710
          %v2712 = vpop.f32.mrb[0].mxu0
          %2713 = vdwg.mxu0
          %v2714 = vadd.f32 %v2614, %v2706
          %v2715 = vadd.f32 %v2619, %v2711
          %s2716 = sadd.s32 %s2431, 2
          %s2717 = smul.u32 %s2716, 24
          %s2718 = scalar_lea.vmem [#allocation3], %s2717
          %v2719 = vld [vmem:[%s2718] sm:$0xff]
          %v2720 = vld [vmem:[%s2718 + $0x8] sm:$0x1f]
          %s2721 = scalar_lea.vmem %s5, 192
          %v2722 = vld [vmem:[%s2721] sm:$0xff]
          %v2723 = vld [vmem:[%s2721 + $0x8] sm:$0xff]
          %v2724 = vld [vmem:[%s2721 + $0x10] sm:$0xff]
          %v2725 = vld [vmem:[%s2721 + $0x18] sm:$0xff]
          %v2726 = vld [vmem:[%s2721 + $0x20] sm:$0xff]
          %v2727 = vld [vmem:[%s2721 + $0x28] sm:$0xff]
          %v2728 = vld [vmem:[%s2721 + $0x30] sm:$0xff]
          %v2729 = vld [vmem:[%s2721 + $0x38] sm:$0xff]
          %v2731 = vsel %vm2459, %v2719, 0
          %v2734 = vsel %vm2459, %v2720, 0
          %2736 = vmatprep.subr.mxu0 0.0
          %2737 = vmatpush1.msra.mxu0 %v2722
          %2738 = vmatprep.subr.mxu0 0.0
          %2739 = vmatpush1.msra.mxu0 %v2723
          %2740 = vmatprep.subr.mxu0 0.0
          %2741 = vmatpush1.msra.mxu0 %v2724
          %2742 = vmatprep.subr.mxu0 0.0
          %2743 = vmatpush1.msra.mxu0 %v2725
          %2744 = vmatprep.subr.mxu0 0.0
          %2745 = vmatpush1.msra.mxu0 %v2726
          %2746 = vmatprep.subr.mxu0 0.0
          %2747 = vmatpush1.msra.mxu0 %v2727
          %2748 = vmatprep.subr.mxu0 0.0
          %2749 = vmatpush1.msra.mxu0 %v2728
          %2750 = vmatprep.subr.mxu0 0.0
          %2751 = vmatpush1.msra.mxu0 %v2729
          %2752 = vmatprep.subr.mxu0 0.0
          %2753 = vmatpush1.msra.mxu0 0.0
          %2754 = vmatprep.subr.mxu0 0.0
          %2755 = vmatpush1.msra.mxu0 0.0
          %2756 = vmatprep.subr.mxu0 0.0
          %2757 = vmatpush1.msra.mxu0 0.0
          %2758 = vmatprep.subr.mxu0 0.0
          %2759 = vmatpush1.msra.mxu0 0.0
          %2760 = vmatprep.subr.mxu0 0.0
          %2761 = vmatpush1.msra.mxu0 0.0
          %2762 = vmatprep.subr.mxu0 0.0
          %2763 = vmatpush1.msra.mxu0 0.0
          %2764 = vmatprep.subr.mxu0 0.0
          %2765 = vmatpush1.msra.mxu0 0.0
          %2766 = vmatprep.subr.mxu0 0.0
          %2767 = vmatpush1.msra.mxu0 0.0
          %2768 = vmatprep.subr.mxu0 0.0
          %2769 = vmatpush1.msra.mxu0 0.0
          %2770 = vmatprep.subr.mxu0 0.0
          %2771 = vmatpush1.msra.mxu0 0.0
          %2772 = vmatprep.subr.mxu0 0.0
          %2773 = vmatpush1.msra.mxu0 0.0
          %2774 = vmatprep.subr.mxu0 0.0
          %2775 = vmatpush1.msra.mxu0 0.0
          %2776 = vmatprep.subr.mxu0 0.0
          %2777 = vmatpush1.msra.mxu0 0.0
          %2778 = vmatprep.subr.mxu0 0.0
          %2779 = vmatpush1.msra.mxu0 0.0
          %2780 = vmatprep.subr.mxu0 0.0
          %2781 = vmatpush1.msra.mxu0 0.0
          %2782 = vmatprep.subr.mxu0 0.0
          %2783 = vmatpush1.msra.mxu0 0.0
          %2784 = vmatprep.subr.mxu0 0.0
          %2785 = vmatpush1.msra.mxu0 0.0
          %2786 = vmatprep.subr.mxu0 0.0
          %2787 = vmatpush1.msra.mxu0 0.0
          %2788 = vmatprep.subr.mxu0 0.0
          %2789 = vmatpush1.msra.mxu0 0.0
          %2790 = vmatprep.subr.mxu0 0.0
          %2791 = vmatpush1.msra.mxu0 0.0
          %2792 = vmatprep.subr.mxu0 0.0
          %2793 = vmatpush1.msra.mxu0 0.0
          %2794 = vmatprep.subr.mxu0 0.0
          %2795 = vmatpush1.msra.mxu0 0.0
          %2796 = vmatprep.subr.mxu0 0.0
          %2797 = vmatpush1.msra.mxu0 0.0
          %2798 = vmatprep.subr.mxu0 0.0
          %2799 = vmatpush1.msra.mxu0 0.0
          %2800 = vmatprep.mubr.f32.mxu0 0.0
          %2801 = vmatmul.mubr.f32.gmra.mrb[0].mxu0 %v2731
          %v2802 = vpop.f32.mrb[0].mxu0
          %v2803 = vadd.f32 0.0, %v2802
          %v2804 = vpop.f32.mrb[0].mxu0
          %2805 = vmatprep.mubr.f32.mxu0 0.0
          %2806 = vmatmul.mubr.f32.gmra.mrb[0].mxu0 %v2734
          %v2807 = vpop.f32.mrb[0].mxu0
          %v2808 = vadd.f32 0.0, %v2807
          %v2809 = vpop.f32.mrb[0].mxu0
          %2810 = vdwg.mxu0
          %v2811 = vadd.f32 %v2714, %v2803
          %v2812 = vadd.f32 %v2715, %v2808
          %v2813 = vld [vmem:[%s2718 + $0x2] sm:$0xff]
          %v2814 = vld [vmem:[%s2718 + $0xa] sm:$0x1f]
          %s2815 = scalar_lea.vmem %s5, 256
          %v2816 = vld [vmem:[%s2815] sm:$0xff]
          %v2817 = vld [vmem:[%s2815 + $0x8] sm:$0xff]
          %v2818 = vld [vmem:[%s2815 + $0x10] sm:$0xff]
          %v2819 = vld [vmem:[%s2815 + $0x18] sm:$0xff]
          %v2820 = vld [vmem:[%s2815 + $0x20] sm:$0xff]
          %v2821 = vld [vmem:[%s2815 + $0x28] sm:$0xff]
          %v2822 = vld [vmem:[%s2815 + $0x30] sm:$0xff]
          %v2823 = vld [vmem:[%s2815 + $0x38] sm:$0xff]
          %v2825 = vsel %vm2459, %v2813, 0
          %v2828 = vsel %vm2459, %v2814, 0
          %2830 = vmatprep.subr.mxu0 0.0
          %2831 = vmatpush1.msra.mxu0 %v2816
          %2832 = vmatprep.subr.mxu0 0.0
          %2833 = vmatpush1.msra.mxu0 %v2817
          %2834 = vmatprep.subr.mxu0 0.0
          %2835 = vmatpush1.msra.mxu0 %v2818
          %2836 = vmatprep.subr.mxu0 0.0
          %2837 = vmatpush1.msra.mxu0 %v2819
          %2838 = vmatprep.subr.mxu0 0.0
          %2839 = vmatpush1.msra.mxu0 %v2820
          %2840 = vmatprep.subr.mxu0 0.0
          %2841 = vmatpush1.msra.mxu0 %v2821
          %2842 = vmatprep.subr.mxu0 0.0
          %2843 = vmatpush1.msra.mxu0 %v2822
          %2844 = vmatprep.subr.mxu0 0.0
          %2845 = vmatpush1.msra.mxu0 %v2823
          %2846 = vmatprep.subr.mxu0 0.0
          %2847 = vmatpush1.msra.mxu0 0.0
          %2848 = vmatprep.subr.mxu0 0.0
          %2849 = vmatpush1.msra.mxu0 0.0
          %2850 = vmatprep.subr.mxu0 0.0
          %2851 = vmatpush1.msra.mxu0 0.0
          %2852 = vmatprep.subr.mxu0 0.0
          %2853 = vmatpush1.msra.mxu0 0.0
          %2854 = vmatprep.subr.mxu0 0.0
          %2855 = vmatpush1.msra.mxu0 0.0
          %2856 = vmatprep.subr.mxu0 0.0
          %2857 = vmatpush1.msra.mxu0 0.0
          %2858 = vmatprep.subr.mxu0 0.0
          %2859 = vmatpush1.msra.mxu0 0.0
          %2860 = vmatprep.subr.mxu0 0.0
          %2861 = vmatpush1.msra.mxu0 0.0
          %2862 = vmatprep.subr.mxu0 0.0
          %2863 = vmatpush1.msra.mxu0 0.0
          %2864 = vmatprep.subr.mxu0 0.0
          %2865 = vmatpush1.msra.mxu0 0.0
          %2866 = vmatprep.subr.mxu0 0.0
          %2867 = vmatpush1.msra.mxu0 0.0
          %2868 = vmatprep.subr.mxu0 0.0
          %2869 = vmatpush1.msra.mxu0 0.0
          %2870 = vmatprep.subr.mxu0 0.0
          %2871 = vmatpush1.msra.mxu0 0.0
          %2872 = vmatprep.subr.mxu0 0.0
          %2873 = vmatpush1.msra.mxu0 0.0
          %2874 = vmatprep.subr.mxu0 0.0
          %2875 = vmatpush1.msra.mxu0 0.0
          %2876 = vmatprep.subr.mxu0 0.0
          %2877 = vmatpush1.msra.mxu0 0.0
          %2878 = vmatprep.subr.mxu0 0.0
          %2879 = vmatpush1.msra.mxu0 0.0
          %2880 = vmatprep.subr.mxu0 0.0
          %2881 = vmatpush1.msra.mxu0 0.0
          %2882 = vmatprep.subr.mxu0 0.0
          %2883 = vmatpush1.msra.mxu0 0.0
          %2884 = vmatprep.subr.mxu0 0.0
          %2885 = vmatpush1.msra.mxu0 0.0
          %2886 = vmatprep.subr.mxu0 0.0
          %2887 = vmatpush1.msra.mxu0 0.0
          %2888 = vmatprep.subr.mxu0 0.0
          %2889 = vmatpush1.msra.mxu0 0.0
          %2890 = vmatprep.subr.mxu0 0.0
          %2891 = vmatpush1.msra.mxu0 0.0
          %2892 = vmatprep.subr.mxu0 0.0
          %2893 = vmatpush1.msra.mxu0 0.0
          %2894 = vmatprep.mubr.f32.mxu0 0.0
          %2895 = vmatmul.mubr.f32.gmra.mrb[0].mxu0 %v2825
          %v2896 = vpop.f32.mrb[0].mxu0
          %v2897 = vadd.f32 0.0, %v2896
          %v2898 = vpop.f32.mrb[0].mxu0
          %2899 = vmatprep.mubr.f32.mxu0 0.0
          %2900 = vmatmul.mubr.f32.gmra.mrb[0].mxu0 %v2828
          %v2901 = vpop.f32.mrb[0].mxu0
          %v2902 = vadd.f32 0.0, %v2901
          %v2903 = vpop.f32.mrb[0].mxu0
          %2904 = vdwg.mxu0
          %v2905 = vadd.f32 %v2811, %v2897
          %v2906 = vadd.f32 %v2812, %v2902
          %v2907 = vld [vmem:[%s2718 + $0x4] sm:$0xff]
          %v2908 = vld [vmem:[%s2718 + $0xc] sm:$0x1f]
          %s2909 = scalar_lea.vmem %s5, 320
          %v2910 = vld [vmem:[%s2909] sm:$0xff]
          %v2911 = vld [vmem:[%s2909 + $0x8] sm:$0xff]
          %v2912 = vld [vmem:[%s2909 + $0x10] sm:$0xff]
          %v2913 = vld [vmem:[%s2909 + $0x18] sm:$0xff]
          %v2914 = vld [vmem:[%s2909 + $0x20] sm:$0xff]
          %v2915 = vld [vmem:[%s2909 + $0x28] sm:$0xff]
          %v2916 = vld [vmem:[%s2909 + $0x30] sm:$0xff]
          %v2917 = vld [vmem:[%s2909 + $0x38] sm:$0xff]
          %v2919 = vsel %vm2459, %v2907, 0
          %v2922 = vsel %vm2459, %v2908, 0
          %2924 = vmatprep.subr.mxu0 0.0
          %2925 = vmatpush1.msra.mxu0 %v2910
          %2926 = vmatprep.subr.mxu0 0.0
          %2927 = vmatpush1.msra.mxu0 %v2911
          %2928 = vmatprep.subr.mxu0 0.0
          %2929 = vmatpush1.msra.mxu0 %v2912
          %2930 = vmatprep.subr.mxu0 0.0
          %2931 = vmatpush1.msra.mxu0 %v2913
          %2932 = vmatprep.subr.mxu0 0.0
          %2933 = vmatpush1.msra.mxu0 %v2914
          %2934 = vmatprep.subr.mxu0 0.0
          %2935 = vmatpush1.msra.mxu0 %v2915
          %2936 = vmatprep.subr.mxu0 0.0
          %2937 = vmatpush1.msra.mxu0 %v2916
          %2938 = vmatprep.subr.mxu0 0.0
          %2939 = vmatpush1.msra.mxu0 %v2917
          %2940 = vmatprep.subr.mxu0 0.0
          %2941 = vmatpush1.msra.mxu0 0.0
          %2942 = vmatprep.subr.mxu0 0.0
          %2943 = vmatpush1.msra.mxu0 0.0
          %2944 = vmatprep.subr.mxu0 0.0
          %2945 = vmatpush1.msra.mxu0 0.0
          %2946 = vmatprep.subr.mxu0 0.0
          %2947 = vmatpush1.msra.mxu0 0.0
          %2948 = vmatprep.subr.mxu0 0.0
          %2949 = vmatpush1.msra.mxu0 0.0
          %2950 = vmatprep.subr.mxu0 0.0
          %2951 = vmatpush1.msra.mxu0 0.0
          %2952 = vmatprep.subr.mxu0 0.0
          %2953 = vmatpush1.msra.mxu0 0.0
          %2954 = vmatprep.subr.mxu0 0.0
          %2955 = vmatpush1.msra.mxu0 0.0
          %2956 = vmatprep.subr.mxu0 0.0
          %2957 = vmatpush1.msra.mxu0 0.0
          %2958 = vmatprep.subr.mxu0 0.0
          %2959 = vmatpush1.msra.mxu0 0.0
          %2960 = vmatprep.subr.mxu0 0.0
          %2961 = vmatpush1.msra.mxu0 0.0
          %2962 = vmatprep.subr.mxu0 0.0
          %2963 = vmatpush1.msra.mxu0 0.0
          %2964 = vmatprep.subr.mxu0 0.0
          %2965 = vmatpush1.msra.mxu0 0.0
          %2966 = vmatprep.subr.mxu0 0.0
          %2967 = vmatpush1.msra.mxu0 0.0
          %2968 = vmatprep.subr.mxu0 0.0
          %2969 = vmatpush1.msra.mxu0 0.0
          %2970 = vmatprep.subr.mxu0 0.0
          %2971 = vmatpush1.msra.mxu0 0.0
          %2972 = vmatprep.subr.mxu0 0.0
          %2973 = vmatpush1.msra.mxu0 0.0
          %2974 = vmatprep.subr.mxu0 0.0
          %2975 = vmatpush1.msra.mxu0 0.0
          %2976 = vmatprep.subr.mxu0 0.0
          %2977 = vmatpush1.msra.mxu0 0.0
          %2978 = vmatprep.subr.mxu0 0.0
          %2979 = vmatpush1.msra.mxu0 0.0
          %2980 = vmatprep.subr.mxu0 0.0
          %2981 = vmatpush1.msra.mxu0 0.0
          %2982 = vmatprep.subr.mxu0 0.0
          %2983 = vmatpush1.msra.mxu0 0.0
          %2984 = vmatprep.subr.mxu0 0.0
          %2985 = vmatpush1.msra.mxu0 0.0
          %2986 = vmatprep.subr.mxu0 0.0
          %2987 = vmatpush1.msra.mxu0 0.0
          %2988 = vmatprep.mubr.f32.mxu0 0.0
          %2989 = vmatmul.mubr.f32.gmra.mrb[0].mxu0 %v2919
          %v2990 = vpop.f32.mrb[0].mxu0
          %v2991 = vadd.f32 0.0, %v2990
          %v2992 = vpop.f32.mrb[0].mxu0
          %2993 = vmatprep.mubr.f32.mxu0 0.0
          %2994 = vmatmul.mubr.f32.gmra.mrb[0].mxu0 %v2922
          %v2995 = vpop.f32.mrb[0].mxu0
          %v2996 = vadd.f32 0.0, %v2995
          %v2997 = vpop.f32.mrb[0].mxu0
          %2998 = vdwg.mxu0
          %v2999 = vadd.f32 %v2905, %v2991
          %v3000 = vadd.f32 %v2906, %v2996
          %s3001 = sadd.s32 %s2431, 4
          %s3002 = smul.u32 %s3001, 24
          %s3003 = scalar_lea.vmem [#allocation3], %s3002
          %v3004 = vld [vmem:[%s3003] sm:$0xff]
          %v3005 = vld [vmem:[%s3003 + $0x8] sm:$0x1f]
          %s3006 = scalar_lea.vmem %s5, 384
          %v3007 = vld [vmem:[%s3006] sm:$0xff]
          %v3008 = vld [vmem:[%s3006 + $0x8] sm:$0xff]
          %v3009 = vld [vmem:[%s3006 + $0x10] sm:$0xff]
          %v3010 = vld [vmem:[%s3006 + $0x18] sm:$0xff]
          %v3011 = vld [vmem:[%s3006 + $0x20] sm:$0xff]
          %v3012 = vld [vmem:[%s3006 + $0x28] sm:$0xff]
          %v3013 = vld [vmem:[%s3006 + $0x30] sm:$0xff]
          %v3014 = vld [vmem:[%s3006 + $0x38] sm:$0xff]
          %v3016 = vsel %vm2459, %v3004, 0
          %v3019 = vsel %vm2459, %v3005, 0
          %3021 = vmatprep.subr.mxu0 0.0
          %3022 = vmatpush1.msra.mxu0 %v3007
          %3023 = vmatprep.subr.mxu0 0.0
          %3024 = vmatpush1.msra.mxu0 %v3008
          %3025 = vmatprep.subr.mxu0 0.0
          %3026 = vmatpush1.msra.mxu0 %v3009
          %3027 = vmatprep.subr.mxu0 0.0
          %3028 = vmatpush1.msra.mxu0 %v3010
          %3029 = vmatprep.subr.mxu0 0.0
          %3030 = vmatpush1.msra.mxu0 %v3011
          %3031 = vmatprep.subr.mxu0 0.0
          %3032 = vmatpush1.msra.mxu0 %v3012
          %3033 = vmatprep.subr.mxu0 0.0
          %3034 = vmatpush1.msra.mxu0 %v3013
          %3035 = vmatprep.subr.mxu0 0.0
          %3036 = vmatpush1.msra.mxu0 %v3014
          %3037 = vmatprep.subr.mxu0 0.0
          %3038 = vmatpush1.msra.mxu0 0.0
          %3039 = vmatprep.subr.mxu0 0.0
          %3040 = vmatpush1.msra.mxu0 0.0
          %3041 = vmatprep.subr.mxu0 0.0
          %3042 = vmatpush1.msra.mxu0 0.0
          %3043 = vmatprep.subr.mxu0 0.0
          %3044 = vmatpush1.msra.mxu0 0.0
          %3045 = vmatprep.subr.mxu0 0.0
          %3046 = vmatpush1.msra.mxu0 0.0
          %3047 = vmatprep.subr.mxu0 0.0
          %3048 = vmatpush1.msra.mxu0 0.0
          %3049 = vmatprep.subr.mxu0 0.0
          %3050 = vmatpush1.msra.mxu0 0.0
          %3051 = vmatprep.subr.mxu0 0.0
          %3052 = vmatpush1.msra.mxu0 0.0
          %3053 = vmatprep.subr.mxu0 0.0
          %3054 = vmatpush1.msra.mxu0 0.0
          %3055 = vmatprep.subr.mxu0 0.0
          %3056 = vmatpush1.msra.mxu0 0.0
          %3057 = vmatprep.subr.mxu0 0.0
          %3058 = vmatpush1.msra.mxu0 0.0
          %3059 = vmatprep.subr.mxu0 0.0
          %3060 = vmatpush1.msra.mxu0 0.0
          %3061 = vmatprep.subr.mxu0 0.0
          %3062 = vmatpush1.msra.mxu0 0.0
          %3063 = vmatprep.subr.mxu0 0.0
          %3064 = vmatpush1.msra.mxu0 0.0
          %3065 = vmatprep.subr.mxu0 0.0
          %3066 = vmatpush1.msra.mxu0 0.0
          %3067 = vmatprep.subr.mxu0 0.0
          %3068 = vmatpush1.msra.mxu0 0.0
          %3069 = vmatprep.subr.mxu0 0.0
          %3070 = vmatpush1.msra.mxu0 0.0
          %3071 = vmatprep.subr.mxu0 0.0
          %3072 = vmatpush1.msra.mxu0 0.0
          %3073 = vmatprep.subr.mxu0 0.0
          %3074 = vmatpush1.msra.mxu0 0.0
          %3075 = vmatprep.subr.mxu0 0.0
          %3076 = vmatpush1.msra.mxu0 0.0
          %3077 = vmatprep.subr.mxu0 0.0
          %3078 = vmatpush1.msra.mxu0 0.0
          %3079 = vmatprep.subr.mxu0 0.0
          %3080 = vmatpush1.msra.mxu0 0.0
          %3081 = vmatprep.subr.mxu0 0.0
          %3082 = vmatpush1.msra.mxu0 0.0
          %3083 = vmatprep.subr.mxu0 0.0
          %3084 = vmatpush1.msra.mxu0 0.0
          %3085 = vmatprep.mubr.f32.mxu0 0.0
          %3086 = vmatmul.mubr.f32.gmra.mrb[0].mxu0 %v3016
          %v3087 = vpop.f32.mrb[0].mxu0
          %v3088 = vadd.f32 0.0, %v3087
          %v3089 = vpop.f32.mrb[0].mxu0
          %3090 = vmatprep.mubr.f32.mxu0 0.0
          %3091 = vmatmul.mubr.f32.gmra.mrb[0].mxu0 %v3019
          %v3092 = vpop.f32.mrb[0].mxu0
          %v3093 = vadd.f32 0.0, %v3092
          %v3094 = vpop.f32.mrb[0].mxu0
          %3095 = vdwg.mxu0
          %v3096 = vadd.f32 %v2999, %v3088
          %v3097 = vadd.f32 %v3000, %v3093
          %v3098 = vld [vmem:[%s3003 + $0x2] sm:$0xff]
          %v3099 = vld [vmem:[%s3003 + $0xa] sm:$0x1f]
          %s3100 = scalar_lea.vmem %s5, 448
          %v3101 = vld [vmem:[%s3100] sm:$0xff]
          %v3102 = vld [vmem:[%s3100 + $0x8] sm:$0xff]
          %v3103 = vld [vmem:[%s3100 + $0x10] sm:$0xff]
          %v3104 = vld [vmem:[%s3100 + $0x18] sm:$0xff]
          %v3105 = vld [vmem:[%s3100 + $0x20] sm:$0xff]
          %v3106 = vld [vmem:[%s3100 + $0x28] sm:$0xff]
          %v3107 = vld [vmem:[%s3100 + $0x30] sm:$0xff]
          %v3108 = vld [vmem:[%s3100 + $0x38] sm:$0xff]
          %v3110 = vsel %vm2459, %v3098, 0
          %v3113 = vsel %vm2459, %v3099, 0
          %3115 = vmatprep.subr.mxu0 0.0
          %3116 = vmatpush1.msra.mxu0 %v3101
          %3117 = vmatprep.subr.mxu0 0.0
          %3118 = vmatpush1.msra.mxu0 %v3102
          %3119 = vmatprep.subr.mxu0 0.0
          %3120 = vmatpush1.msra.mxu0 %v3103
          %3121 = vmatprep.subr.mxu0 0.0
          %3122 = vmatpush1.msra.mxu0 %v3104
          %3123 = vmatprep.subr.mxu0 0.0
          %3124 = vmatpush1.msra.mxu0 %v3105
          %3125 = vmatprep.subr.mxu0 0.0
          %3126 = vmatpush1.msra.mxu0 %v3106
          %3127 = vmatprep.subr.mxu0 0.0
          %3128 = vmatpush1.msra.mxu0 %v3107
          %3129 = vmatprep.subr.mxu0 0.0
          %3130 = vmatpush1.msra.mxu0 %v3108
          %3131 = vmatprep.subr.mxu0 0.0
          %3132 = vmatpush1.msra.mxu0 0.0
          %3133 = vmatprep.subr.mxu0 0.0
          %3134 = vmatpush1.msra.mxu0 0.0
          %3135 = vmatprep.subr.mxu0 0.0
          %3136 = vmatpush1.msra.mxu0 0.0
          %3137 = vmatprep.subr.mxu0 0.0
          %3138 = vmatpush1.msra.mxu0 0.0
          %3139 = vmatprep.subr.mxu0 0.0
          %3140 = vmatpush1.msra.mxu0 0.0
          %3141 = vmatprep.subr.mxu0 0.0
          %3142 = vmatpush1.msra.mxu0 0.0
          %3143 = vmatprep.subr.mxu0 0.0
          %3144 = vmatpush1.msra.mxu0 0.0
          %3145 = vmatprep.subr.mxu0 0.0
          %3146 = vmatpush1.msra.mxu0 0.0
          %3147 = vmatprep.subr.mxu0 0.0
          %3148 = vmatpush1.msra.mxu0 0.0
          %3149 = vmatprep.subr.mxu0 0.0
          %3150 = vmatpush1.msra.mxu0 0.0
          %3151 = vmatprep.subr.mxu0 0.0
          %3152 = vmatpush1.msra.mxu0 0.0
          %3153 = vmatprep.subr.mxu0 0.0
          %3154 = vmatpush1.msra.mxu0 0.0
          %3155 = vmatprep.subr.mxu0 0.0
          %3156 = vmatpush1.msra.mxu0 0.0
          %3157 = vmatprep.subr.mxu0 0.0
          %3158 = vmatpush1.msra.mxu0 0.0
          %3159 = vmatprep.subr.mxu0 0.0
          %3160 = vmatpush1.msra.mxu0 0.0
          %3161 = vmatprep.subr.mxu0 0.0
          %3162 = vmatpush1.msra.mxu0 0.0
          %3163 = vmatprep.subr.mxu0 0.0
          %3164 = vmatpush1.msra.mxu0 0.0
          %3165 = vmatprep.subr.mxu0 0.0
          %3166 = vmatpush1.msra.mxu0 0.0
          %3167 = vmatprep.subr.mxu0 0.0
          %3168 = vmatpush1.msra.mxu0 0.0
          %3169 = vmatprep.subr.mxu0 0.0
          %3170 = vmatpush1.msra.mxu0 0.0
          %3171 = vmatprep.subr.mxu0 0.0
          %3172 = vmatpush1.msra.mxu0 0.0
          %3173 = vmatprep.subr.mxu0 0.0
          %3174 = vmatpush1.msra.mxu0 0.0
          %3175 = vmatprep.subr.mxu0 0.0
          %3176 = vmatpush1.msra.mxu0 0.0
          %3177 = vmatprep.subr.mxu0 0.0
          %3178 = vmatpush1.msra.mxu0 0.0
          %3179 = vmatprep.mubr.f32.mxu0 0.0
          %3180 = vmatmul.mubr.f32.gmra.mrb[0].mxu0 %v3110
          %v3181 = vpop.f32.mrb[0].mxu0
          %v3182 = vadd.f32 0.0, %v3181
          %v3183 = vpop.f32.mrb[0].mxu0
          %3184 = vmatprep.mubr.f32.mxu0 0.0
          %3185 = vmatmul.mubr.f32.gmra.mrb[0].mxu0 %v3113
          %v3186 = vpop.f32.mrb[0].mxu0
          %v3187 = vadd.f32 0.0, %v3186
          %v3188 = vpop.f32.mrb[0].mxu0
          %3189 = vdwg.mxu0
          %v3190 = vadd.f32 %v3096, %v3182
          %v3191 = vadd.f32 %v3097, %v3187
          %v3192 = vld [vmem:[%s3003 + $0x4] sm:$0xff]
          %v3193 = vld [vmem:[%s3003 + $0xc] sm:$0x1f]
          %s3194 = scalar_lea.vmem %s5, 512
          %v3195 = vld [vmem:[%s3194] sm:$0xff]
          %v3196 = vld [vmem:[%s3194 + $0x8] sm:$0xff]
          %v3197 = vld [vmem:[%s3194 + $0x10] sm:$0xff]
          %v3198 = vld [vmem:[%s3194 + $0x18] sm:$0xff]
          %v3199 = vld [vmem:[%s3194 + $0x20] sm:$0xff]
          %v3200 = vld [vmem:[%s3194 + $0x28] sm:$0xff]
          %v3201 = vld [vmem:[%s3194 + $0x30] sm:$0xff]
          %v3202 = vld [vmem:[%s3194 + $0x38] sm:$0xff]
          %v3204 = vsel %vm2459, %v3192, 0
          %v3207 = vsel %vm2459, %v3193, 0
          %3209 = vmatprep.subr.mxu0 0.0
          %3210 = vmatpush1.msra.mxu0 %v3195
          %3211 = vmatprep.subr.mxu0 0.0
          %3212 = vmatpush1.msra.mxu0 %v3196
          %3213 = vmatprep.subr.mxu0 0.0
          %3214 = vmatpush1.msra.mxu0 %v3197
          %3215 = vmatprep.subr.mxu0 0.0
          %3216 = vmatpush1.msra.mxu0 %v3198
          %3217 = vmatprep.subr.mxu0 0.0
          %3218 = vmatpush1.msra.mxu0 %v3199
          %3219 = vmatprep.subr.mxu0 0.0
          %3220 = vmatpush1.msra.mxu0 %v3200
          %3221 = vmatprep.subr.mxu0 0.0
          %3222 = vmatpush1.msra.mxu0 %v3201
          %3223 = vmatprep.subr.mxu0 0.0
          %3224 = vmatpush1.msra.mxu0 %v3202
          %3225 = vmatprep.subr.mxu0 0.0
          %3226 = vmatpush1.msra.mxu0 0.0
          %3227 = vmatprep.subr.mxu0 0.0
          %3228 = vmatpush1.msra.mxu0 0.0
          %3229 = vmatprep.subr.mxu0 0.0
          %3230 = vmatpush1.msra.mxu0 0.0
          %3231 = vmatprep.subr.mxu0 0.0
          %3232 = vmatpush1.msra.mxu0 0.0
          %3233 = vmatprep.subr.mxu0 0.0
          %3234 = vmatpush1.msra.mxu0 0.0
          %3235 = vmatprep.subr.mxu0 0.0
          %3236 = vmatpush1.msra.mxu0 0.0
          %3237 = vmatprep.subr.mxu0 0.0
          %3238 = vmatpush1.msra.mxu0 0.0
          %3239 = vmatprep.subr.mxu0 0.0
          %3240 = vmatpush1.msra.mxu0 0.0
          %3241 = vmatprep.subr.mxu0 0.0
          %3242 = vmatpush1.msra.mxu0 0.0
          %3243 = vmatprep.subr.mxu0 0.0
          %3244 = vmatpush1.msra.mxu0 0.0
          %3245 = vmatprep.subr.mxu0 0.0
          %3246 = vmatpush1.msra.mxu0 0.0
          %3247 = vmatprep.subr.mxu0 0.0
          %3248 = vmatpush1.msra.mxu0 0.0
          %3249 = vmatprep.subr.mxu0 0.0
          %3250 = vmatpush1.msra.mxu0 0.0
          %3251 = vmatprep.subr.mxu0 0.0
          %3252 = vmatpush1.msra.mxu0 0.0
          %3253 = vmatprep.subr.mxu0 0.0
          %3254 = vmatpush1.msra.mxu0 0.0
          %3255 = vmatprep.subr.mxu0 0.0
          %3256 = vmatpush1.msra.mxu0 0.0
          %3257 = vmatprep.subr.mxu0 0.0
          %3258 = vmatpush1.msra.mxu0 0.0
          %3259 = vmatprep.subr.mxu0 0.0
          %3260 = vmatpush1.msra.mxu0 0.0
          %3261 = vmatprep.subr.mxu0 0.0
          %3262 = vmatpush1.msra.mxu0 0.0
          %3263 = vmatprep.subr.mxu0 0.0
          %3264 = vmatpush1.msra.mxu0 0.0
          %3265 = vmatprep.subr.mxu0 0.0
          %3266 = vmatpush1.msra.mxu0 0.0
          %3267 = vmatprep.subr.mxu0 0.0
          %3268 = vmatpush1.msra.mxu0 0.0
          %3269 = vmatprep.subr.mxu0 0.0
          %3270 = vmatpush1.msra.mxu0 0.0
          %3271 = vmatprep.subr.mxu0 0.0
          %3272 = vmatpush1.msra.mxu0 0.0
          %3273 = vmatprep.mubr.f32.mxu0 0.0
          %3274 = vmatmul.mubr.f32.gmra.mrb[0].mxu0 %v3204
          %v3275 = vpop.f32.mrb[0].mxu0
          %v3276 = vadd.f32 0.0, %v3275
          %v3277 = vpop.f32.mrb[0].mxu0
          %3278 = vmatprep.mubr.f32.mxu0 0.0
          %3279 = vmatmul.mubr.f32.gmra.mrb[0].mxu0 %v3207
          %v3280 = vpop.f32.mrb[0].mxu0
          %v3281 = vadd.f32 0.0, %v3280
          %v3282 = vpop.f32.mrb[0].mxu0
          %3283 = vdwg.mxu0
          %v3284 = vadd.f32 %v3190, %v3276
          %v3285 = vadd.f32 %v3191, %v3281
          %v3286 = vld [vmem:[%s6] sm:$0x1]
          %v3288 = vlaneseq
          %v3289 = vshrl.u32 %v3288, 7
          %v3290 = vsub.s32 0, %v3289
          %v3291 = vrot.slane %v3286, %v3290
          %v3293 = vadd.f32 %v3284, %v3291
          %v3294 = vadd.f32 %v3285, %v3291
          %v3295 = vmax.f32 %v3293, 0.0
          %v3296 = vmax.f32 %v3294, 0.0
          %s3297 = smul.u32 %s2431, 16
          %s3298 = scalar_lea.vmem [#allocation4], %s3297
          %3299 = vst.msk [vmem:[%s3298] sm:$0xff] %vm2459, %v3295
          %vm3300 = vcmask 520192
          %3301 = vst.msk [vmem:[%s3298 + $0x8] sm:$0x1f] %vm3300, %v3296
        $region83: #{dqn_forward.1} parent=63 // loop_footer
          %s2435 = sadd.s32 1, %s2431
        $region84: #{dqn_forward.1} parent=63 // loop_footer_branch
          %2430 = sbr.rel target = $region80
        $region85: #{dqn_forward.1} parent=63 // loop_exit
          _
        loop: start=0, step=1, limit=7
        $region86: #{dqn_forward.1} parent=63 // loop_pre_header
          _
        $region87: #{dqn_forward.1} parent=63 // loop_header
          %s3303 = sphi 0, %s3307
          %p3304 = scmp.ge.s32.totalorder %s3303, 7
          %v3308 = vphi 0.0, %v4721
          %v3309 = vphi 0.0, %v4722
          %v3310 = vphi 0.0, %v4723
          %v3311 = vphi 0.0, %v4724
        $region88: #{dqn_forward.1} parent=63 // loop_header_branch
          %3306 = sbr.rel (%p3304) target = $region92
        $region89: #{dqn_forward.1} parent=63 // loop_body
          %s3312 = smul.u32 %s3303, 2
          %s3313 = smul.u32 %s3312, 16
          %s3314 = scalar_lea.vmem [#allocation4], %s3313
          %v3315 = vld [vmem:[%s3314] sm:$0xff]
          %v3316 = vld [vmem:[%s3314 + $0x8] sm:$0x1f]
          %s3317 = smul.u32 %s3303, 7
          %s3318 = smul.u32 %s3317, 32
          %s3319 = smul.addr %s3318, 4
          %s3320 = scalar_lea.vmem %s7, %s3319
          %v3321 = vld [vmem:[%s3320] sm:$0xff]
          %v3322 = vld [vmem:[%s3320 + $0x8] sm:$0xff]
          %v3323 = vld [vmem:[%s3320 + $0x10] sm:$0xff]
          %v3324 = vld [vmem:[%s3320 + $0x18] sm:$0xff]
          %v3325 = vld [vmem:[%s3320 + $0x20] sm:$0xff]
          %v3326 = vld [vmem:[%s3320 + $0x28] sm:$0xff]
          %v3327 = vld [vmem:[%s3320 + $0x30] sm:$0xff]
          %v3328 = vld [vmem:[%s3320 + $0x38] sm:$0xff]
          %v3329 = vld [vmem:[%s3320 + $0x40] sm:$0xff]
          %v3330 = vld [vmem:[%s3320 + $0x48] sm:$0xff]
          %v3331 = vld [vmem:[%s3320 + $0x50] sm:$0xff]
          %v3332 = vld [vmem:[%s3320 + $0x58] sm:$0xff]
          %v3333 = vld [vmem:[%s3320 + $0x60] sm:$0xff]
          %v3334 = vld [vmem:[%s3320 + $0x68] sm:$0xff]
          %v3335 = vld [vmem:[%s3320 + $0x70] sm:$0xff]
          %v3336 = vld [vmem:[%s3320 + $0x78] sm:$0xff]
          %v3337 = vunpack.c.l.bf16 %v3321
          %v3338 = vunpack.c.h.bf16 %v3321
          %v3339 = vunpack.c.l.bf16 %v3322
          %v3340 = vunpack.c.h.bf16 %v3322
          %v3341 = vunpack.c.l.bf16 %v3323
          %v3342 = vunpack.c.h.bf16 %v3323
          %v3343 = vunpack.c.l.bf16 %v3324
          %v3344 = vunpack.c.h.bf16 %v3324
          %v3345 = vunpack.c.l.bf16 %v3325
          %v3346 = vunpack.c.h.bf16 %v3325
          %v3347 = vunpack.c.l.bf16 %v3326
          %v3348 = vunpack.c.h.bf16 %v3326
          %v3349 = vunpack.c.l.bf16 %v3327
          %v3350 = vunpack.c.h.bf16 %v3327
          %v3351 = vunpack.c.l.bf16 %v3328
          %v3352 = vunpack.c.h.bf16 %v3328
          %v3353 = vunpack.c.l.bf16 %v3329
          %v3354 = vunpack.c.h.bf16 %v3329
          %v3355 = vunpack.c.l.bf16 %v3330
          %v3356 = vunpack.c.h.bf16 %v3330
          %v3357 = vunpack.c.l.bf16 %v3331
          %v3358 = vunpack.c.h.bf16 %v3331
          %v3359 = vunpack.c.l.bf16 %v3332
          %v3360 = vunpack.c.h.bf16 %v3332
          %v3361 = vunpack.c.l.bf16 %v3333
          %v3362 = vunpack.c.h.bf16 %v3333
          %v3363 = vunpack.c.l.bf16 %v3334
          %v3364 = vunpack.c.h.bf16 %v3334
          %v3365 = vunpack.c.l.bf16 %v3335
          %v3366 = vunpack.c.h.bf16 %v3335
          %v3367 = vunpack.c.l.bf16 %v3336
          %v3368 = vunpack.c.h.bf16 %v3336
          %vm3369 = vcmask 523264
          %v3371 = vsel %vm3369, %v3315, 0
          %3373 = vmatprep.subr.mxu0 %v3338
          %3374 = vmatpush1.msra.mxu0 %v3337
          %3375 = vmatprep.subr.mxu0 %v3342
          %3376 = vmatpush1.msra.mxu0 %v3341
          %3377 = vmatprep.subr.mxu0 %v3346
          %3378 = vmatpush1.msra.mxu0 %v3345
          %3379 = vmatprep.subr.mxu0 %v3350
          %3380 = vmatpush1.msra.mxu0 %v3349
          %3381 = vmatprep.subr.mxu0 %v3354
          %3382 = vmatpush1.msra.mxu0 %v3353
          %3383 = vmatprep.subr.mxu0 %v3358
          %3384 = vmatpush1.msra.mxu0 %v3357
          %3385 = vmatprep.subr.mxu0 %v3362
          %3386 = vmatpush1.msra.mxu0 %v3361
          %3387 = vmatprep.subr.mxu0 %v3366
          %3388 = vmatpush1.msra.mxu0 %v3365
          %3389 = vmatprep.subr.mxu0 0.0
          %3390 = vmatpush1.msra.mxu0 0.0
          %3391 = vmatprep.subr.mxu0 0.0
          %3392 = vmatpush1.msra.mxu0 0.0
          %3393 = vmatprep.subr.mxu0 0.0
          %3394 = vmatpush1.msra.mxu0 0.0
          %3395 = vmatprep.subr.mxu0 0.0
          %3396 = vmatpush1.msra.mxu0 0.0
          %3397 = vmatprep.subr.mxu0 0.0
          %3398 = vmatpush1.msra.mxu0 0.0
          %3399 = vmatprep.subr.mxu0 0.0
          %3400 = vmatpush1.msra.mxu0 0.0
          %3401 = vmatprep.subr.mxu0 0.0
          %3402 = vmatpush1.msra.mxu0 0.0
          %3403 = vmatprep.subr.mxu0 0.0
          %3404 = vmatpush1.msra.mxu0 0.0
          %3405 = vmatprep.subr.mxu0 0.0
          %3406 = vmatpush1.msra.mxu0 0.0
          %3407 = vmatprep.subr.mxu0 0.0
          %3408 = vmatpush1.msra.mxu0 0.0
          %3409 = vmatprep.subr.mxu0 0.0
          %3410 = vmatpush1.msra.mxu0 0.0
          %3411 = vmatprep.subr.mxu0 0.0
          %3412 = vmatpush1.msra.mxu0 0.0
          %3413 = vmatprep.subr.mxu0 0.0
          %3414 = vmatpush1.msra.mxu0 0.0
          %3415 = vmatprep.subr.mxu0 0.0
          %3416 = vmatpush1.msra.mxu0 0.0
          %3417 = vmatprep.subr.mxu0 0.0
          %3418 = vmatpush1.msra.mxu0 0.0
          %3419 = vmatprep.subr.mxu0 0.0
          %3420 = vmatpush1.msra.mxu0 0.0
          %3421 = vmatprep.subr.mxu0 0.0
          %3422 = vmatpush1.msra.mxu0 0.0
          %3423 = vmatprep.subr.mxu0 0.0
          %3424 = vmatpush1.msra.mxu0 0.0
          %3425 = vmatprep.subr.mxu0 0.0
          %3426 = vmatpush1.msra.mxu0 0.0
          %3427 = vmatprep.subr.mxu0 0.0
          %3428 = vmatpush1.msra.mxu0 0.0
          %3429 = vmatprep.subr.mxu0 0.0
          %3430 = vmatpush1.msra.mxu0 0.0
          %3431 = vmatprep.subr.mxu0 0.0
          %3432 = vmatpush1.msra.mxu0 0.0
          %3433 = vmatprep.subr.mxu0 0.0
          %3434 = vmatpush1.msra.mxu0 0.0
          %3435 = vmatprep.subr.mxu0 0.0
          %3436 = vmatpush1.msra.mxu0 0.0
          %3437 = vmatprep.mubr.f32.mxu0 0.0
          %3438 = vmatmul.mubr.f32.gmra.mrb[0].mxu0 %v3371
          %v3439 = vpop.f32.mrb[0].mxu0
          %v3440 = vadd.f32 0.0, %v3439
          %v3441 = vpop.f32.mrb[0].mxu0
          %v3442 = vadd.f32 0.0, %v3441
          %3443 = vdwg.mxu0
          %3444 = vmatprep.subr.mxu0 %v3340
          %3445 = vmatpush1.msra.mxu0 %v3339
          %3446 = vmatprep.subr.mxu0 %v3344
          %3447 = vmatpush1.msra.mxu0 %v3343
          %3448 = vmatprep.subr.mxu0 %v3348
          %3449 = vmatpush1.msra.mxu0 %v3347
          %3450 = vmatprep.subr.mxu0 %v3352
          %3451 = vmatpush1.msra.mxu0 %v3351
          %3452 = vmatprep.subr.mxu0 %v3356
          %3453 = vmatpush1.msra.mxu0 %v3355
          %3454 = vmatprep.subr.mxu0 %v3360
          %3455 = vmatpush1.msra.mxu0 %v3359
          %3456 = vmatprep.subr.mxu0 %v3364
          %3457 = vmatpush1.msra.mxu0 %v3363
          %3458 = vmatprep.subr.mxu0 %v3368
          %3459 = vmatpush1.msra.mxu0 %v3367
          %3460 = vmatprep.subr.mxu0 0.0
          %3461 = vmatpush1.msra.mxu0 0.0
          %3462 = vmatprep.subr.mxu0 0.0
          %3463 = vmatpush1.msra.mxu0 0.0
          %3464 = vmatprep.subr.mxu0 0.0
          %3465 = vmatpush1.msra.mxu0 0.0
          %3466 = vmatprep.subr.mxu0 0.0
          %3467 = vmatpush1.msra.mxu0 0.0
          %3468 = vmatprep.subr.mxu0 0.0
          %3469 = vmatpush1.msra.mxu0 0.0
          %3470 = vmatprep.subr.mxu0 0.0
          %3471 = vmatpush1.msra.mxu0 0.0
          %3472 = vmatprep.subr.mxu0 0.0
          %3473 = vmatpush1.msra.mxu0 0.0
          %3474 = vmatprep.subr.mxu0 0.0
          %3475 = vmatpush1.msra.mxu0 0.0
          %3476 = vmatprep.subr.mxu0 0.0
          %3477 = vmatpush1.msra.mxu0 0.0
          %3478 = vmatprep.subr.mxu0 0.0
          %3479 = vmatpush1.msra.mxu0 0.0
          %3480 = vmatprep.subr.mxu0 0.0
          %3481 = vmatpush1.msra.mxu0 0.0
          %3482 = vmatprep.subr.mxu0 0.0
          %3483 = vmatpush1.msra.mxu0 0.0
          %3484 = vmatprep.subr.mxu0 0.0
          %3485 = vmatpush1.msra.mxu0 0.0
          %3486 = vmatprep.subr.mxu0 0.0
          %3487 = vmatpush1.msra.mxu0 0.0
          %3488 = vmatprep.subr.mxu0 0.0
          %3489 = vmatpush1.msra.mxu0 0.0
          %3490 = vmatprep.subr.mxu0 0.0
          %3491 = vmatpush1.msra.mxu0 0.0
          %3492 = vmatprep.subr.mxu0 0.0
          %3493 = vmatpush1.msra.mxu0 0.0
          %3494 = vmatprep.subr.mxu0 0.0
          %3495 = vmatpush1.msra.mxu0 0.0
          %3496 = vmatprep.subr.mxu0 0.0
          %3497 = vmatpush1.msra.mxu0 0.0
          %3498 = vmatprep.subr.mxu0 0.0
          %3499 = vmatpush1.msra.mxu0 0.0
          %3500 = vmatprep.subr.mxu0 0.0
          %3501 = vmatpush1.msra.mxu0 0.0
          %3502 = vmatprep.subr.mxu0 0.0
          %3503 = vmatpush1.msra.mxu0 0.0
          %3504 = vmatprep.subr.mxu0 0.0
          %3505 = vmatpush1.msra.mxu0 0.0
          %3506 = vmatprep.subr.mxu0 0.0
          %3507 = vmatpush1.msra.mxu0 0.0
          %3508 = vmatprep.mubr.f32.mxu0 0.0
          %3509 = vmatmul.mubr.f32.gmra.mrb[0].mxu0 %v3371
          %v3510 = vpop.f32.mrb[0].mxu0
          %v3511 = vadd.f32 0.0, %v3510
          %v3512 = vpop.f32.mrb[0].mxu0
          %v3513 = vadd.f32 0.0, %v3512
          %3514 = vdwg.mxu0
          %v3515 = vadd.f32 %v3308, %v3440
          %v3516 = vadd.f32 %v3309, %v3442
          %v3517 = vadd.f32 %v3310, %v3511
          %v3518 = vadd.f32 %v3311, %v3513
          %s3519 = sadd.s32 %s3317, 1
          %s3520 = smul.u32 %s3519, 32
          %s3521 = smul.addr %s3520, 4
          %s3522 = scalar_lea.vmem %s7, %s3521
          %v3523 = vld [vmem:[%s3522] sm:$0xff]
          %v3524 = vld [vmem:[%s3522 + $0x8] sm:$0xff]
          %v3525 = vld [vmem:[%s3522 + $0x10] sm:$0xff]
          %v3526 = vld [vmem:[%s3522 + $0x18] sm:$0xff]
          %v3527 = vld [vmem:[%s3522 + $0x20] sm:$0xff]
          %v3528 = vld [vmem:[%s3522 + $0x28] sm:$0xff]
          %v3529 = vld [vmem:[%s3522 + $0x30] sm:$0xff]
          %v3530 = vld [vmem:[%s3522 + $0x38] sm:$0xff]
          %v3531 = vld [vmem:[%s3522 + $0x40] sm:$0xff]
          %v3532 = vld [vmem:[%s3522 + $0x48] sm:$0xff]
          %v3533 = vld [vmem:[%s3522 + $0x50] sm:$0xff]
          %v3534 = vld [vmem:[%s3522 + $0x58] sm:$0xff]
          %v3535 = vld [vmem:[%s3522 + $0x60] sm:$0xff]
          %v3536 = vld [vmem:[%s3522 + $0x68] sm:$0xff]
          %v3537 = vld [vmem:[%s3522 + $0x70] sm:$0xff]
          %v3538 = vld [vmem:[%s3522 + $0x78] sm:$0xff]
          %v3539 = vunpack.c.l.bf16 %v3523
          %v3540 = vunpack.c.h.bf16 %v3523
          %v3541 = vunpack.c.l.bf16 %v3524
          %v3542 = vunpack.c.h.bf16 %v3524
          %v3543 = vunpack.c.l.bf16 %v3525
          %v3544 = vunpack.c.h.bf16 %v3525
          %v3545 = vunpack.c.l.bf16 %v3526
          %v3546 = vunpack.c.h.bf16 %v3526
          %v3547 = vunpack.c.l.bf16 %v3527
          %v3548 = vunpack.c.h.bf16 %v3527
          %v3549 = vunpack.c.l.bf16 %v3528
          %v3550 = vunpack.c.h.bf16 %v3528
          %v3551 = vunpack.c.l.bf16 %v3529
          %v3552 = vunpack.c.h.bf16 %v3529
          %v3553 = vunpack.c.l.bf16 %v3530
          %v3554 = vunpack.c.h.bf16 %v3530
          %v3555 = vunpack.c.l.bf16 %v3531
          %v3556 = vunpack.c.h.bf16 %v3531
          %v3557 = vunpack.c.l.bf16 %v3532
          %v3558 = vunpack.c.h.bf16 %v3532
          %v3559 = vunpack.c.l.bf16 %v3533
          %v3560 = vunpack.c.h.bf16 %v3533
          %v3561 = vunpack.c.l.bf16 %v3534
          %v3562 = vunpack.c.h.bf16 %v3534
          %v3563 = vunpack.c.l.bf16 %v3535
          %v3564 = vunpack.c.h.bf16 %v3535
          %v3565 = vunpack.c.l.bf16 %v3536
          %v3566 = vunpack.c.h.bf16 %v3536
          %v3567 = vunpack.c.l.bf16 %v3537
          %v3568 = vunpack.c.h.bf16 %v3537
          %v3569 = vunpack.c.l.bf16 %v3538
          %v3570 = vunpack.c.h.bf16 %v3538
          %v3571 = vrot.slane %v3315, 2
          %v3572 = vsel %vm3369, %v3571, 0
          %3574 = vmatprep.subr.mxu0 %v3540
          %3575 = vmatpush1.msra.mxu0 %v3539
          %3576 = vmatprep.subr.mxu0 %v3544
          %3577 = vmatpush1.msra.mxu0 %v3543
          %3578 = vmatprep.subr.mxu0 %v3548
          %3579 = vmatpush1.msra.mxu0 %v3547
          %3580 = vmatprep.subr.mxu0 %v3552
          %3581 = vmatpush1.msra.mxu0 %v3551
          %3582 = vmatprep.subr.mxu0 %v3556
          %3583 = vmatpush1.msra.mxu0 %v3555
          %3584 = vmatprep.subr.mxu0 %v3560
          %3585 = vmatpush1.msra.mxu0 %v3559
          %3586 = vmatprep.subr.mxu0 %v3564
          %3587 = vmatpush1.msra.mxu0 %v3563
          %3588 = vmatprep.subr.mxu0 %v3568
          %3589 = vmatpush1.msra.mxu0 %v3567
          %3590 = vmatprep.subr.mxu0 0.0
          %3591 = vmatpush1.msra.mxu0 0.0
          %3592 = vmatprep.subr.mxu0 0.0
          %3593 = vmatpush1.msra.mxu0 0.0
          %3594 = vmatprep.subr.mxu0 0.0
          %3595 = vmatpush1.msra.mxu0 0.0
          %3596 = vmatprep.subr.mxu0 0.0
          %3597 = vmatpush1.msra.mxu0 0.0
          %3598 = vmatprep.subr.mxu0 0.0
          %3599 = vmatpush1.msra.mxu0 0.0
          %3600 = vmatprep.subr.mxu0 0.0
          %3601 = vmatpush1.msra.mxu0 0.0
          %3602 = vmatprep.subr.mxu0 0.0
          %3603 = vmatpush1.msra.mxu0 0.0
          %3604 = vmatprep.subr.mxu0 0.0
          %3605 = vmatpush1.msra.mxu0 0.0
          %3606 = vmatprep.subr.mxu0 0.0
          %3607 = vmatpush1.msra.mxu0 0.0
          %3608 = vmatprep.subr.mxu0 0.0
          %3609 = vmatpush1.msra.mxu0 0.0
          %3610 = vmatprep.subr.mxu0 0.0
          %3611 = vmatpush1.msra.mxu0 0.0
          %3612 = vmatprep.subr.mxu0 0.0
          %3613 = vmatpush1.msra.mxu0 0.0
          %3614 = vmatprep.subr.mxu0 0.0
          %3615 = vmatpush1.msra.mxu0 0.0
          %3616 = vmatprep.subr.mxu0 0.0
          %3617 = vmatpush1.msra.mxu0 0.0
          %3618 = vmatprep.subr.mxu0 0.0
          %3619 = vmatpush1.msra.mxu0 0.0
          %3620 = vmatprep.subr.mxu0 0.0
          %3621 = vmatpush1.msra.mxu0 0.0
          %3622 = vmatprep.subr.mxu0 0.0
          %3623 = vmatpush1.msra.mxu0 0.0
          %3624 = vmatprep.subr.mxu0 0.0
          %3625 = vmatpush1.msra.mxu0 0.0
          %3626 = vmatprep.subr.mxu0 0.0
          %3627 = vmatpush1.msra.mxu0 0.0
          %3628 = vmatprep.subr.mxu0 0.0
          %3629 = vmatpush1.msra.mxu0 0.0
          %3630 = vmatprep.subr.mxu0 0.0
          %3631 = vmatpush1.msra.mxu0 0.0
          %3632 = vmatprep.subr.mxu0 0.0
          %3633 = vmatpush1.msra.mxu0 0.0
          %3634 = vmatprep.subr.mxu0 0.0
          %3635 = vmatpush1.msra.mxu0 0.0
          %3636 = vmatprep.subr.mxu0 0.0
          %3637 = vmatpush1.msra.mxu0 0.0
          %3638 = vmatprep.mubr.f32.mxu0 0.0
          %3639 = vmatmul.mubr.f32.gmra.mrb[0].mxu0 %v3572
          %v3640 = vpop.f32.mrb[0].mxu0
          %v3641 = vadd.f32 0.0, %v3640
          %v3642 = vpop.f32.mrb[0].mxu0
          %v3643 = vadd.f32 0.0, %v3642
          %3644 = vdwg.mxu0
          %3645 = vmatprep.subr.mxu0 %v3542
          %3646 = vmatpush1.msra.mxu0 %v3541
          %3647 = vmatprep.subr.mxu0 %v3546
          %3648 = vmatpush1.msra.mxu0 %v3545
          %3649 = vmatprep.subr.mxu0 %v3550
          %3650 = vmatpush1.msra.mxu0 %v3549
          %3651 = vmatprep.subr.mxu0 %v3554
          %3652 = vmatpush1.msra.mxu0 %v3553
          %3653 = vmatprep.subr.mxu0 %v3558
          %3654 = vmatpush1.msra.mxu0 %v3557
          %3655 = vmatprep.subr.mxu0 %v3562
          %3656 = vmatpush1.msra.mxu0 %v3561
          %3657 = vmatprep.subr.mxu0 %v3566
          %3658 = vmatpush1.msra.mxu0 %v3565
          %3659 = vmatprep.subr.mxu0 %v3570
          %3660 = vmatpush1.msra.mxu0 %v3569
          %3661 = vmatprep.subr.mxu0 0.0
          %3662 = vmatpush1.msra.mxu0 0.0
          %3663 = vmatprep.subr.mxu0 0.0
          %3664 = vmatpush1.msra.mxu0 0.0
          %3665 = vmatprep.subr.mxu0 0.0
          %3666 = vmatpush1.msra.mxu0 0.0
          %3667 = vmatprep.subr.mxu0 0.0
          %3668 = vmatpush1.msra.mxu0 0.0
          %3669 = vmatprep.subr.mxu0 0.0
          %3670 = vmatpush1.msra.mxu0 0.0
          %3671 = vmatprep.subr.mxu0 0.0
          %3672 = vmatpush1.msra.mxu0 0.0
          %3673 = vmatprep.subr.mxu0 0.0
          %3674 = vmatpush1.msra.mxu0 0.0
          %3675 = vmatprep.subr.mxu0 0.0
          %3676 = vmatpush1.msra.mxu0 0.0
          %3677 = vmatprep.subr.mxu0 0.0
          %3678 = vmatpush1.msra.mxu0 0.0
          %3679 = vmatprep.subr.mxu0 0.0
          %3680 = vmatpush1.msra.mxu0 0.0
          %3681 = vmatprep.subr.mxu0 0.0
          %3682 = vmatpush1.msra.mxu0 0.0
          %3683 = vmatprep.subr.mxu0 0.0
          %3684 = vmatpush1.msra.mxu0 0.0
          %3685 = vmatprep.subr.mxu0 0.0
          %3686 = vmatpush1.msra.mxu0 0.0
          %3687 = vmatprep.subr.mxu0 0.0
          %3688 = vmatpush1.msra.mxu0 0.0
          %3689 = vmatprep.subr.mxu0 0.0
          %3690 = vmatpush1.msra.mxu0 0.0
          %3691 = vmatprep.subr.mxu0 0.0
          %3692 = vmatpush1.msra.mxu0 0.0
          %3693 = vmatprep.subr.mxu0 0.0
          %3694 = vmatpush1.msra.mxu0 0.0
          %3695 = vmatprep.subr.mxu0 0.0
          %3696 = vmatpush1.msra.mxu0 0.0
          %3697 = vmatprep.subr.mxu0 0.0
          %3698 = vmatpush1.msra.mxu0 0.0
          %3699 = vmatprep.subr.mxu0 0.0
          %3700 = vmatpush1.msra.mxu0 0.0
          %3701 = vmatprep.subr.mxu0 0.0
          %3702 = vmatpush1.msra.mxu0 0.0
          %3703 = vmatprep.subr.mxu0 0.0
          %3704 = vmatpush1.msra.mxu0 0.0
          %3705 = vmatprep.subr.mxu0 0.0
          %3706 = vmatpush1.msra.mxu0 0.0
          %3707 = vmatprep.subr.mxu0 0.0
          %3708 = vmatpush1.msra.mxu0 0.0
          %3709 = vmatprep.mubr.f32.mxu0 0.0
          %3710 = vmatmul.mubr.f32.gmra.mrb[0].mxu0 %v3572
          %v3711 = vpop.f32.mrb[0].mxu0
          %v3712 = vadd.f32 0.0, %v3711
          %v3713 = vpop.f32.mrb[0].mxu0
          %v3714 = vadd.f32 0.0, %v3713
          %3715 = vdwg.mxu0
          %v3716 = vadd.f32 %v3515, %v3641
          %v3717 = vadd.f32 %v3516, %v3643
          %v3718 = vadd.f32 %v3517, %v3712
          %v3719 = vadd.f32 %v3518, %v3714
          %s3720 = sadd.s32 %s3317, 2
          %s3721 = smul.u32 %s3720, 32
          %s3722 = smul.addr %s3721, 4
          %s3723 = scalar_lea.vmem %s7, %s3722
          %v3724 = vld [vmem:[%s3723] sm:$0xff]
          %v3725 = vld [vmem:[%s3723 + $0x8] sm:$0xff]
          %v3726 = vld [vmem:[%s3723 + $0x10] sm:$0xff]
          %v3727 = vld [vmem:[%s3723 + $0x18] sm:$0xff]
          %v3728 = vld [vmem:[%s3723 + $0x20] sm:$0xff]
          %v3729 = vld [vmem:[%s3723 + $0x28] sm:$0xff]
          %v3730 = vld [vmem:[%s3723 + $0x30] sm:$0xff]
          %v3731 = vld [vmem:[%s3723 + $0x38] sm:$0xff]
          %v3732 = vld [vmem:[%s3723 + $0x40] sm:$0xff]
          %v3733 = vld [vmem:[%s3723 + $0x48] sm:$0xff]
          %v3734 = vld [vmem:[%s3723 + $0x50] sm:$0xff]
          %v3735 = vld [vmem:[%s3723 + $0x58] sm:$0xff]
          %v3736 = vld [vmem:[%s3723 + $0x60] sm:$0xff]
          %v3737 = vld [vmem:[%s3723 + $0x68] sm:$0xff]
          %v3738 = vld [vmem:[%s3723 + $0x70] sm:$0xff]
          %v3739 = vld [vmem:[%s3723 + $0x78] sm:$0xff]
          %v3740 = vunpack.c.l.bf16 %v3724
          %v3741 = vunpack.c.h.bf16 %v3724
          %v3742 = vunpack.c.l.bf16 %v3725
          %v3743 = vunpack.c.h.bf16 %v3725
          %v3744 = vunpack.c.l.bf16 %v3726
          %v3745 = vunpack.c.h.bf16 %v3726
          %v3746 = vunpack.c.l.bf16 %v3727
          %v3747 = vunpack.c.h.bf16 %v3727
          %v3748 = vunpack.c.l.bf16 %v3728
          %v3749 = vunpack.c.h.bf16 %v3728
          %v3750 = vunpack.c.l.bf16 %v3729
          %v3751 = vunpack.c.h.bf16 %v3729
          %v3752 = vunpack.c.l.bf16 %v3730
          %v3753 = vunpack.c.h.bf16 %v3730
          %v3754 = vunpack.c.l.bf16 %v3731
          %v3755 = vunpack.c.h.bf16 %v3731
          %v3756 = vunpack.c.l.bf16 %v3732
          %v3757 = vunpack.c.h.bf16 %v3732
          %v3758 = vunpack.c.l.bf16 %v3733
          %v3759 = vunpack.c.h.bf16 %v3733
          %v3760 = vunpack.c.l.bf16 %v3734
          %v3761 = vunpack.c.h.bf16 %v3734
          %v3762 = vunpack.c.l.bf16 %v3735
          %v3763 = vunpack.c.h.bf16 %v3735
          %v3764 = vunpack.c.l.bf16 %v3736
          %v3765 = vunpack.c.h.bf16 %v3736
          %v3766 = vunpack.c.l.bf16 %v3737
          %v3767 = vunpack.c.h.bf16 %v3737
          %v3768 = vunpack.c.l.bf16 %v3738
          %v3769 = vunpack.c.h.bf16 %v3738
          %v3770 = vunpack.c.l.bf16 %v3739
          %v3771 = vunpack.c.h.bf16 %v3739
          %v3772 = vrot.slane %v3315, 4
          %v3773 = vsel %vm3369, %v3772, 0
          %3775 = vmatprep.subr.mxu0 %v3741
          %3776 = vmatpush1.msra.mxu0 %v3740
          %3777 = vmatprep.subr.mxu0 %v3745
          %3778 = vmatpush1.msra.mxu0 %v3744
          %3779 = vmatprep.subr.mxu0 %v3749
          %3780 = vmatpush1.msra.mxu0 %v3748
          %3781 = vmatprep.subr.mxu0 %v3753
          %3782 = vmatpush1.msra.mxu0 %v3752
          %3783 = vmatprep.subr.mxu0 %v3757
          %3784 = vmatpush1.msra.mxu0 %v3756
          %3785 = vmatprep.subr.mxu0 %v3761
          %3786 = vmatpush1.msra.mxu0 %v3760
          %3787 = vmatprep.subr.mxu0 %v3765
          %3788 = vmatpush1.msra.mxu0 %v3764
          %3789 = vmatprep.subr.mxu0 %v3769
          %3790 = vmatpush1.msra.mxu0 %v3768
          %3791 = vmatprep.subr.mxu0 0.0
          %3792 = vmatpush1.msra.mxu0 0.0
          %3793 = vmatprep.subr.mxu0 0.0
          %3794 = vmatpush1.msra.mxu0 0.0
          %3795 = vmatprep.subr.mxu0 0.0
          %3796 = vmatpush1.msra.mxu0 0.0
          %3797 = vmatprep.subr.mxu0 0.0
          %3798 = vmatpush1.msra.mxu0 0.0
          %3799 = vmatprep.subr.mxu0 0.0
          %3800 = vmatpush1.msra.mxu0 0.0
          %3801 = vmatprep.subr.mxu0 0.0
          %3802 = vmatpush1.msra.mxu0 0.0
          %3803 = vmatprep.subr.mxu0 0.0
          %3804 = vmatpush1.msra.mxu0 0.0
          %3805 = vmatprep.subr.mxu0 0.0
          %3806 = vmatpush1.msra.mxu0 0.0
          %3807 = vmatprep.subr.mxu0 0.0
          %3808 = vmatpush1.msra.mxu0 0.0
          %3809 = vmatprep.subr.mxu0 0.0
          %3810 = vmatpush1.msra.mxu0 0.0
          %3811 = vmatprep.subr.mxu0 0.0
          %3812 = vmatpush1.msra.mxu0 0.0
          %3813 = vmatprep.subr.mxu0 0.0
          %3814 = vmatpush1.msra.mxu0 0.0
          %3815 = vmatprep.subr.mxu0 0.0
          %3816 = vmatpush1.msra.mxu0 0.0
          %3817 = vmatprep.subr.mxu0 0.0
          %3818 = vmatpush1.msra.mxu0 0.0
          %3819 = vmatprep.subr.mxu0 0.0
          %3820 = vmatpush1.msra.mxu0 0.0
          %3821 = vmatprep.subr.mxu0 0.0
          %3822 = vmatpush1.msra.mxu0 0.0
          %3823 = vmatprep.subr.mxu0 0.0
          %3824 = vmatpush1.msra.mxu0 0.0
          %3825 = vmatprep.subr.mxu0 0.0
          %3826 = vmatpush1.msra.mxu0 0.0
          %3827 = vmatprep.subr.mxu0 0.0
          %3828 = vmatpush1.msra.mxu0 0.0
          %3829 = vmatprep.subr.mxu0 0.0
          %3830 = vmatpush1.msra.mxu0 0.0
          %3831 = vmatprep.subr.mxu0 0.0
          %3832 = vmatpush1.msra.mxu0 0.0
          %3833 = vmatprep.subr.mxu0 0.0
          %3834 = vmatpush1.msra.mxu0 0.0
          %3835 = vmatprep.subr.mxu0 0.0
          %3836 = vmatpush1.msra.mxu0 0.0
          %3837 = vmatprep.subr.mxu0 0.0
          %3838 = vmatpush1.msra.mxu0 0.0
          %3839 = vmatprep.mubr.f32.mxu0 0.0
          %3840 = vmatmul.mubr.f32.gmra.mrb[0].mxu0 %v3773
          %v3841 = vpop.f32.mrb[0].mxu0
          %v3842 = vadd.f32 0.0, %v3841
          %v3843 = vpop.f32.mrb[0].mxu0
          %v3844 = vadd.f32 0.0, %v3843
          %3845 = vdwg.mxu0
          %3846 = vmatprep.subr.mxu0 %v3743
          %3847 = vmatpush1.msra.mxu0 %v3742
          %3848 = vmatprep.subr.mxu0 %v3747
          %3849 = vmatpush1.msra.mxu0 %v3746
          %3850 = vmatprep.subr.mxu0 %v3751
          %3851 = vmatpush1.msra.mxu0 %v3750
          %3852 = vmatprep.subr.mxu0 %v3755
          %3853 = vmatpush1.msra.mxu0 %v3754
          %3854 = vmatprep.subr.mxu0 %v3759
          %3855 = vmatpush1.msra.mxu0 %v3758
          %3856 = vmatprep.subr.mxu0 %v3763
          %3857 = vmatpush1.msra.mxu0 %v3762
          %3858 = vmatprep.subr.mxu0 %v3767
          %3859 = vmatpush1.msra.mxu0 %v3766
          %3860 = vmatprep.subr.mxu0 %v3771
          %3861 = vmatpush1.msra.mxu0 %v3770
          %3862 = vmatprep.subr.mxu0 0.0
          %3863 = vmatpush1.msra.mxu0 0.0
          %3864 = vmatprep.subr.mxu0 0.0
          %3865 = vmatpush1.msra.mxu0 0.0
          %3866 = vmatprep.subr.mxu0 0.0
          %3867 = vmatpush1.msra.mxu0 0.0
          %3868 = vmatprep.subr.mxu0 0.0
          %3869 = vmatpush1.msra.mxu0 0.0
          %3870 = vmatprep.subr.mxu0 0.0
          %3871 = vmatpush1.msra.mxu0 0.0
          %3872 = vmatprep.subr.mxu0 0.0
          %3873 = vmatpush1.msra.mxu0 0.0
          %3874 = vmatprep.subr.mxu0 0.0
          %3875 = vmatpush1.msra.mxu0 0.0
          %3876 = vmatprep.subr.mxu0 0.0
          %3877 = vmatpush1.msra.mxu0 0.0
          %3878 = vmatprep.subr.mxu0 0.0
          %3879 = vmatpush1.msra.mxu0 0.0
          %3880 = vmatprep.subr.mxu0 0.0
          %3881 = vmatpush1.msra.mxu0 0.0
          %3882 = vmatprep.subr.mxu0 0.0
          %3883 = vmatpush1.msra.mxu0 0.0
          %3884 = vmatprep.subr.mxu0 0.0
          %3885 = vmatpush1.msra.mxu0 0.0
          %3886 = vmatprep.subr.mxu0 0.0
          %3887 = vmatpush1.msra.mxu0 0.0
          %3888 = vmatprep.subr.mxu0 0.0
          %3889 = vmatpush1.msra.mxu0 0.0
          %3890 = vmatprep.subr.mxu0 0.0
          %3891 = vmatpush1.msra.mxu0 0.0
          %3892 = vmatprep.subr.mxu0 0.0
          %3893 = vmatpush1.msra.mxu0 0.0
          %3894 = vmatprep.subr.mxu0 0.0
          %3895 = vmatpush1.msra.mxu0 0.0
          %3896 = vmatprep.subr.mxu0 0.0
          %3897 = vmatpush1.msra.mxu0 0.0
          %3898 = vmatprep.subr.mxu0 0.0
          %3899 = vmatpush1.msra.mxu0 0.0
          %3900 = vmatprep.subr.mxu0 0.0
          %3901 = vmatpush1.msra.mxu0 0.0
          %3902 = vmatprep.subr.mxu0 0.0
          %3903 = vmatpush1.msra.mxu0 0.0
          %3904 = vmatprep.subr.mxu0 0.0
          %3905 = vmatpush1.msra.mxu0 0.0
          %3906 = vmatprep.subr.mxu0 0.0
          %3907 = vmatpush1.msra.mxu0 0.0
          %3908 = vmatprep.subr.mxu0 0.0
          %3909 = vmatpush1.msra.mxu0 0.0
          %3910 = vmatprep.mubr.f32.mxu0 0.0
          %3911 = vmatmul.mubr.f32.gmra.mrb[0].mxu0 %v3773
          %v3912 = vpop.f32.mrb[0].mxu0
          %v3913 = vadd.f32 0.0, %v3912
          %v3914 = vpop.f32.mrb[0].mxu0
          %v3915 = vadd.f32 0.0, %v3914
          %3916 = vdwg.mxu0
          %v3917 = vadd.f32 %v3716, %v3842
          %v3918 = vadd.f32 %v3717, %v3844
          %v3919 = vadd.f32 %v3718, %v3913
          %v3920 = vadd.f32 %v3719, %v3915
          %s3921 = sadd.s32 %s3317, 3
          %s3922 = smul.u32 %s3921, 32
          %s3923 = smul.addr %s3922, 4
          %s3924 = scalar_lea.vmem %s7, %s3923
          %v3925 = vld [vmem:[%s3924] sm:$0xff]
          %v3926 = vld [vmem:[%s3924 + $0x8] sm:$0xff]
          %v3927 = vld [vmem:[%s3924 + $0x10] sm:$0xff]
          %v3928 = vld [vmem:[%s3924 + $0x18] sm:$0xff]
          %v3929 = vld [vmem:[%s3924 + $0x20] sm:$0xff]
          %v3930 = vld [vmem:[%s3924 + $0x28] sm:$0xff]
          %v3931 = vld [vmem:[%s3924 + $0x30] sm:$0xff]
          %v3932 = vld [vmem:[%s3924 + $0x38] sm:$0xff]
          %v3933 = vld [vmem:[%s3924 + $0x40] sm:$0xff]
          %v3934 = vld [vmem:[%s3924 + $0x48] sm:$0xff]
          %v3935 = vld [vmem:[%s3924 + $0x50] sm:$0xff]
          %v3936 = vld [vmem:[%s3924 + $0x58] sm:$0xff]
          %v3937 = vld [vmem:[%s3924 + $0x60] sm:$0xff]
          %v3938 = vld [vmem:[%s3924 + $0x68] sm:$0xff]
          %v3939 = vld [vmem:[%s3924 + $0x70] sm:$0xff]
          %v3940 = vld [vmem:[%s3924 + $0x78] sm:$0xff]
          %v3941 = vunpack.c.l.bf16 %v3925
          %v3942 = vunpack.c.h.bf16 %v3925
          %v3943 = vunpack.c.l.bf16 %v3926
          %v3944 = vunpack.c.h.bf16 %v3926
          %v3945 = vunpack.c.l.bf16 %v3927
          %v3946 = vunpack.c.h.bf16 %v3927
          %v3947 = vunpack.c.l.bf16 %v3928
          %v3948 = vunpack.c.h.bf16 %v3928
          %v3949 = vunpack.c.l.bf16 %v3929
          %v3950 = vunpack.c.h.bf16 %v3929
          %v3951 = vunpack.c.l.bf16 %v3930
          %v3952 = vunpack.c.h.bf16 %v3930
          %v3953 = vunpack.c.l.bf16 %v3931
          %v3954 = vunpack.c.h.bf16 %v3931
          %v3955 = vunpack.c.l.bf16 %v3932
          %v3956 = vunpack.c.h.bf16 %v3932
          %v3957 = vunpack.c.l.bf16 %v3933
          %v3958 = vunpack.c.h.bf16 %v3933
          %v3959 = vunpack.c.l.bf16 %v3934
          %v3960 = vunpack.c.h.bf16 %v3934
          %v3961 = vunpack.c.l.bf16 %v3935
          %v3962 = vunpack.c.h.bf16 %v3935
          %v3963 = vunpack.c.l.bf16 %v3936
          %v3964 = vunpack.c.h.bf16 %v3936
          %v3965 = vunpack.c.l.bf16 %v3937
          %v3966 = vunpack.c.h.bf16 %v3937
          %v3967 = vunpack.c.l.bf16 %v3938
          %v3968 = vunpack.c.h.bf16 %v3938
          %v3969 = vunpack.c.l.bf16 %v3939
          %v3970 = vunpack.c.h.bf16 %v3939
          %v3971 = vunpack.c.l.bf16 %v3940
          %v3972 = vunpack.c.h.bf16 %v3940
          %v3973 = vrot.slane %v3315, 6
          %v3974 = vsel %vm3369, %v3973, 0
          %3976 = vmatprep.subr.mxu0 %v3942
          %3977 = vmatpush1.msra.mxu0 %v3941
          %3978 = vmatprep.subr.mxu0 %v3946
          %3979 = vmatpush1.msra.mxu0 %v3945
          %3980 = vmatprep.subr.mxu0 %v3950
          %3981 = vmatpush1.msra.mxu0 %v3949
          %3982 = vmatprep.subr.mxu0 %v3954
          %3983 = vmatpush1.msra.mxu0 %v3953
          %3984 = vmatprep.subr.mxu0 %v3958
          %3985 = vmatpush1.msra.mxu0 %v3957
          %3986 = vmatprep.subr.mxu0 %v3962
          %3987 = vmatpush1.msra.mxu0 %v3961
          %3988 = vmatprep.subr.mxu0 %v3966
          %3989 = vmatpush1.msra.mxu0 %v3965
          %3990 = vmatprep.subr.mxu0 %v3970
          %3991 = vmatpush1.msra.mxu0 %v3969
          %3992 = vmatprep.subr.mxu0 0.0
          %3993 = vmatpush1.msra.mxu0 0.0
          %3994 = vmatprep.subr.mxu0 0.0
          %3995 = vmatpush1.msra.mxu0 0.0
          %3996 = vmatprep.subr.mxu0 0.0
          %3997 = vmatpush1.msra.mxu0 0.0
          %3998 = vmatprep.subr.mxu0 0.0
          %3999 = vmatpush1.msra.mxu0 0.0
          %4000 = vmatprep.subr.mxu0 0.0
          %4001 = vmatpush1.msra.mxu0 0.0
          %4002 = vmatprep.subr.mxu0 0.0
          %4003 = vmatpush1.msra.mxu0 0.0
          %4004 = vmatprep.subr.mxu0 0.0
          %4005 = vmatpush1.msra.mxu0 0.0
          %4006 = vmatprep.subr.mxu0 0.0
          %4007 = vmatpush1.msra.mxu0 0.0
          %4008 = vmatprep.subr.mxu0 0.0
          %4009 = vmatpush1.msra.mxu0 0.0
          %4010 = vmatprep.subr.mxu0 0.0
          %4011 = vmatpush1.msra.mxu0 0.0
          %4012 = vmatprep.subr.mxu0 0.0
          %4013 = vmatpush1.msra.mxu0 0.0
          %4014 = vmatprep.subr.mxu0 0.0
          %4015 = vmatpush1.msra.mxu0 0.0
          %4016 = vmatprep.subr.mxu0 0.0
          %4017 = vmatpush1.msra.mxu0 0.0
          %4018 = vmatprep.subr.mxu0 0.0
          %4019 = vmatpush1.msra.mxu0 0.0
          %4020 = vmatprep.subr.mxu0 0.0
          %4021 = vmatpush1.msra.mxu0 0.0
          %4022 = vmatprep.subr.mxu0 0.0
          %4023 = vmatpush1.msra.mxu0 0.0
          %4024 = vmatprep.subr.mxu0 0.0
          %4025 = vmatpush1.msra.mxu0 0.0
          %4026 = vmatprep.subr.mxu0 0.0
          %4027 = vmatpush1.msra.mxu0 0.0
          %4028 = vmatprep.subr.mxu0 0.0
          %4029 = vmatpush1.msra.mxu0 0.0
          %4030 = vmatprep.subr.mxu0 0.0
          %4031 = vmatpush1.msra.mxu0 0.0
          %4032 = vmatprep.subr.mxu0 0.0
          %4033 = vmatpush1.msra.mxu0 0.0
          %4034 = vmatprep.subr.mxu0 0.0
          %4035 = vmatpush1.msra.mxu0 0.0
          %4036 = vmatprep.subr.mxu0 0.0
          %4037 = vmatpush1.msra.mxu0 0.0
          %4038 = vmatprep.subr.mxu0 0.0
          %4039 = vmatpush1.msra.mxu0 0.0
          %4040 = vmatprep.mubr.f32.mxu0 0.0
          %4041 = vmatmul.mubr.f32.gmra.mrb[0].mxu0 %v3974
          %v4042 = vpop.f32.mrb[0].mxu0
          %v4043 = vadd.f32 0.0, %v4042
          %v4044 = vpop.f32.mrb[0].mxu0
          %v4045 = vadd.f32 0.0, %v4044
          %4046 = vdwg.mxu0
          %4047 = vmatprep.subr.mxu0 %v3944
          %4048 = vmatpush1.msra.mxu0 %v3943
          %4049 = vmatprep.subr.mxu0 %v3948
          %4050 = vmatpush1.msra.mxu0 %v3947
          %4051 = vmatprep.subr.mxu0 %v3952
          %4052 = vmatpush1.msra.mxu0 %v3951
          %4053 = vmatprep.subr.mxu0 %v3956
          %4054 = vmatpush1.msra.mxu0 %v3955
          %4055 = vmatprep.subr.mxu0 %v3960
          %4056 = vmatpush1.msra.mxu0 %v3959
          %4057 = vmatprep.subr.mxu0 %v3964
          %4058 = vmatpush1.msra.mxu0 %v3963
          %4059 = vmatprep.subr.mxu0 %v3968
          %4060 = vmatpush1.msra.mxu0 %v3967
          %4061 = vmatprep.subr.mxu0 %v3972
          %4062 = vmatpush1.msra.mxu0 %v3971
          %4063 = vmatprep.subr.mxu0 0.0
          %4064 = vmatpush1.msra.mxu0 0.0
          %4065 = vmatprep.subr.mxu0 0.0
          %4066 = vmatpush1.msra.mxu0 0.0
          %4067 = vmatprep.subr.mxu0 0.0
          %4068 = vmatpush1.msra.mxu0 0.0
          %4069 = vmatprep.subr.mxu0 0.0
          %4070 = vmatpush1.msra.mxu0 0.0
          %4071 = vmatprep.subr.mxu0 0.0
          %4072 = vmatpush1.msra.mxu0 0.0
          %4073 = vmatprep.subr.mxu0 0.0
          %4074 = vmatpush1.msra.mxu0 0.0
          %4075 = vmatprep.subr.mxu0 0.0
          %4076 = vmatpush1.msra.mxu0 0.0
          %4077 = vmatprep.subr.mxu0 0.0
          %4078 = vmatpush1.msra.mxu0 0.0
          %4079 = vmatprep.subr.mxu0 0.0
          %4080 = vmatpush1.msra.mxu0 0.0
          %4081 = vmatprep.subr.mxu0 0.0
          %4082 = vmatpush1.msra.mxu0 0.0
          %4083 = vmatprep.subr.mxu0 0.0
          %4084 = vmatpush1.msra.mxu0 0.0
          %4085 = vmatprep.subr.mxu0 0.0
          %4086 = vmatpush1.msra.mxu0 0.0
          %4087 = vmatprep.subr.mxu0 0.0
          %4088 = vmatpush1.msra.mxu0 0.0
          %4089 = vmatprep.subr.mxu0 0.0
          %4090 = vmatpush1.msra.mxu0 0.0
          %4091 = vmatprep.subr.mxu0 0.0
          %4092 = vmatpush1.msra.mxu0 0.0
          %4093 = vmatprep.subr.mxu0 0.0
          %4094 = vmatpush1.msra.mxu0 0.0
          %4095 = vmatprep.subr.mxu0 0.0
          %4096 = vmatpush1.msra.mxu0 0.0
          %4097 = vmatprep.subr.mxu0 0.0
          %4098 = vmatpush1.msra.mxu0 0.0
          %4099 = vmatprep.subr.mxu0 0.0
          %4100 = vmatpush1.msra.mxu0 0.0
          %4101 = vmatprep.subr.mxu0 0.0
          %4102 = vmatpush1.msra.mxu0 0.0
          %4103 = vmatprep.subr.mxu0 0.0
          %4104 = vmatpush1.msra.mxu0 0.0
          %4105 = vmatprep.subr.mxu0 0.0
          %4106 = vmatpush1.msra.mxu0 0.0
          %4107 = vmatprep.subr.mxu0 0.0
          %4108 = vmatpush1.msra.mxu0 0.0
          %4109 = vmatprep.subr.mxu0 0.0
          %4110 = vmatpush1.msra.mxu0 0.0
          %4111 = vmatprep.mubr.f32.mxu0 0.0
          %4112 = vmatmul.mubr.f32.gmra.mrb[0].mxu0 %v3974
          %v4113 = vpop.f32.mrb[0].mxu0
          %v4114 = vadd.f32 0.0, %v4113
          %v4115 = vpop.f32.mrb[0].mxu0
          %v4116 = vadd.f32 0.0, %v4115
          %4117 = vdwg.mxu0
          %v4118 = vadd.f32 %v3917, %v4043
          %v4119 = vadd.f32 %v3918, %v4045
          %v4120 = vadd.f32 %v3919, %v4114
          %v4121 = vadd.f32 %v3920, %v4116
          %s4122 = sadd.s32 %s3317, 4
          %s4123 = smul.u32 %s4122, 32
          %s4124 = smul.addr %s4123, 4
          %s4125 = scalar_lea.vmem %s7, %s4124
          %v4126 = vld [vmem:[%s4125] sm:$0xff]
          %v4127 = vld [vmem:[%s4125 + $0x8] sm:$0xff]
          %v4128 = vld [vmem:[%s4125 + $0x10] sm:$0xff]
          %v4129 = vld [vmem:[%s4125 + $0x18] sm:$0xff]
          %v4130 = vld [vmem:[%s4125 + $0x20] sm:$0xff]
          %v4131 = vld [vmem:[%s4125 + $0x28] sm:$0xff]
          %v4132 = vld [vmem:[%s4125 + $0x30] sm:$0xff]
          %v4133 = vld [vmem:[%s4125 + $0x38] sm:$0xff]
          %v4134 = vld [vmem:[%s4125 + $0x40] sm:$0xff]
          %v4135 = vld [vmem:[%s4125 + $0x48] sm:$0xff]
          %v4136 = vld [vmem:[%s4125 + $0x50] sm:$0xff]
          %v4137 = vld [vmem:[%s4125 + $0x58] sm:$0xff]
          %v4138 = vld [vmem:[%s4125 + $0x60] sm:$0xff]
          %v4139 = vld [vmem:[%s4125 + $0x68] sm:$0xff]
          %v4140 = vld [vmem:[%s4125 + $0x70] sm:$0xff]
          %v4141 = vld [vmem:[%s4125 + $0x78] sm:$0xff]
          %v4142 = vunpack.c.l.bf16 %v4126
          %v4143 = vunpack.c.h.bf16 %v4126
          %v4144 = vunpack.c.l.bf16 %v4127
          %v4145 = vunpack.c.h.bf16 %v4127
          %v4146 = vunpack.c.l.bf16 %v4128
          %v4147 = vunpack.c.h.bf16 %v4128
          %v4148 = vunpack.c.l.bf16 %v4129
          %v4149 = vunpack.c.h.bf16 %v4129
          %v4150 = vunpack.c.l.bf16 %v4130
          %v4151 = vunpack.c.h.bf16 %v4130
          %v4152 = vunpack.c.l.bf16 %v4131
          %v4153 = vunpack.c.h.bf16 %v4131
          %v4154 = vunpack.c.l.bf16 %v4132
          %v4155 = vunpack.c.h.bf16 %v4132
          %v4156 = vunpack.c.l.bf16 %v4133
          %v4157 = vunpack.c.h.bf16 %v4133
          %v4158 = vunpack.c.l.bf16 %v4134
          %v4159 = vunpack.c.h.bf16 %v4134
          %v4160 = vunpack.c.l.bf16 %v4135
          %v4161 = vunpack.c.h.bf16 %v4135
          %v4162 = vunpack.c.l.bf16 %v4136
          %v4163 = vunpack.c.h.bf16 %v4136
          %v4164 = vunpack.c.l.bf16 %v4137
          %v4165 = vunpack.c.h.bf16 %v4137
          %v4166 = vunpack.c.l.bf16 %v4138
          %v4167 = vunpack.c.h.bf16 %v4138
          %v4168 = vunpack.c.l.bf16 %v4139
          %v4169 = vunpack.c.h.bf16 %v4139
          %v4170 = vunpack.c.l.bf16 %v4140
          %v4171 = vunpack.c.h.bf16 %v4140
          %v4172 = vunpack.c.l.bf16 %v4141
          %v4173 = vunpack.c.h.bf16 %v4141
          %v4175 = vsel %vm3369, %v3316, 0
          %4177 = vmatprep.subr.mxu0 %v4143
          %4178 = vmatpush1.msra.mxu0 %v4142
          %4179 = vmatprep.subr.mxu0 %v4147
          %4180 = vmatpush1.msra.mxu0 %v4146
          %4181 = vmatprep.subr.mxu0 %v4151
          %4182 = vmatpush1.msra.mxu0 %v4150
          %4183 = vmatprep.subr.mxu0 %v4155
          %4184 = vmatpush1.msra.mxu0 %v4154
          %4185 = vmatprep.subr.mxu0 %v4159
          %4186 = vmatpush1.msra.mxu0 %v4158
          %4187 = vmatprep.subr.mxu0 %v4163
          %4188 = vmatpush1.msra.mxu0 %v4162
          %4189 = vmatprep.subr.mxu0 %v4167
          %4190 = vmatpush1.msra.mxu0 %v4166
          %4191 = vmatprep.subr.mxu0 %v4171
          %4192 = vmatpush1.msra.mxu0 %v4170
          %4193 = vmatprep.subr.mxu0 0.0
          %4194 = vmatpush1.msra.mxu0 0.0
          %4195 = vmatprep.subr.mxu0 0.0
          %4196 = vmatpush1.msra.mxu0 0.0
          %4197 = vmatprep.subr.mxu0 0.0
          %4198 = vmatpush1.msra.mxu0 0.0
          %4199 = vmatprep.subr.mxu0 0.0
          %4200 = vmatpush1.msra.mxu0 0.0
          %4201 = vmatprep.subr.mxu0 0.0
          %4202 = vmatpush1.msra.mxu0 0.0
          %4203 = vmatprep.subr.mxu0 0.0
          %4204 = vmatpush1.msra.mxu0 0.0
          %4205 = vmatprep.subr.mxu0 0.0
          %4206 = vmatpush1.msra.mxu0 0.0
          %4207 = vmatprep.subr.mxu0 0.0
          %4208 = vmatpush1.msra.mxu0 0.0
          %4209 = vmatprep.subr.mxu0 0.0
          %4210 = vmatpush1.msra.mxu0 0.0
          %4211 = vmatprep.subr.mxu0 0.0
          %4212 = vmatpush1.msra.mxu0 0.0
          %4213 = vmatprep.subr.mxu0 0.0
          %4214 = vmatpush1.msra.mxu0 0.0
          %4215 = vmatprep.subr.mxu0 0.0
          %4216 = vmatpush1.msra.mxu0 0.0
          %4217 = vmatprep.subr.mxu0 0.0
          %4218 = vmatpush1.msra.mxu0 0.0
          %4219 = vmatprep.subr.mxu0 0.0
          %4220 = vmatpush1.msra.mxu0 0.0
          %4221 = vmatprep.subr.mxu0 0.0
          %4222 = vmatpush1.msra.mxu0 0.0
          %4223 = vmatprep.subr.mxu0 0.0
          %4224 = vmatpush1.msra.mxu0 0.0
          %4225 = vmatprep.subr.mxu0 0.0
          %4226 = vmatpush1.msra.mxu0 0.0
          %4227 = vmatprep.subr.mxu0 0.0
          %4228 = vmatpush1.msra.mxu0 0.0
          %4229 = vmatprep.subr.mxu0 0.0
          %4230 = vmatpush1.msra.mxu0 0.0
          %4231 = vmatprep.subr.mxu0 0.0
          %4232 = vmatpush1.msra.mxu0 0.0
          %4233 = vmatprep.subr.mxu0 0.0
          %4234 = vmatpush1.msra.mxu0 0.0
          %4235 = vmatprep.subr.mxu0 0.0
          %4236 = vmatpush1.msra.mxu0 0.0
          %4237 = vmatprep.subr.mxu0 0.0
          %4238 = vmatpush1.msra.mxu0 0.0
          %4239 = vmatprep.subr.mxu0 0.0
          %4240 = vmatpush1.msra.mxu0 0.0
          %4241 = vmatprep.mubr.f32.mxu0 0.0
          %4242 = vmatmul.mubr.f32.gmra.mrb[0].mxu0 %v4175
          %v4243 = vpop.f32.mrb[0].mxu0
          %v4244 = vadd.f32 0.0, %v4243
          %v4245 = vpop.f32.mrb[0].mxu0
          %v4246 = vadd.f32 0.0, %v4245
          %4247 = vdwg.mxu0
          %4248 = vmatprep.subr.mxu0 %v4145
          %4249 = vmatpush1.msra.mxu0 %v4144
          %4250 = vmatprep.subr.mxu0 %v4149
          %4251 = vmatpush1.msra.mxu0 %v4148
          %4252 = vmatprep.subr.mxu0 %v4153
          %4253 = vmatpush1.msra.mxu0 %v4152
          %4254 = vmatprep.subr.mxu0 %v4157
          %4255 = vmatpush1.msra.mxu0 %v4156
          %4256 = vmatprep.subr.mxu0 %v4161
          %4257 = vmatpush1.msra.mxu0 %v4160
          %4258 = vmatprep.subr.mxu0 %v4165
          %4259 = vmatpush1.msra.mxu0 %v4164
          %4260 = vmatprep.subr.mxu0 %v4169
          %4261 = vmatpush1.msra.mxu0 %v4168
          %4262 = vmatprep.subr.mxu0 %v4173
          %4263 = vmatpush1.msra.mxu0 %v4172
          %4264 = vmatprep.subr.mxu0 0.0
          %4265 = vmatpush1.msra.mxu0 0.0
          %4266 = vmatprep.subr.mxu0 0.0
          %4267 = vmatpush1.msra.mxu0 0.0
          %4268 = vmatprep.subr.mxu0 0.0
          %4269 = vmatpush1.msra.mxu0 0.0
          %4270 = vmatprep.subr.mxu0 0.0
          %4271 = vmatpush1.msra.mxu0 0.0
          %4272 = vmatprep.subr.mxu0 0.0
          %4273 = vmatpush1.msra.mxu0 0.0
          %4274 = vmatprep.subr.mxu0 0.0
          %4275 = vmatpush1.msra.mxu0 0.0
          %4276 = vmatprep.subr.mxu0 0.0
          %4277 = vmatpush1.msra.mxu0 0.0
          %4278 = vmatprep.subr.mxu0 0.0
          %4279 = vmatpush1.msra.mxu0 0.0
          %4280 = vmatprep.subr.mxu0 0.0
          %4281 = vmatpush1.msra.mxu0 0.0
          %4282 = vmatprep.subr.mxu0 0.0
          %4283 = vmatpush1.msra.mxu0 0.0
          %4284 = vmatprep.subr.mxu0 0.0
          %4285 = vmatpush1.msra.mxu0 0.0
          %4286 = vmatprep.subr.mxu0 0.0
          %4287 = vmatpush1.msra.mxu0 0.0
          %4288 = vmatprep.subr.mxu0 0.0
          %4289 = vmatpush1.msra.mxu0 0.0
          %4290 = vmatprep.subr.mxu0 0.0
          %4291 = vmatpush1.msra.mxu0 0.0
          %4292 = vmatprep.subr.mxu0 0.0
          %4293 = vmatpush1.msra.mxu0 0.0
          %4294 = vmatprep.subr.mxu0 0.0
          %4295 = vmatpush1.msra.mxu0 0.0
          %4296 = vmatprep.subr.mxu0 0.0
          %4297 = vmatpush1.msra.mxu0 0.0
          %4298 = vmatprep.subr.mxu0 0.0
          %4299 = vmatpush1.msra.mxu0 0.0
          %4300 = vmatprep.subr.mxu0 0.0
          %4301 = vmatpush1.msra.mxu0 0.0
          %4302 = vmatprep.subr.mxu0 0.0
          %4303 = vmatpush1.msra.mxu0 0.0
          %4304 = vmatprep.subr.mxu0 0.0
          %4305 = vmatpush1.msra.mxu0 0.0
          %4306 = vmatprep.subr.mxu0 0.0
          %4307 = vmatpush1.msra.mxu0 0.0
          %4308 = vmatprep.subr.mxu0 0.0
          %4309 = vmatpush1.msra.mxu0 0.0
          %4310 = vmatprep.subr.mxu0 0.0
          %4311 = vmatpush1.msra.mxu0 0.0
          %4312 = vmatprep.mubr.f32.mxu0 0.0
          %4313 = vmatmul.mubr.f32.gmra.mrb[0].mxu0 %v4175
          %v4314 = vpop.f32.mrb[0].mxu0
          %v4315 = vadd.f32 0.0, %v4314
          %v4316 = vpop.f32.mrb[0].mxu0
          %v4317 = vadd.f32 0.0, %v4316
          %4318 = vdwg.mxu0
          %v4319 = vadd.f32 %v4118, %v4244
          %v4320 = vadd.f32 %v4119, %v4246
          %v4321 = vadd.f32 %v4120, %v4315
          %v4322 = vadd.f32 %v4121, %v4317
          %s4323 = sadd.s32 %s3317, 5
          %s4324 = smul.u32 %s4323, 32
          %s4325 = smul.addr %s4324, 4
          %s4326 = scalar_lea.vmem %s7, %s4325
          %v4327 = vld [vmem:[%s4326] sm:$0xff]
          %v4328 = vld [vmem:[%s4326 + $0x8] sm:$0xff]
          %v4329 = vld [vmem:[%s4326 + $0x10] sm:$0xff]
          %v4330 = vld [vmem:[%s4326 + $0x18] sm:$0xff]
          %v4331 = vld [vmem:[%s4326 + $0x20] sm:$0xff]
          %v4332 = vld [vmem:[%s4326 + $0x28] sm:$0xff]
          %v4333 = vld [vmem:[%s4326 + $0x30] sm:$0xff]
          %v4334 = vld [vmem:[%s4326 + $0x38] sm:$0xff]
          %v4335 = vld [vmem:[%s4326 + $0x40] sm:$0xff]
          %v4336 = vld [vmem:[%s4326 + $0x48] sm:$0xff]
          %v4337 = vld [vmem:[%s4326 + $0x50] sm:$0xff]
          %v4338 = vld [vmem:[%s4326 + $0x58] sm:$0xff]
          %v4339 = vld [vmem:[%s4326 + $0x60] sm:$0xff]
          %v4340 = vld [vmem:[%s4326 + $0x68] sm:$0xff]
          %v4341 = vld [vmem:[%s4326 + $0x70] sm:$0xff]
          %v4342 = vld [vmem:[%s4326 + $0x78] sm:$0xff]
          %v4343 = vunpack.c.l.bf16 %v4327
          %v4344 = vunpack.c.h.bf16 %v4327
          %v4345 = vunpack.c.l.bf16 %v4328
          %v4346 = vunpack.c.h.bf16 %v4328
          %v4347 = vunpack.c.l.bf16 %v4329
          %v4348 = vunpack.c.h.bf16 %v4329
          %v4349 = vunpack.c.l.bf16 %v4330
          %v4350 = vunpack.c.h.bf16 %v4330
          %v4351 = vunpack.c.l.bf16 %v4331
          %v4352 = vunpack.c.h.bf16 %v4331
          %v4353 = vunpack.c.l.bf16 %v4332
          %v4354 = vunpack.c.h.bf16 %v4332
          %v4355 = vunpack.c.l.bf16 %v4333
          %v4356 = vunpack.c.h.bf16 %v4333
          %v4357 = vunpack.c.l.bf16 %v4334
          %v4358 = vunpack.c.h.bf16 %v4334
          %v4359 = vunpack.c.l.bf16 %v4335
          %v4360 = vunpack.c.h.bf16 %v4335
          %v4361 = vunpack.c.l.bf16 %v4336
          %v4362 = vunpack.c.h.bf16 %v4336
          %v4363 = vunpack.c.l.bf16 %v4337
          %v4364 = vunpack.c.h.bf16 %v4337
          %v4365 = vunpack.c.l.bf16 %v4338
          %v4366 = vunpack.c.h.bf16 %v4338
          %v4367 = vunpack.c.l.bf16 %v4339
          %v4368 = vunpack.c.h.bf16 %v4339
          %v4369 = vunpack.c.l.bf16 %v4340
          %v4370 = vunpack.c.h.bf16 %v4340
          %v4371 = vunpack.c.l.bf16 %v4341
          %v4372 = vunpack.c.h.bf16 %v4341
          %v4373 = vunpack.c.l.bf16 %v4342
          %v4374 = vunpack.c.h.bf16 %v4342
          %v4375 = vrot.slane %v3316, 2
          %v4376 = vsel %vm3369, %v4375, 0
          %4378 = vmatprep.subr.mxu0 %v4344
          %4379 = vmatpush1.msra.mxu0 %v4343
          %4380 = vmatprep.subr.mxu0 %v4348
          %4381 = vmatpush1.msra.mxu0 %v4347
          %4382 = vmatprep.subr.mxu0 %v4352
          %4383 = vmatpush1.msra.mxu0 %v4351
          %4384 = vmatprep.subr.mxu0 %v4356
          %4385 = vmatpush1.msra.mxu0 %v4355
          %4386 = vmatprep.subr.mxu0 %v4360
          %4387 = vmatpush1.msra.mxu0 %v4359
          %4388 = vmatprep.subr.mxu0 %v4364
          %4389 = vmatpush1.msra.mxu0 %v4363
          %4390 = vmatprep.subr.mxu0 %v4368
          %4391 = vmatpush1.msra.mxu0 %v4367
          %4392 = vmatprep.subr.mxu0 %v4372
          %4393 = vmatpush1.msra.mxu0 %v4371
          %4394 = vmatprep.subr.mxu0 0.0
          %4395 = vmatpush1.msra.mxu0 0.0
          %4396 = vmatprep.subr.mxu0 0.0
          %4397 = vmatpush1.msra.mxu0 0.0
          %4398 = vmatprep.subr.mxu0 0.0
          %4399 = vmatpush1.msra.mxu0 0.0
          %4400 = vmatprep.subr.mxu0 0.0
          %4401 = vmatpush1.msra.mxu0 0.0
          %4402 = vmatprep.subr.mxu0 0.0
          %4403 = vmatpush1.msra.mxu0 0.0
          %4404 = vmatprep.subr.mxu0 0.0
          %4405 = vmatpush1.msra.mxu0 0.0
          %4406 = vmatprep.subr.mxu0 0.0
          %4407 = vmatpush1.msra.mxu0 0.0
          %4408 = vmatprep.subr.mxu0 0.0
          %4409 = vmatpush1.msra.mxu0 0.0
          %4410 = vmatprep.subr.mxu0 0.0
          %4411 = vmatpush1.msra.mxu0 0.0
          %4412 = vmatprep.subr.mxu0 0.0
          %4413 = vmatpush1.msra.mxu0 0.0
          %4414 = vmatprep.subr.mxu0 0.0
          %4415 = vmatpush1.msra.mxu0 0.0
          %4416 = vmatprep.subr.mxu0 0.0
          %4417 = vmatpush1.msra.mxu0 0.0
          %4418 = vmatprep.subr.mxu0 0.0
          %4419 = vmatpush1.msra.mxu0 0.0
          %4420 = vmatprep.subr.mxu0 0.0
          %4421 = vmatpush1.msra.mxu0 0.0
          %4422 = vmatprep.subr.mxu0 0.0
          %4423 = vmatpush1.msra.mxu0 0.0
          %4424 = vmatprep.subr.mxu0 0.0
          %4425 = vmatpush1.msra.mxu0 0.0
          %4426 = vmatprep.subr.mxu0 0.0
          %4427 = vmatpush1.msra.mxu0 0.0
          %4428 = vmatprep.subr.mxu0 0.0
          %4429 = vmatpush1.msra.mxu0 0.0
          %4430 = vmatprep.subr.mxu0 0.0
          %4431 = vmatpush1.msra.mxu0 0.0
          %4432 = vmatprep.subr.mxu0 0.0
          %4433 = vmatpush1.msra.mxu0 0.0
          %4434 = vmatprep.subr.mxu0 0.0
          %4435 = vmatpush1.msra.mxu0 0.0
          %4436 = vmatprep.subr.mxu0 0.0
          %4437 = vmatpush1.msra.mxu0 0.0
          %4438 = vmatprep.subr.mxu0 0.0
          %4439 = vmatpush1.msra.mxu0 0.0
          %4440 = vmatprep.subr.mxu0 0.0
          %4441 = vmatpush1.msra.mxu0 0.0
          %4442 = vmatprep.mubr.f32.mxu0 0.0
          %4443 = vmatmul.mubr.f32.gmra.mrb[0].mxu0 %v4376
          %v4444 = vpop.f32.mrb[0].mxu0
          %v4445 = vadd.f32 0.0, %v4444
          %v4446 = vpop.f32.mrb[0].mxu0
          %v4447 = vadd.f32 0.0, %v4446
          %4448 = vdwg.mxu0
          %4449 = vmatprep.subr.mxu0 %v4346
          %4450 = vmatpush1.msra.mxu0 %v4345
          %4451 = vmatprep.subr.mxu0 %v4350
          %4452 = vmatpush1.msra.mxu0 %v4349
          %4453 = vmatprep.subr.mxu0 %v4354
          %4454 = vmatpush1.msra.mxu0 %v4353
          %4455 = vmatprep.subr.mxu0 %v4358
          %4456 = vmatpush1.msra.mxu0 %v4357
          %4457 = vmatprep.subr.mxu0 %v4362
          %4458 = vmatpush1.msra.mxu0 %v4361
          %4459 = vmatprep.subr.mxu0 %v4366
          %4460 = vmatpush1.msra.mxu0 %v4365
          %4461 = vmatprep.subr.mxu0 %v4370
          %4462 = vmatpush1.msra.mxu0 %v4369
          %4463 = vmatprep.subr.mxu0 %v4374
          %4464 = vmatpush1.msra.mxu0 %v4373
          %4465 = vmatprep.subr.mxu0 0.0
          %4466 = vmatpush1.msra.mxu0 0.0
          %4467 = vmatprep.subr.mxu0 0.0
          %4468 = vmatpush1.msra.mxu0 0.0
          %4469 = vmatprep.subr.mxu0 0.0
          %4470 = vmatpush1.msra.mxu0 0.0
          %4471 = vmatprep.subr.mxu0 0.0
          %4472 = vmatpush1.msra.mxu0 0.0
          %4473 = vmatprep.subr.mxu0 0.0
          %4474 = vmatpush1.msra.mxu0 0.0
          %4475 = vmatprep.subr.mxu0 0.0
          %4476 = vmatpush1.msra.mxu0 0.0
          %4477 = vmatprep.subr.mxu0 0.0
          %4478 = vmatpush1.msra.mxu0 0.0
          %4479 = vmatprep.subr.mxu0 0.0
          %4480 = vmatpush1.msra.mxu0 0.0
          %4481 = vmatprep.subr.mxu0 0.0
          %4482 = vmatpush1.msra.mxu0 0.0
          %4483 = vmatprep.subr.mxu0 0.0
          %4484 = vmatpush1.msra.mxu0 0.0
          %4485 = vmatprep.subr.mxu0 0.0
          %4486 = vmatpush1.msra.mxu0 0.0
          %4487 = vmatprep.subr.mxu0 0.0
          %4488 = vmatpush1.msra.mxu0 0.0
          %4489 = vmatprep.subr.mxu0 0.0
          %4490 = vmatpush1.msra.mxu0 0.0
          %4491 = vmatprep.subr.mxu0 0.0
          %4492 = vmatpush1.msra.mxu0 0.0
          %4493 = vmatprep.subr.mxu0 0.0
          %4494 = vmatpush1.msra.mxu0 0.0
          %4495 = vmatprep.subr.mxu0 0.0
          %4496 = vmatpush1.msra.mxu0 0.0
          %4497 = vmatprep.subr.mxu0 0.0
          %4498 = vmatpush1.msra.mxu0 0.0
          %4499 = vmatprep.subr.mxu0 0.0
          %4500 = vmatpush1.msra.mxu0 0.0
          %4501 = vmatprep.subr.mxu0 0.0
          %4502 = vmatpush1.msra.mxu0 0.0
          %4503 = vmatprep.subr.mxu0 0.0
          %4504 = vmatpush1.msra.mxu0 0.0
          %4505 = vmatprep.subr.mxu0 0.0
          %4506 = vmatpush1.msra.mxu0 0.0
          %4507 = vmatprep.subr.mxu0 0.0
          %4508 = vmatpush1.msra.mxu0 0.0
          %4509 = vmatprep.subr.mxu0 0.0
          %4510 = vmatpush1.msra.mxu0 0.0
          %4511 = vmatprep.subr.mxu0 0.0
          %4512 = vmatpush1.msra.mxu0 0.0
          %4513 = vmatprep.mubr.f32.mxu0 0.0
          %4514 = vmatmul.mubr.f32.gmra.mrb[0].mxu0 %v4376
          %v4515 = vpop.f32.mrb[0].mxu0
          %v4516 = vadd.f32 0.0, %v4515
          %v4517 = vpop.f32.mrb[0].mxu0
          %v4518 = vadd.f32 0.0, %v4517
          %4519 = vdwg.mxu0
          %v4520 = vadd.f32 %v4319, %v4445
          %v4521 = vadd.f32 %v4320, %v4447
          %v4522 = vadd.f32 %v4321, %v4516
          %v4523 = vadd.f32 %v4322, %v4518
          %s4524 = sadd.s32 %s3317, 6
          %s4525 = smul.u32 %s4524, 32
          %s4526 = smul.addr %s4525, 4
          %s4527 = scalar_lea.vmem %s7, %s4526
          %v4528 = vld [vmem:[%s4527] sm:$0xff]
          %v4529 = vld [vmem:[%s4527 + $0x8] sm:$0xff]
          %v4530 = vld [vmem:[%s4527 + $0x10] sm:$0xff]
          %v4531 = vld [vmem:[%s4527 + $0x18] sm:$0xff]
          %v4532 = vld [vmem:[%s4527 + $0x20] sm:$0xff]
          %v4533 = vld [vmem:[%s4527 + $0x28] sm:$0xff]
          %v4534 = vld [vmem:[%s4527 + $0x30] sm:$0xff]
          %v4535 = vld [vmem:[%s4527 + $0x38] sm:$0xff]
          %v4536 = vld [vmem:[%s4527 + $0x40] sm:$0xff]
          %v4537 = vld [vmem:[%s4527 + $0x48] sm:$0xff]
          %v4538 = vld [vmem:[%s4527 + $0x50] sm:$0xff]
          %v4539 = vld [vmem:[%s4527 + $0x58] sm:$0xff]
          %v4540 = vld [vmem:[%s4527 + $0x60] sm:$0xff]
          %v4541 = vld [vmem:[%s4527 + $0x68] sm:$0xff]
          %v4542 = vld [vmem:[%s4527 + $0x70] sm:$0xff]
          %v4543 = vld [vmem:[%s4527 + $0x78] sm:$0xff]
          %v4544 = vunpack.c.l.bf16 %v4528
          %v4545 = vunpack.c.h.bf16 %v4528
          %v4546 = vunpack.c.l.bf16 %v4529
          %v4547 = vunpack.c.h.bf16 %v4529
          %v4548 = vunpack.c.l.bf16 %v4530
          %v4549 = vunpack.c.h.bf16 %v4530
          %v4550 = vunpack.c.l.bf16 %v4531
          %v4551 = vunpack.c.h.bf16 %v4531
          %v4552 = vunpack.c.l.bf16 %v4532
          %v4553 = vunpack.c.h.bf16 %v4532
          %v4554 = vunpack.c.l.bf16 %v4533
          %v4555 = vunpack.c.h.bf16 %v4533
          %v4556 = vunpack.c.l.bf16 %v4534
          %v4557 = vunpack.c.h.bf16 %v4534
          %v4558 = vunpack.c.l.bf16 %v4535
          %v4559 = vunpack.c.h.bf16 %v4535
          %v4560 = vunpack.c.l.bf16 %v4536
          %v4561 = vunpack.c.h.bf16 %v4536
          %v4562 = vunpack.c.l.bf16 %v4537
          %v4563 = vunpack.c.h.bf16 %v4537
          %v4564 = vunpack.c.l.bf16 %v4538
          %v4565 = vunpack.c.h.bf16 %v4538
          %v4566 = vunpack.c.l.bf16 %v4539
          %v4567 = vunpack.c.h.bf16 %v4539
          %v4568 = vunpack.c.l.bf16 %v4540
          %v4569 = vunpack.c.h.bf16 %v4540
          %v4570 = vunpack.c.l.bf16 %v4541
          %v4571 = vunpack.c.h.bf16 %v4541
          %v4572 = vunpack.c.l.bf16 %v4542
          %v4573 = vunpack.c.h.bf16 %v4542
          %v4574 = vunpack.c.l.bf16 %v4543
          %v4575 = vunpack.c.h.bf16 %v4543
          %v4576 = vrot.slane %v3316, 4
          %v4577 = vsel %vm3369, %v4576, 0
          %4579 = vmatprep.subr.mxu0 %v4545
          %4580 = vmatpush1.msra.mxu0 %v4544
          %4581 = vmatprep.subr.mxu0 %v4549
          %4582 = vmatpush1.msra.mxu0 %v4548
          %4583 = vmatprep.subr.mxu0 %v4553
          %4584 = vmatpush1.msra.mxu0 %v4552
          %4585 = vmatprep.subr.mxu0 %v4557
          %4586 = vmatpush1.msra.mxu0 %v4556
          %4587 = vmatprep.subr.mxu0 %v4561
          %4588 = vmatpush1.msra.mxu0 %v4560
          %4589 = vmatprep.subr.mxu0 %v4565
          %4590 = vmatpush1.msra.mxu0 %v4564
          %4591 = vmatprep.subr.mxu0 %v4569
          %4592 = vmatpush1.msra.mxu0 %v4568
          %4593 = vmatprep.subr.mxu0 %v4573
          %4594 = vmatpush1.msra.mxu0 %v4572
          %4595 = vmatprep.subr.mxu0 0.0
          %4596 = vmatpush1.msra.mxu0 0.0
          %4597 = vmatprep.subr.mxu0 0.0
          %4598 = vmatpush1.msra.mxu0 0.0
          %4599 = vmatprep.subr.mxu0 0.0
          %4600 = vmatpush1.msra.mxu0 0.0
          %4601 = vmatprep.subr.mxu0 0.0
          %4602 = vmatpush1.msra.mxu0 0.0
          %4603 = vmatprep.subr.mxu0 0.0
          %4604 = vmatpush1.msra.mxu0 0.0
          %4605 = vmatprep.subr.mxu0 0.0
          %4606 = vmatpush1.msra.mxu0 0.0
          %4607 = vmatprep.subr.mxu0 0.0
          %4608 = vmatpush1.msra.mxu0 0.0
          %4609 = vmatprep.subr.mxu0 0.0
          %4610 = vmatpush1.msra.mxu0 0.0
          %4611 = vmatprep.subr.mxu0 0.0
          %4612 = vmatpush1.msra.mxu0 0.0
          %4613 = vmatprep.subr.mxu0 0.0
          %4614 = vmatpush1.msra.mxu0 0.0
          %4615 = vmatprep.subr.mxu0 0.0
          %4616 = vmatpush1.msra.mxu0 0.0
          %4617 = vmatprep.subr.mxu0 0.0
          %4618 = vmatpush1.msra.mxu0 0.0
          %4619 = vmatprep.subr.mxu0 0.0
          %4620 = vmatpush1.msra.mxu0 0.0
          %4621 = vmatprep.subr.mxu0 0.0
          %4622 = vmatpush1.msra.mxu0 0.0
          %4623 = vmatprep.subr.mxu0 0.0
          %4624 = vmatpush1.msra.mxu0 0.0
          %4625 = vmatprep.subr.mxu0 0.0
          %4626 = vmatpush1.msra.mxu0 0.0
          %4627 = vmatprep.subr.mxu0 0.0
          %4628 = vmatpush1.msra.mxu0 0.0
          %4629 = vmatprep.subr.mxu0 0.0
          %4630 = vmatpush1.msra.mxu0 0.0
          %4631 = vmatprep.subr.mxu0 0.0
          %4632 = vmatpush1.msra.mxu0 0.0
          %4633 = vmatprep.subr.mxu0 0.0
          %4634 = vmatpush1.msra.mxu0 0.0
          %4635 = vmatprep.subr.mxu0 0.0
          %4636 = vmatpush1.msra.mxu0 0.0
          %4637 = vmatprep.subr.mxu0 0.0
          %4638 = vmatpush1.msra.mxu0 0.0
          %4639 = vmatprep.subr.mxu0 0.0
          %4640 = vmatpush1.msra.mxu0 0.0
          %4641 = vmatprep.subr.mxu0 0.0
          %4642 = vmatpush1.msra.mxu0 0.0
          %4643 = vmatprep.mubr.f32.mxu0 0.0
          %4644 = vmatmul.mubr.f32.gmra.mrb[0].mxu0 %v4577
          %v4645 = vpop.f32.mrb[0].mxu0
          %v4646 = vadd.f32 0.0, %v4645
          %v4647 = vpop.f32.mrb[0].mxu0
          %v4648 = vadd.f32 0.0, %v4647
          %4649 = vdwg.mxu0
          %4650 = vmatprep.subr.mxu0 %v4547
          %4651 = vmatpush1.msra.mxu0 %v4546
          %4652 = vmatprep.subr.mxu0 %v4551
          %4653 = vmatpush1.msra.mxu0 %v4550
          %4654 = vmatprep.subr.mxu0 %v4555
          %4655 = vmatpush1.msra.mxu0 %v4554
          %4656 = vmatprep.subr.mxu0 %v4559
          %4657 = vmatpush1.msra.mxu0 %v4558
          %4658 = vmatprep.subr.mxu0 %v4563
          %4659 = vmatpush1.msra.mxu0 %v4562
          %4660 = vmatprep.subr.mxu0 %v4567
          %4661 = vmatpush1.msra.mxu0 %v4566
          %4662 = vmatprep.subr.mxu0 %v4571
          %4663 = vmatpush1.msra.mxu0 %v4570
          %4664 = vmatprep.subr.mxu0 %v4575
          %4665 = vmatpush1.msra.mxu0 %v4574
          %4666 = vmatprep.subr.mxu0 0.0
          %4667 = vmatpush1.msra.mxu0 0.0
          %4668 = vmatprep.subr.mxu0 0.0
          %4669 = vmatpush1.msra.mxu0 0.0
          %4670 = vmatprep.subr.mxu0 0.0
          %4671 = vmatpush1.msra.mxu0 0.0
          %4672 = vmatprep.subr.mxu0 0.0
          %4673 = vmatpush1.msra.mxu0 0.0
          %4674 = vmatprep.subr.mxu0 0.0
          %4675 = vmatpush1.msra.mxu0 0.0
          %4676 = vmatprep.subr.mxu0 0.0
          %4677 = vmatpush1.msra.mxu0 0.0
          %4678 = vmatprep.subr.mxu0 0.0
          %4679 = vmatpush1.msra.mxu0 0.0
          %4680 = vmatprep.subr.mxu0 0.0
          %4681 = vmatpush1.msra.mxu0 0.0
          %4682 = vmatprep.subr.mxu0 0.0
          %4683 = vmatpush1.msra.mxu0 0.0
          %4684 = vmatprep.subr.mxu0 0.0
          %4685 = vmatpush1.msra.mxu0 0.0
          %4686 = vmatprep.subr.mxu0 0.0
          %4687 = vmatpush1.msra.mxu0 0.0
          %4688 = vmatprep.subr.mxu0 0.0
          %4689 = vmatpush1.msra.mxu0 0.0
          %4690 = vmatprep.subr.mxu0 0.0
          %4691 = vmatpush1.msra.mxu0 0.0
          %4692 = vmatprep.subr.mxu0 0.0
          %4693 = vmatpush1.msra.mxu0 0.0
          %4694 = vmatprep.subr.mxu0 0.0
          %4695 = vmatpush1.msra.mxu0 0.0
          %4696 = vmatprep.subr.mxu0 0.0
          %4697 = vmatpush1.msra.mxu0 0.0
          %4698 = vmatprep.subr.mxu0 0.0
          %4699 = vmatpush1.msra.mxu0 0.0
          %4700 = vmatprep.subr.mxu0 0.0
          %4701 = vmatpush1.msra.mxu0 0.0
          %4702 = vmatprep.subr.mxu0 0.0
          %4703 = vmatpush1.msra.mxu0 0.0
          %4704 = vmatprep.subr.mxu0 0.0
          %4705 = vmatpush1.msra.mxu0 0.0
          %4706 = vmatprep.subr.mxu0 0.0
          %4707 = vmatpush1.msra.mxu0 0.0
          %4708 = vmatprep.subr.mxu0 0.0
          %4709 = vmatpush1.msra.mxu0 0.0
          %4710 = vmatprep.subr.mxu0 0.0
          %4711 = vmatpush1.msra.mxu0 0.0
          %4712 = vmatprep.subr.mxu0 0.0
          %4713 = vmatpush1.msra.mxu0 0.0
          %4714 = vmatprep.mubr.f32.mxu0 0.0
          %4715 = vmatmul.mubr.f32.gmra.mrb[0].mxu0 %v4577
          %v4716 = vpop.f32.mrb[0].mxu0
          %v4717 = vadd.f32 0.0, %v4716
          %v4718 = vpop.f32.mrb[0].mxu0
          %v4719 = vadd.f32 0.0, %v4718
          %4720 = vdwg.mxu0
          %v4721 = vadd.f32 %v4520, %v4646
          %v4722 = vadd.f32 %v4521, %v4648
          %v4723 = vadd.f32 %v4522, %v4717
          %v4724 = vadd.f32 %v4523, %v4719
        $region90: #{dqn_forward.1} parent=63 // loop_footer
          %s3307 = sadd.s32 1, %s3303
        $region91: #{dqn_forward.1} parent=63 // loop_footer_branch
          %3302 = sbr.rel target = $region87
        $region92: #{dqn_forward.1} parent=63 // loop_exit
          _
        %v4725 = vld [vmem:[%s8] sm:$0xf]
        %v4727 = vlaneseq
        %v4728 = vshrl.u32 %v4727, 7
        %v4729 = vsub.s32 0, %v4728
        %v4730 = vrot.slane %v4725, %v4729
        %v4731 = vlaneseq
        %v4732 = vshrl.u32 %v4731, 7
        %v4733 = vsub.s32 1, %v4732
        %v4734 = vrot.slane %v4725, %v4733
        %v4735 = vlaneseq
        %v4736 = vshrl.u32 %v4735, 7
        %v4737 = vsub.s32 2, %v4736
        %v4738 = vrot.slane %v4725, %v4737
        %v4739 = vlaneseq
        %v4740 = vshrl.u32 %v4739, 7
        %v4741 = vsub.s32 3, %v4740
        %v4742 = vrot.slane %v4725, %v4741
        %v4747 = vadd.f32 %v3308, %v4730
        %v4748 = vadd.f32 %v3309, %v4734
        %v4749 = vadd.f32 %v3310, %v4738
        %v4750 = vadd.f32 %v3311, %v4742
        %v4751 = vmax.f32 %v4747, 0.0
        %v4752 = vmax.f32 %v4748, 0.0
        %v4753 = vmax.f32 %v4749, 0.0
        %v4754 = vmax.f32 %v4750, 0.0
        %v4755 = vld [vmem:[%s9] sm:$0xff]
        %v4756 = vld [vmem:[%s9 + $0x8] sm:$0xff]
        %v4757 = vld [vmem:[%s9 + $0x10] sm:$0xff]
        %v4758 = vld [vmem:[%s9 + $0x18] sm:$0xff]
        %v4759 = vld [vmem:[%s9 + $0x20] sm:$0xff]
        %v4760 = vld [vmem:[%s9 + $0x28] sm:$0xff]
        %v4761 = vld [vmem:[%s9 + $0x30] sm:$0xff]
        %v4762 = vld [vmem:[%s9 + $0x38] sm:$0xff]
        %v4763 = vld [vmem:[%s9 + $0x40] sm:$0xff]
        %v4764 = vld [vmem:[%s9 + $0x48] sm:$0xff]
        %v4765 = vld [vmem:[%s9 + $0x50] sm:$0xff]
        %v4766 = vld [vmem:[%s9 + $0x58] sm:$0xff]
        %v4767 = vld [vmem:[%s9 + $0x60] sm:$0xff]
        %v4768 = vld [vmem:[%s9 + $0x68] sm:$0xff]
        %v4769 = vld [vmem:[%s9 + $0x70] sm:$0xff]
        %v4770 = vld [vmem:[%s9 + $0x78] sm:$0xff]
        %v4771 = vld [vmem:[%s9 + $0x80] sm:$0xff]
        %v4772 = vld [vmem:[%s9 + $0x88] sm:$0xff]
        %v4773 = vld [vmem:[%s9 + $0x90] sm:$0xff]
        %v4774 = vld [vmem:[%s9 + $0x98] sm:$0xff]
        %v4775 = vld [vmem:[%s9 + $0xa0] sm:$0xff]
        %v4776 = vld [vmem:[%s9 + $0xa8] sm:$0xff]
        %v4777 = vld [vmem:[%s9 + $0xb0] sm:$0xff]
        %v4778 = vld [vmem:[%s9 + $0xb8] sm:$0xff]
        %v4779 = vld [vmem:[%s9 + $0xc0] sm:$0xff]
        %v4780 = vld [vmem:[%s9 + $0xc8] sm:$0xff]
        %v4781 = vld [vmem:[%s9 + $0xd0] sm:$0xff]
        %v4782 = vld [vmem:[%s9 + $0xd8] sm:$0xff]
        %v4783 = vld [vmem:[%s9 + $0xe0] sm:$0xff]
        %v4784 = vld [vmem:[%s9 + $0xe8] sm:$0xff]
        %v4785 = vld [vmem:[%s9 + $0xf0] sm:$0xff]
        %v4786 = vld [vmem:[%s9 + $0xf8] sm:$0xff]
        %v4787 = vld [vmem:[%s9 + $0x100] sm:$0xff]
        %v4788 = vld [vmem:[%s9 + $0x108] sm:$0xff]
        %v4789 = vld [vmem:[%s9 + $0x110] sm:$0xff]
        %v4790 = vld [vmem:[%s9 + $0x118] sm:$0xff]
        %v4791 = vld [vmem:[%s9 + $0x120] sm:$0xff]
        %v4792 = vld [vmem:[%s9 + $0x128] sm:$0xff]
        %v4793 = vld [vmem:[%s9 + $0x130] sm:$0xff]
        %v4794 = vld [vmem:[%s9 + $0x138] sm:$0xff]
        %v4795 = vld [vmem:[%s9 + $0x140] sm:$0xff]
        %v4796 = vld [vmem:[%s9 + $0x148] sm:$0xff]
        %v4797 = vld [vmem:[%s9 + $0x150] sm:$0xff]
        %v4798 = vld [vmem:[%s9 + $0x158] sm:$0xff]
        %v4799 = vld [vmem:[%s9 + $0x160] sm:$0xff]
        %v4800 = vld [vmem:[%s9 + $0x168] sm:$0xff]
        %v4801 = vld [vmem:[%s9 + $0x170] sm:$0xff]
        %v4802 = vld [vmem:[%s9 + $0x178] sm:$0xff]
        %v4803 = vld [vmem:[%s9 + $0x180] sm:$0xff]
        %v4804 = vld [vmem:[%s9 + $0x188] sm:$0xff]
        %v4805 = vld [vmem:[%s9 + $0x190] sm:$0xff]
        %v4806 = vld [vmem:[%s9 + $0x198] sm:$0xff]
        %v4807 = vld [vmem:[%s9 + $0x1a0] sm:$0xff]
        %v4808 = vld [vmem:[%s9 + $0x1a8] sm:$0xff]
        %v4809 = vld [vmem:[%s9 + $0x1b0] sm:$0xff]
        %v4810 = vld [vmem:[%s9 + $0x1b8] sm:$0xff]
        %v4811 = vld [vmem:[%s9 + $0x1c0] sm:$0xff]
        %v4812 = vld [vmem:[%s9 + $0x1c8] sm:$0xff]
        %v4813 = vld [vmem:[%s9 + $0x1d0] sm:$0xff]
        %v4814 = vld [vmem:[%s9 + $0x1d8] sm:$0xff]
        %v4815 = vld [vmem:[%s9 + $0x1e0] sm:$0xff]
        %v4816 = vld [vmem:[%s9 + $0x1e8] sm:$0xff]
        %v4817 = vld [vmem:[%s9 + $0x1f0] sm:$0xff]
        %v4818 = vld [vmem:[%s9 + $0x1f8] sm:$0xff]
        %v4819 = vld [vmem:[%s10] sm:$0x1]
        %4820 = vmatprep.subr.mxu0 0.0
        %4821 = vmatpush1.msra.mxu0 %v4755
        %4822 = vmatprep.subr.mxu0 0.0
        %4823 = vmatpush1.msra.mxu0 %v4756
        %4824 = vmatprep.subr.mxu0 0.0
        %4825 = vmatpush1.msra.mxu0 %v4757
        %4826 = vmatprep.subr.mxu0 0.0
        %4827 = vmatpush1.msra.mxu0 %v4758
        %4828 = vmatprep.subr.mxu0 0.0
        %4829 = vmatpush1.msra.mxu0 %v4759
        %4830 = vmatprep.subr.mxu0 0.0
        %4831 = vmatpush1.msra.mxu0 %v4760
        %4832 = vmatprep.subr.mxu0 0.0
        %4833 = vmatpush1.msra.mxu0 %v4761
        %4834 = vmatprep.subr.mxu0 0.0
        %4835 = vmatpush1.msra.mxu0 %v4762
        %4836 = vmatprep.subr.mxu0 0.0
        %4837 = vmatpush1.msra.mxu0 %v4763
        %4838 = vmatprep.subr.mxu0 0.0
        %4839 = vmatpush1.msra.mxu0 %v4764
        %4840 = vmatprep.subr.mxu0 0.0
        %4841 = vmatpush1.msra.mxu0 %v4765
        %4842 = vmatprep.subr.mxu0 0.0
        %4843 = vmatpush1.msra.mxu0 %v4766
        %4844 = vmatprep.subr.mxu0 0.0
        %4845 = vmatpush1.msra.mxu0 %v4767
        %4846 = vmatprep.subr.mxu0 0.0
        %4847 = vmatpush1.msra.mxu0 %v4768
        %4848 = vmatprep.subr.mxu0 0.0
        %4849 = vmatpush1.msra.mxu0 %v4769
        %4850 = vmatprep.subr.mxu0 0.0
        %4851 = vmatpush1.msra.mxu0 %v4770
        %4852 = vmatprep.subr.mxu0 0.0
        %4853 = vmatpush1.msra.mxu0 %v4771
        %4854 = vmatprep.subr.mxu0 0.0
        %4855 = vmatpush1.msra.mxu0 %v4772
        %4856 = vmatprep.subr.mxu0 0.0
        %4857 = vmatpush1.msra.mxu0 %v4773
        %4858 = vmatprep.subr.mxu0 0.0
        %4859 = vmatpush1.msra.mxu0 %v4774
        %4860 = vmatprep.subr.mxu0 0.0
        %4861 = vmatpush1.msra.mxu0 %v4775
        %4862 = vmatprep.subr.mxu0 0.0
        %4863 = vmatpush1.msra.mxu0 %v4776
        %4864 = vmatprep.subr.mxu0 0.0
        %4865 = vmatpush1.msra.mxu0 %v4777
        %4866 = vmatprep.subr.mxu0 0.0
        %4867 = vmatpush1.msra.mxu0 %v4778
        %4868 = vmatprep.subr.mxu0 0.0
        %4869 = vmatpush1.msra.mxu0 %v4779
        %4870 = vmatprep.subr.mxu0 0.0
        %4871 = vmatpush1.msra.mxu0 %v4780
        %4872 = vmatprep.subr.mxu0 0.0
        %4873 = vmatpush1.msra.mxu0 %v4781
        %4874 = vmatprep.subr.mxu0 0.0
        %4875 = vmatpush1.msra.mxu0 %v4782
        %4876 = vmatprep.subr.mxu0 0.0
        %4877 = vmatpush1.msra.mxu0 %v4783
        %4878 = vmatprep.subr.mxu0 0.0
        %4879 = vmatpush1.msra.mxu0 %v4784
        %4880 = vmatprep.subr.mxu0 0.0
        %4881 = vmatpush1.msra.mxu0 %v4785
        %4882 = vmatprep.subr.mxu0 0.0
        %4883 = vmatpush1.msra.mxu0 %v4786
        %4884 = vmatprep.mubr.f32.mxu0 %v4752
        %4885 = vmatmul.mubr.f32.gmra.mrb[0].mxu0 %v4751
        %v4886 = vpop.f32.mrb[0].mxu0
        %v4887 = vadd.f32 %v4819, %v4886
        %v4888 = vpop.f32.mrb[0].mxu0
        %4889 = vdwg.mxu0
        %4890 = vmatprep.subr.mxu0 0.0
        %4891 = vmatpush1.msra.mxu0 %v4787
        %4892 = vmatprep.subr.mxu0 0.0
        %4893 = vmatpush1.msra.mxu0 %v4788
        %4894 = vmatprep.subr.mxu0 0.0
        %4895 = vmatpush1.msra.mxu0 %v4789
        %4896 = vmatprep.subr.mxu0 0.0
        %4897 = vmatpush1.msra.mxu0 %v4790
        %4898 = vmatprep.subr.mxu0 0.0
        %4899 = vmatpush1.msra.mxu0 %v4791
        %4900 = vmatprep.subr.mxu0 0.0
        %4901 = vmatpush1.msra.mxu0 %v4792
        %4902 = vmatprep.subr.mxu0 0.0
        %4903 = vmatpush1.msra.mxu0 %v4793
        %4904 = vmatprep.subr.mxu0 0.0
        %4905 = vmatpush1.msra.mxu0 %v4794
        %4906 = vmatprep.subr.mxu0 0.0
        %4907 = vmatpush1.msra.mxu0 %v4795
        %4908 = vmatprep.subr.mxu0 0.0
        %4909 = vmatpush1.msra.mxu0 %v4796
        %4910 = vmatprep.subr.mxu0 0.0
        %4911 = vmatpush1.msra.mxu0 %v4797
        %4912 = vmatprep.subr.mxu0 0.0
        %4913 = vmatpush1.msra.mxu0 %v4798
        %4914 = vmatprep.subr.mxu0 0.0
        %4915 = vmatpush1.msra.mxu0 %v4799
        %4916 = vmatprep.subr.mxu0 0.0
        %4917 = vmatpush1.msra.mxu0 %v4800
        %4918 = vmatprep.subr.mxu0 0.0
        %4919 = vmatpush1.msra.mxu0 %v4801
        %4920 = vmatprep.subr.mxu0 0.0
        %4921 = vmatpush1.msra.mxu0 %v4802
        %4922 = vmatprep.subr.mxu0 0.0
        %4923 = vmatpush1.msra.mxu0 %v4803
        %4924 = vmatprep.subr.mxu0 0.0
        %4925 = vmatpush1.msra.mxu0 %v4804
        %4926 = vmatprep.subr.mxu0 0.0
        %4927 = vmatpush1.msra.mxu0 %v4805
        %4928 = vmatprep.subr.mxu0 0.0
        %4929 = vmatpush1.msra.mxu0 %v4806
        %4930 = vmatprep.subr.mxu0 0.0
        %4931 = vmatpush1.msra.mxu0 %v4807
        %4932 = vmatprep.subr.mxu0 0.0
        %4933 = vmatpush1.msra.mxu0 %v4808
        %4934 = vmatprep.subr.mxu0 0.0
        %4935 = vmatpush1.msra.mxu0 %v4809
        %4936 = vmatprep.subr.mxu0 0.0
        %4937 = vmatpush1.msra.mxu0 %v4810
        %4938 = vmatprep.subr.mxu0 0.0
        %4939 = vmatpush1.msra.mxu0 %v4811
        %4940 = vmatprep.subr.mxu0 0.0
        %4941 = vmatpush1.msra.mxu0 %v4812
        %4942 = vmatprep.subr.mxu0 0.0
        %4943 = vmatpush1.msra.mxu0 %v4813
        %4944 = vmatprep.subr.mxu0 0.0
        %4945 = vmatpush1.msra.mxu0 %v4814
        %4946 = vmatprep.subr.mxu0 0.0
        %4947 = vmatpush1.msra.mxu0 %v4815
        %4948 = vmatprep.subr.mxu0 0.0
        %4949 = vmatpush1.msra.mxu0 %v4816
        %4950 = vmatprep.subr.mxu0 0.0
        %4951 = vmatpush1.msra.mxu0 %v4817
        %4952 = vmatprep.subr.mxu0 0.0
        %4953 = vmatpush1.msra.mxu0 %v4818
        %4954 = vmatprep.mubr.f32.mxu0 %v4754
        %4955 = vmatmul.mubr.f32.gmra.mrb[0].mxu0 %v4753
        %v4956 = vpop.f32.mrb[0].mxu0
        %v4957 = vadd.f32 %v4887, %v4956
        %v4958 = vpop.f32.mrb[0].mxu0
        %4959 = vdwg.mxu0
        %vm4960 = vcmask 49152
        %4961 = vst.msk [vmem:[%s378] sm:$0x1] %vm4960, %v4957
        %s4962 = sand.u32 %s269, 1
        %s4963 = scalar_lea.sflag [#allocation6], %s4962
        %s4964 = sand.u32 %s269, 1
        %s4965 = scalar_lea.vmem [#allocation5], %s4964
        // Predicated region
        $region93: #{dqn_forward.1} parent=63 // pred_check
          %p4966 = pneg %p279
        $region94: #{dqn_forward.1} parent=63 // pred_check_branch
          %4968 = sbr.rel (%p4966) target = $region96
        $region95: #{dqn_forward.1} parent=63 // pred_region
          %s4970 = ssub.s32 16, 16
          %4971 = vsyncadd %s4963, %s4970
          %s4972 = smul.addr %s25, 16
          %s4973 = scalar_lea.hbm %s11, %s4972
          %s4975 = sshll.u32 %s4965, 4
          %s4976 = int_to_ptr.vmem [resolvable:$true] %s4975
          %4978 = dma.vmem_to_hbm [thread:$0]  %s4976, 16, %s4973, %s4963
        $region96: #{dqn_forward.1} parent=63 // pred_fallthru
          _
      $region64: #{dqn_forward.1} parent=5 // pred_fallthru
        _
      %p4979 = scmp.le.s32.totalorder 2, %s20
      // Predicated region
      $region97: #{dqn_forward.1} parent=5 // pred_check
        %p4980 = pneg %p4979
      $region98: #{dqn_forward.1} parent=5 // pred_check_branch
        %4982 = sbr.rel (%p4980) target = $region100
      $region99: #{dqn_forward.1} parent=5 // pred_region
        %s4983 = ssub.s32 %s20, 2
        // Predicated region
        $region101: #{dqn_forward.1} parent=99 // pred_check
          %p4984 = pneg %p285
        $region102: #{dqn_forward.1} parent=99 // pred_check_branch
          %4986 = sbr.rel (%p4984) target = $region104
        $region103: #{dqn_forward.1} parent=99 // pred_region
          %s4987 = sand.u32 %s270, 1
          %s4988 = scalar_lea.sflag [#allocation6], %s4987
          %s4989 = sand.u32 %s270, 1
          %s4990 = scalar_lea.vmem [#allocation5], %s4989
          %4991 = dma.done %s4988, 16
        $region104: #{dqn_forward.1} parent=99 // pred_fallthru
          _
      $region100: #{dqn_forward.1} parent=5 // pred_fallthru
        _
    $region6: #{dqn_forward.1} parent=1 // loop_footer
      %s24 = sadd.s32 1, %s20
    $region7: #{dqn_forward.1} parent=1 // loop_footer_branch
      %19 = sbr.rel target = $region3
    $region8: #{dqn_forward.1} parent=1 // loop_exit
      _
    %4992 = vsyncpa [#allocation6], 1
    %s4993 = scalar_lea.sflag [#allocation6], 1
    %4994 = vsyncpa %s4993, 1

</llo_original>
